<compile_context>
chip_gen: v7x
topology: tpu7x:2x2x1
jax: 0.10.0
libtpu: 0.0.40
codegen_flags: <defaults>
</compile_context>

<pallas_src>
import functools

import jax
import jax.numpy as jnp
from jax import lax
from jax.experimental import pallas as pl
from jax.experimental.pallas import tpu as pltpu

LN_EPS = 1e-5
# Lane alignment for padded feature dims.  128 matches v5e's 128x128 MXU and is
# the universal safe choice; on v6e/v7x pass lane=256 to prepare_params() when
# the real hidden/out dims exceed 128 so each MXU pass fills the 256-wide array.
LANE = 128


def _round_up(n, m):
    return (n + m - 1) // m * m


def _ln_zero_padded(x, gamma, beta, d_real):
    """LayerNorm over the last axis when only the first `d_real` lanes are real.

    Assumes any padded lanes of `x` are exactly zero and gamma/beta are
    zero-padded, so var = E[x^2] - mu^2 is exact (no mask needed) and the
    padded output lanes stay zero.
    """
    inv_d = 1.0 / float(d_real)
    mu = jnp.sum(x, axis=-1, keepdims=True) * inv_d
    ex2 = jnp.sum(x * x, axis=-1, keepdims=True) * inv_d
    var = jnp.maximum(ex2 - mu * mu, 0.0)   # guard tiny cancellation
    return (x - mu) * lax.rsqrt(var + LN_EPS) * gamma + beta


# ------------------------------- fused kernel --------------------------------

def rnn_base_kernel(x_ref, h0_ref,
                    ng_ref, nb_ref,
                    w1_ref, b1_ref, g1_ref, be1_ref,
                    w2_ref, b2_ref, g2_ref, be2_ref,
                    wih_ref, bih_ref, whh_ref, bhh_ref,
                    gy_ref, by_ref,
                    y_ref, hN_ref,
                    h_sc, gi_sc, hstage_sc,
                    *, d_in, d_hid, d_out, t_real, has_tail,
                    use_relu, use_feature_norm):
    tc = pl.program_id(1)                      # T-chunk index (serial axis)
    Tc, Bb, Din = x_ref.shape
    Op = h0_ref.shape[-1]

    @pl.when(tc == 0)
    def _init_hidden():
        h_sc[...] = h0_ref[...].astype(jnp.float32)

    act = (lambda v: jnp.maximum(v, 0.0)) if use_relu else jnp.tanh

    # ---- MLP (feature-LN -> fc1 -> fc2) over all Tc*Bb rows of this chunk ---
    x = x_ref[...].astype(jnp.float32).reshape(Tc * Bb, Din)
    if use_feature_norm:
        x = _ln_zero_padded(x, ng_ref[...], nb_ref[...], d_in)

    a = jnp.dot(x.astype(jnp.bfloat16), w1_ref[...],
                preferred_element_type=jnp.float32) + b1_ref[...]
    a = _ln_zero_padded(act(a), g1_ref[...], be1_ref[...], d_hid)
    a = jnp.dot(a.astype(jnp.bfloat16), w2_ref[...],
                preferred_element_type=jnp.float32) + b2_ref[...]
    a = _ln_zero_padded(act(a), g2_ref[...], be2_ref[...], d_hid)

    # ---- GRU input projection hoisted out of the recurrence (one big matmul),
    #      cached in bf16 to halve the largest scratch.
    gi_sc[...] = (jnp.dot(a.astype(jnp.bfloat16), wih_ref[...],
                          preferred_element_type=jnp.float32)
                  + bih_ref[...]).astype(jnp.bfloat16).reshape(Tc, Bb, 3 * Op)

    whh = whh_ref[...]
    bhh = bhh_ref[...]

    # TODO(synk): keep W_hh resident in MXU weight registers across the time
    # loop via pltpu.matmul_push_rhs / matmul_acc_lhs / matmul_pop to remove
    # the per-step weight reload from the recurrence's critical path.
    def step(t, h):
        gh = jnp.dot(h.astype(jnp.bfloat16), whh,
                     preferred_element_type=jnp.float32) + bhh
        gi = gi_sc[t].astype(jnp.float32)
        rz = jax.nn.sigmoid(gi[:, :2 * Op] + gh[:, :2 * Op])   # fused r|z
        r = rz[:, :Op]
        z = rz[:, Op:]
        n = jnp.tanh(gi[:, 2 * Op:] + r * gh[:, 2 * Op:])
        h_new = (1.0 - z) * n + z * h
        if has_tail:   # freeze h on padded tail timesteps (t_global >= t_real)
            valid = (tc * Tc + t) < t_real
            h_new = jnp.where(valid, h_new, h)
        hstage_sc[t] = h_new                  # raw f32 h_t (LN applied below)
        return h_new

    h = h_sc[...]
    if Tc <= 16:
        # Fully unrolled short recurrence: lets the scheduler overlap the small
        # h@Whh MXU pushes and EUP sigmoid/tanh of adjacent steps.
        for t in range(Tc):
            h = step(t, h)
    else:
        h = lax.fori_loop(0, Tc, step, h, unroll=4)
    h_sc[...] = h

    # ---- output LayerNorm hoisted out of the time loop; y written exactly once
    y_ref[...] = _ln_zero_padded(hstage_sc[...], gy_ref[...], by_ref[...],
                                 d_out).astype(y_ref.dtype)

    @pl.when(tc == pl.num_programs(1) - 1)
    def _write_final_hidden():
        hN_ref[...] = h.astype(hN_ref.dtype)


# ------------------------------- padding helpers ------------------------------

def _pad_last(a, new_last):
    if a.shape[-1] == new_last:
        return a
    pad = [(0, 0)] * (a.ndim - 1) + [(0, new_last - a.shape[-1])]
    return jnp.pad(a, pad)


def _pad_rows(a, new_rows):
    if a.shape[0] == new_rows:
        return a
    pad = [(0, new_rows - a.shape[0])] + [(0, 0)] * (a.ndim - 1)
    return jnp.pad(a, pad)


def _pad_gates(a, o, o_p):
    """Pad the last axis (3*o, PyTorch gate order [r|z|n]) gate-wise to 3*o_p."""
    if o == o_p:
        return a
    lead = a.shape[:-1]
    a = a.reshape(lead + (3, o))
    a = jnp.pad(a, [(0, 0)] * len(lead) + [(0, 0), (0, o_p - o)])
    return a.reshape(lead + (3 * o_p,))


def _derive_t_chunk(T, Bb, Din, Hp, Op, x_isz, out_isz, budget_bytes):
    """Largest T-chunk whose pipelined blocks + scratches fit the VMEM budget."""
    fixed = (2 * 2 * (Din * Hp + Hp * Hp + Hp * 3 * Op + Op * 3 * Op)  # bf16 W, dbl-buf
             + 2 * Bb * Op * 4                 # h0 block (dbl-buffered)
             + 2 * Bb * Op * out_isz           # final-hidden block
             + Bb * Op * 4                     # carried hidden scratch
             + 256 * 1024)                     # biases / LN params slack
    per_t = (2 * Bb * Din * x_isz              # x block (dbl-buffered)
             + 2 * Bb * Op * out_isz           # y block (dbl-buffered)
             + Bb * 3 * Op * 2                 # gi scratch (bf16)
             + Bb * Op * 4)                    # staged h_t (f32)
    avail = max(budget_bytes - fixed, per_t)
    return max(1, min(int(avail // per_t), T, 256))


# -------------------------------- parameters ---------------------------------

def init_params(key, d_in, hidden, out, dtype=jnp.float32):
    """Deterministic synthetic parameters (shapes mirror RNNBase.__init__)."""
    k1, k2, k3, k4 = jax.random.split(key, 4)
    rnd = lambda k, shape, fan_in: (jax.random.normal(k, shape, dtype)
                                    / jnp.sqrt(jnp.asarray(fan_in, dtype)))
    return dict(
        norm_g=jnp.ones((1, d_in), dtype), norm_b=jnp.zeros((1, d_in), dtype),
        fc1_w=rnd(k1, (d_in, hidden), d_in), fc1_b=jnp.zeros((1, hidden), dtype),
        fc1_g=jnp.ones((1, hidden), dtype), fc1_beta=jnp.zeros((1, hidden), dtype),
        fc2_w=rnd(k2, (hidden, hidden), hidden), fc2_b=jnp.zeros((1, hidden), dtype),
        fc2_g=jnp.ones((1, hidden), dtype), fc2_beta=jnp.zeros((1, hidden), dtype),
        gru_wih=rnd(k3, (hidden, 3 * out), hidden),
        gru_whh=rnd(k4, (out, 3 * out), out),
        gru_bih=jnp.zeros((1, 3 * out), dtype),
        gru_bhh=jnp.zeros((1, 3 * out), dtype),
        rnn_g=jnp.ones((1, out), dtype), rnn_beta=jnp.zeros((1, out), dtype),
    )


def prepare_params(params, *, lane=LANE):
    """Pad / cast the weights ONCE (hoisted out of the per-call forward path).

    Padded lanes are exactly zero so they never perturb matmuls, gates or the
    LayerNorm statistics.  fc/GRU weights are pre-cast to bf16 (MXU operands).
    """
    f32, bf16 = jnp.float32, jnp.bfloat16
    d_in = params["fc1_w"].shape[0]
    hid = params["fc1_w"].shape[1]
    out = params["gru_whh"].shape[0]
    Hp = _round_up(hid, lane)
    Op = _round_up(out, lane)
    return dict(
        d_in=d_in, d_hid=hid, d_out=out, lane=lane,
        ng=params["norm_g"].astype(f32), nb=params["norm_b"].astype(f32),
        w1=_pad_last(params["fc1_w"].astype(f32), Hp).astype(bf16),
        b1=_pad_last(params["fc1_b"].astype(f32), Hp),
        g1=_pad_last(params["fc1_g"].astype(f32), Hp),
        be1=_pad_last(params["fc1_beta"].astype(f32), Hp),
        w2=_pad_last(_pad_rows(params["fc2_w"].astype(f32), Hp), Hp).astype(bf16),
        b2=_pad_last(params["fc2_b"].astype(f32), Hp),
        g2=_pad_last(params["fc2_g"].astype(f32), Hp),
        be2=_pad_last(params["fc2_beta"].astype(f32), Hp),
        wih=_pad_gates(_pad_rows(params["gru_wih"].astype(f32), Hp), out, Op).astype(bf16),
        bih=_pad_gates(params["gru_bih"].astype(f32), out, Op),
        whh=_pad_gates(_pad_rows(params["gru_whh"].astype(f32), Op), out, Op).astype(bf16),
        bhh=_pad_gates(params["gru_bhh"].astype(f32), out, Op),
        gy=_pad_last(params["rnn_g"].astype(f32), Op),
        by=_pad_last(params["rnn_beta"].astype(f32), Op),
    )


# --------------------------------- wrapper ------------------------------------

def rnn_base_forward(prep, inputs, rnn_states, *, use_relu=True,
                     use_feature_normalization=True, t_chunk=None,
                     num_batch_blocks=None,
                     vmem_budget_bytes=34 * (1 << 20),
                     vmem_limit_bytes=48 * (1 << 20)):
    """Pallas TPU implementation of RNNBase.forward -> (x, hid[0], no_sequence)."""
    no_sequence = False  # the reference module never flips this
    if inputs.ndim == 2:
        inputs = inputs[None]
    if rnn_states.ndim == 2:
        rnn_states = rnn_states[None]

    T, B, Din = inputs.shape
    assert Din == prep["d_in"]
    H, O, lane = prep["d_hid"], prep["d_out"], prep["lane"]
    Hp = _round_up(H, lane)
    Op = _round_up(O, lane)
    dtype = inputs.dtype
    x_isz = jnp.dtype(dtype).itemsize
    out_isz = jnp.dtype(dtype).itemsize

    # Megacore (v7x): shard the batch across TensorCores when each block keeps
    # a full sublane group.  Harmless (size-1 axis) on single-TC chips.
    if num_batch_blocks is None:
        num_batch_blocks = 2 if (B >= 16 and B % 2 == 0) else 1
    assert B % num_batch_blocks == 0
    Bb = B // num_batch_blocks

    # T-chunk derived from the VMEM budget (conservative for v7x's 64 MiB VMEM).
    if t_chunk is None:
        t_chunk = _derive_t_chunk(T, Bb, Din, Hp, Op, x_isz, out_isz,
                                  vmem_budget_bytes)
    t_chunk = max(1, min(int(t_chunk), T))
    n_chunks = -(-T // t_chunk)
    Tp = n_chunks * t_chunk
    has_tail = Tp != T

    # x is passed UNPADDED on the lane axis (block last dim == full array dim);
    # only the T axis is zero-padded when T % t_chunk != 0 (masked in-kernel).
    x = inputs
    if has_tail:
        x = jnp.pad(x, ((0, Tp - T), (0, 0), (0, 0)))
    h0_p = _pad_last(rnn_states[0].astype(jnp.float32), Op)

    kernel = functools.partial(
        rnn_base_kernel, d_in=Din, d_hid=H, d_out=O, t_real=T,
        has_tail=has_tail, use_relu=use_relu,
        use_feature_norm=use_feature_normalization)

    xmap = lambda bi, ci: (ci, bi, 0)     # per-(batch-block, T-chunk)
    bmap = lambda bi, ci: (bi, 0)         # per batch-block
    wmap = lambda bi, ci: (0, 0)          # grid-invariant weights
    # TODO(synk): mark the grid-invariant weight specs pipeline_mode=pl.Buffered(1)
    # (single buffer) to reclaim the double-buffer VMEM for a larger t_chunk.

    y_p, hN_p = pl.pallas_call(
        kernel,
        out_shape=(jax.ShapeDtypeStruct((Tp, B, Op), dtype),
                   jax.ShapeDtypeStruct((B, Op), dtype)),
        grid_spec=pltpu.PrefetchScalarGridSpec(
            num_scalar_prefetch=0,
            grid=(num_batch_blocks, n_chunks),
            in_specs=[
                pl.BlockSpec((t_chunk, Bb, Din), xmap),   # x (streamed per chunk)
                pl.BlockSpec((Bb, Op), bmap),             # h0
                pl.BlockSpec((1, Din), wmap),             # feature-norm gamma
                pl.BlockSpec((1, Din), wmap),             # feature-norm beta
                pl.BlockSpec((Din, Hp), wmap),            # fc1 W  (bf16)
                pl.BlockSpec((1, Hp), wmap),              # fc1 b
                pl.BlockSpec((1, Hp), wmap),              # fc1 LN gamma
                pl.BlockSpec((1, Hp), wmap),              # fc1 LN beta
                pl.BlockSpec((Hp, Hp), wmap),             # fc2 W  (bf16)
                pl.BlockSpec((1, Hp), wmap),              # fc2 b
                pl.BlockSpec((1, Hp), wmap),              # fc2 LN gamma
                pl.BlockSpec((1, Hp), wmap),              # fc2 LN beta
                pl.BlockSpec((Hp, 3 * Op), wmap),         # GRU W_ih (bf16)
                pl.BlockSpec((1, 3 * Op), wmap),          # GRU b_ih
                pl.BlockSpec((Op, 3 * Op), wmap),         # GRU W_hh (bf16)
                pl.BlockSpec((1, 3 * Op), wmap),          # GRU b_hh
                pl.BlockSpec((1, Op), wmap),              # rnn_norm gamma
                pl.BlockSpec((1, Op), wmap),              # rnn_norm beta
            ],
            out_specs=(pl.BlockSpec((t_chunk, Bb, Op), xmap),   # y (per chunk)
                       pl.BlockSpec((Bb, Op), bmap)),           # final hidden
            scratch_shapes=[
                pltpu.VMEM((Bb, Op), jnp.float32),               # carried h
                pltpu.VMEM((t_chunk, Bb, 3 * Op), jnp.bfloat16), # chunk gi (bf16)
                pltpu.VMEM((t_chunk, Bb, Op), jnp.float32),      # staged raw h_t
            ],
        ),
        compiler_params=pltpu.CompilerParams(
            # Batch axis is embarrassingly parallel; the T-chunk axis carries
            # the recurrence -> must stay serial.
            dimension_semantics=("parallel", "arbitrary"),
            vmem_limit_bytes=vmem_limit_bytes),
    )(x, h0_p,
      prep["ng"], prep["nb"],
      prep["w1"], prep["b1"], prep["g1"], prep["be1"],
      prep["w2"], prep["b2"], prep["g2"], prep["be2"],
      prep["wih"], prep["bih"], prep["whh"], prep["bhh"],
      prep["gy"], prep["by"])

    return y_p[:T, :, :O], hN_p[:, :O], no_sequence


# ------------------------------- pure-JAX ref ---------------------------------

def reference_forward(params, inputs, rnn_states, *, use_relu=True,
                      use_feature_normalization=True):
    """Pure-JAX reference using the same bf16-operand / f32-accumulate matmuls."""
    if inputs.ndim == 2:
        inputs = inputs[None]
    if rnn_states.ndim == 2:
        rnn_states = rnn_states[None]

    def ln(v, g, b):
        mu = v.mean(-1, keepdims=True)
        var = ((v - mu) ** 2).mean(-1, keepdims=True)
        return (v - mu) * lax.rsqrt(var + LN_EPS) * g + b

    def mm(a, w):
        return jnp.dot(a.astype(jnp.bfloat16), w.astype(jnp.bfloat16),
                       preferred_element_type=jnp.float32)

    act = (lambda v: jnp.maximum(v, 0.0)) if use_relu else jnp.tanh

    x = inputs.astype(jnp.float32)
    if use_feature_normalization:
        x = ln(x, params["norm_g"], params["norm_b"])
    x = ln(act(mm(x, params["fc1_w"]) + params["fc1_b"]),
           params["fc1_g"], params["fc1_beta"])
    x = ln(act(mm(x, params["fc2_w"]) + params["fc2_b"]),
           params["fc2_g"], params["fc2_beta"])

    h = rnn_states[0].astype(jnp.float32)
    O = h.shape[-1]
    gi = mm(x, params["gru_wih"]) + params["gru_bih"]
    ys = []
    for t in range(x.shape[0]):
        gh = mm(h, params["gru_whh"]) + params["gru_bhh"]
        r = jax.nn.sigmoid(gi[t, :, :O] + gh[:, :O])
        z = jax.nn.sigmoid(gi[t, :, O:2 * O] + gh[:, O:2 * O])
        n = jnp.tanh(gi[t, :, 2 * O:] + r * gh[:, 2 * O:])
        h = (1.0 - z) * n + z * h
        ys.append(ln(h, params["rnn_g"], params["rnn_beta"]))
    return jnp.stack(ys), h


# ----------------------------------- main --------------------------------------

if __name__ == "__main__":
    T, B = 10, 8
    D_IN, HIDDEN, OUT = 32, 48, 32   # non-128 widths -> exercises lane padding

    key = jax.random.PRNGKey(0)
    k_p, k_x, k_h = jax.random.split(key, 3)
    raw_params = init_params(k_p, D_IN, HIDDEN, OUT)
    prep = prepare_params(raw_params)   # pad / bf16-cast once, outside forward
    inputs = jax.random.normal(k_x, (T, B, D_IN), jnp.float32)
    rnn_states = jax.random.normal(k_h, (1, B, OUT), jnp.float32)

    y_ref, h_ref = reference_forward(raw_params, inputs, rnn_states,
                                     use_relu=True,
                                     use_feature_normalization=True)

    # Config 1: forced multi-chunk grid with T % t_chunk != 0 (tail-mask path).
    y1, h1, ns1 = rnn_base_forward(prep, inputs, rnn_states, use_relu=True,
                                   use_feature_normalization=True, t_chunk=4)
    # Config 2: VMEM-budget-derived chunk (single chunk at this toy size).
    y2, h2, ns2 = rnn_base_forward(prep, inputs, rnn_states, use_relu=True,
                                   use_feature_normalization=True)
    jax.block_until_ready((y1, h1, y2, h2))

    for y, h_final, no_seq in ((y1, h1, ns1), (y2, h2, ns2)):
        assert y.shape == (T, B, OUT) and h_final.shape == (B, OUT)
        assert no_seq is False
        err_y = float(jnp.max(jnp.abs(y - y_ref)))
        err_h = float(jnp.max(jnp.abs(h_final - h_ref)))
        # Kernel and reference share bf16 operand rounding with f32 accumulation;
        # the kernel additionally caches the GRU input projection in bf16, so
        # allow a slightly looser (still tight) tolerance.
        assert err_y < 3e-2 and err_h < 3e-2, (err_y, err_h)

    print("KERNEL_OK")
</pallas_src>

<mosaic_0001>
module attributes {stable_mosaic.version = 11 : i64} {
  func.func @rnn_base_kernel(%arg0: i32, %arg1: i32, %arg2: memref<4x8x32xf32, #tpu.memory_space<vmem>>, %arg3: memref<8x128xf32, #tpu.memory_space<vmem>>, %arg4: memref<1x32xf32, #tpu.memory_space<vmem>>, %arg5: memref<1x32xf32, #tpu.memory_space<vmem>>, %arg6: memref<32x128xbf16, #tpu.memory_space<vmem>>, %arg7: memref<1x128xf32, #tpu.memory_space<vmem>>, %arg8: memref<1x128xf32, #tpu.memory_space<vmem>>, %arg9: memref<1x128xf32, #tpu.memory_space<vmem>>, %arg10: memref<128x128xbf16, #tpu.memory_space<vmem>>, %arg11: memref<1x128xf32, #tpu.memory_space<vmem>>, %arg12: memref<1x128xf32, #tpu.memory_space<vmem>>, %arg13: memref<1x128xf32, #tpu.memory_space<vmem>>, %arg14: memref<128x384xbf16, #tpu.memory_space<vmem>>, %arg15: memref<1x384xf32, #tpu.memory_space<vmem>>, %arg16: memref<128x384xbf16, #tpu.memory_space<vmem>>, %arg17: memref<1x384xf32, #tpu.memory_space<vmem>>, %arg18: memref<1x128xf32, #tpu.memory_space<vmem>>, %arg19: memref<1x128xf32, #tpu.memory_space<vmem>>, %arg20: memref<4x8x128xf32, #tpu.memory_space<vmem>>, %arg21: memref<8x128xf32, #tpu.memory_space<vmem>>, %arg22: memref<8x128xf32, #tpu.memory_space<vmem>>, %arg23: memref<4x8x384xbf16, #tpu.memory_space<vmem>>, %arg24: memref<4x8x128xf32, #tpu.memory_space<vmem>>) attributes {dimension_semantics = [#tpu.dimension_semantics<parallel>, #tpu.dimension_semantics<arbitrary>], iteration_bounds = array<i64: 1, 3>, scalar_prefetch = 0 : i64, scratch_operands = 3 : i64, tpu.core_type = #tpu.core_type<tc>, window_params = [{transform_indices = @transform_0, window_bounds = array<i64: 4, 8, 32>}, {transform_indices = @transform_1, window_bounds = array<i64: 8, 128>}, {pipeline_mode = #tpu.pipeline_mode<synchronous>, transform_indices = @transform_2, window_bounds = array<i64: 1, 32>}, {pipeline_mode = #tpu.pipeline_mode<synchronous>, transform_indices = @transform_3, window_bounds = array<i64: 1, 32>}, {pipeline_mode = #tpu.pipeline_mode<synchronous>, transform_indices = @transform_4, window_bounds = array<i64: 32, 128>}, {pipeline_mode = #tpu.pipeline_mode<synchronous>, transform_indices = @transform_5, window_bounds = array<i64: 1, 128>}, {pipeline_mode = #tpu.pipeline_mode<synchronous>, transform_indices = @transform_6, window_bounds = array<i64: 1, 128>}, {pipeline_mode = #tpu.pipeline_mode<synchronous>, transform_indices = @transform_7, window_bounds = array<i64: 1, 128>}, {pipeline_mode = #tpu.pipeline_mode<synchronous>, transform_indices = @transform_8, window_bounds = array<i64: 128, 128>}, {pipeline_mode = #tpu.pipeline_mode<synchronous>, transform_indices = @transform_9, window_bounds = array<i64: 1, 128>}, {pipeline_mode = #tpu.pipeline_mode<synchronous>, transform_indices = @transform_10, window_bounds = array<i64: 1, 128>}, {pipeline_mode = #tpu.pipeline_mode<synchronous>, transform_indices = @transform_11, window_bounds = array<i64: 1, 128>}, {pipeline_mode = #tpu.pipeline_mode<synchronous>, transform_indices = @transform_12, window_bounds = array<i64: 128, 384>}, {pipeline_mode = #tpu.pipeline_mode<synchronous>, transform_indices = @transform_13, window_bounds = array<i64: 1, 384>}, {pipeline_mode = #tpu.pipeline_mode<synchronous>, transform_indices = @transform_14, window_bounds = array<i64: 128, 384>}, {pipeline_mode = #tpu.pipeline_mode<synchronous>, transform_indices = @transform_15, window_bounds = array<i64: 1, 384>}, {pipeline_mode = #tpu.pipeline_mode<synchronous>, transform_indices = @transform_16, window_bounds = array<i64: 1, 128>}, {pipeline_mode = #tpu.pipeline_mode<synchronous>, transform_indices = @transform_17, window_bounds = array<i64: 1, 128>}, {transform_indices = @transform_18, window_bounds = array<i64: 4, 8, 128>}, {transform_indices = @transform_19, window_bounds = array<i64: 8, 128>}]} {
    %c0_i32 = arith.constant 0 : i32
    %0 = arith.cmpi eq, %arg1, %c0_i32 : i32
    %1 = arith.extui %0 : i1 to i32
    %c0_i32_0 = arith.constant 0 : i32
    %2 = arith.cmpi ne, %1, %c0_i32_0 : i32
    scf.if %2 {
      %c0_118 = arith.constant 0 : index
      %c0_119 = arith.constant 0 : index
      %281 = vector.load %arg3[%c0_118, %c0_119] : memref<8x128xf32, #tpu.memory_space<vmem>>, vector<8x128xf32>
      %c0_120 = arith.constant 0 : index
      %c0_121 = arith.constant 0 : index
      %282 = vector.load %arg22[%c0_120, %c0_121] : memref<8x128xf32, #tpu.memory_space<vmem>>, vector<8x128xf32>
      tpu.vector_store %arg22[%c0_120, %c0_121], %281 {strides = array<i32>} : memref<8x128xf32, #tpu.memory_space<vmem>>, vector<8x128xf32>,
    } else {
    }
    %c0 = arith.constant 0 : index
    %c0_1 = arith.constant 0 : index
    %c0_2 = arith.constant 0 : index
    %3 = vector.load %arg2[%c0, %c0_1, %c0_2] : memref<4x8x32xf32, #tpu.memory_space<vmem>>, vector<4x8x32xf32>
    %4 = vector.shape_cast %3 : vector<4x8x32xf32> to vector<32x32xf32>
    %c0_3 = arith.constant 0 : index
    %c0_4 = arith.constant 0 : index
    %5 = vector.load %arg4[%c0_3, %c0_4] : memref<1x32xf32, #tpu.memory_space<vmem>>, vector<1x32xf32>
    %c0_5 = arith.constant 0 : index
    %c0_6 = arith.constant 0 : index
    %6 = vector.load %arg5[%c0_5, %c0_6] : memref<1x32xf32, #tpu.memory_space<vmem>>, vector<1x32xf32>
    %cst = arith.constant dense<0.000000e+00> : vector<32xf32>
    %7 = vector.multi_reduction <add>, %4, %cst [1] : vector<32x32xf32> to vector<32xf32>
    %8 = vector.shape_cast %7 : vector<32xf32> to vector<32x1xf32>
    %cst_7 = arith.constant 3.125000e-02 : f32
    %9 = vector.broadcast %cst_7 : f32 to vector<32x1xf32>
    %10 = arith.mulf %8, %9 : vector<32x1xf32>
    %11 = arith.mulf %4, %4 : vector<32x32xf32>
    %cst_8 = arith.constant dense<0.000000e+00> : vector<32xf32>
    %12 = vector.multi_reduction <add>, %11, %cst_8 [1] : vector<32x32xf32> to vector<32xf32>
    %13 = vector.shape_cast %12 : vector<32xf32> to vector<32x1xf32>
    %cst_9 = arith.constant 3.125000e-02 : f32
    %14 = vector.broadcast %cst_9 : f32 to vector<32x1xf32>
    %15 = arith.mulf %13, %14 : vector<32x1xf32>
    %16 = arith.mulf %10, %10 : vector<32x1xf32>
    %17 = arith.subf %15, %16 : vector<32x1xf32>
    %cst_10 = arith.constant 0.000000e+00 : f32
    %18 = vector.broadcast %cst_10 : f32 to vector<32x1xf32>
    %19 = arith.maximumf %17, %18 : vector<32x1xf32>
    %20 = vector.broadcast %10 : vector<32x1xf32> to vector<32x32xf32>
    %21 = arith.subf %4, %20 : vector<32x32xf32>
    %cst_11 = arith.constant 9.99999974E-6 : f32
    %22 = vector.broadcast %cst_11 : f32 to vector<32x1xf32>
    %23 = arith.addf %19, %22 : vector<32x1xf32>
    %24 = math.rsqrt %23 : vector<32x1xf32>
    %25 = vector.broadcast %24 : vector<32x1xf32> to vector<32x32xf32>
    %26 = arith.mulf %21, %25 : vector<32x32xf32>
    %27 = vector.broadcast %5 : vector<1x32xf32> to vector<32x32xf32>
    %28 = arith.mulf %26, %27 : vector<32x32xf32>
    %29 = vector.broadcast %6 : vector<1x32xf32> to vector<32x32xf32>
    %30 = arith.addf %28, %29 : vector<32x32xf32>
    %31 = arith.truncf %30 : vector<32x32xf32> to vector<32x32xbf16>
    %c0_12 = arith.constant 0 : index
    %c0_13 = arith.constant 0 : index
    %32 = vector.load %arg6[%c0_12, %c0_13] : memref<32x128xbf16, #tpu.memory_space<vmem>>, vector<32x128xbf16>
    %cst_14 = arith.constant dense<0.000000e+00> : vector<32x128xf32>
    %33 = tpu.matmul %31, %32, %cst_14 {dimension_numbers = #tpu.dot_dimension_numbers<[1], [0], [0], [1], [0, 0, 1, 1], [], []>} : vector<32x32xbf16>, vector<32x128xbf16>, vector<32x128xf32> -> vector<32x128xf32>
    %c0_15 = arith.constant 0 : index
    %c0_16 = arith.constant 0 : index
    %34 = vector.load %arg7[%c0_15, %c0_16] : memref<1x128xf32, #tpu.memory_space<vmem>>, vector<1x128xf32>
    %35 = vector.broadcast %34 : vector<1x128xf32> to vector<32x128xf32>
    %36 = arith.addf %33, %35 : vector<32x128xf32>
    %cst_17 = arith.constant 0.000000e+00 : f32
    %37 = vector.broadcast %cst_17 : f32 to vector<32x128xf32>
    %38 = arith.maximumf %36, %37 : vector<32x128xf32>
    %c0_18 = arith.constant 0 : index
    %c0_19 = arith.constant 0 : index
    %39 = vector.load %arg8[%c0_18, %c0_19] : memref<1x128xf32, #tpu.memory_space<vmem>>, vector<1x128xf32>
    %c0_20 = arith.constant 0 : index
    %c0_21 = arith.constant 0 : index
    %40 = vector.load %arg9[%c0_20, %c0_21] : memref<1x128xf32, #tpu.memory_space<vmem>>, vector<1x128xf32>
    %cst_22 = arith.constant dense<0.000000e+00> : vector<32xf32>
    %41 = vector.multi_reduction <add>, %38, %cst_22 [1] : vector<32x128xf32> to vector<32xf32>
    %42 = vector.shape_cast %41 : vector<32xf32> to vector<32x1xf32>
    %cst_23 = arith.constant 0.020833334 : f32
    %43 = vector.broadcast %cst_23 : f32 to vector<32x1xf32>
    %44 = arith.mulf %42, %43 : vector<32x1xf32>
    %45 = arith.mulf %38, %38 : vector<32x128xf32>
    %cst_24 = arith.constant dense<0.000000e+00> : vector<32xf32>
    %46 = vector.multi_reduction <add>, %45, %cst_24 [1] : vector<32x128xf32> to vector<32xf32>
    %47 = vector.shape_cast %46 : vector<32xf32> to vector<32x1xf32>
    %cst_25 = arith.constant 0.020833334 : f32
    %48 = vector.broadcast %cst_25 : f32 to vector<32x1xf32>
    %49 = arith.mulf %47, %48 : vector<32x1xf32>
    %50 = arith.mulf %44, %44 : vector<32x1xf32>
    %51 = arith.subf %49, %50 : vector<32x1xf32>
    %cst_26 = arith.constant 0.000000e+00 : f32
    %52 = vector.broadcast %cst_26 : f32 to vector<32x1xf32>
    %53 = arith.maximumf %51, %52 : vector<32x1xf32>
    %54 = vector.broadcast %44 : vector<32x1xf32> to vector<32x128xf32>
    %55 = arith.subf %38, %54 : vector<32x128xf32>
    %cst_27 = arith.constant 9.99999974E-6 : f32
    %56 = vector.broadcast %cst_27 : f32 to vector<32x1xf32>
    %57 = arith.addf %53, %56 : vector<32x1xf32>
    %58 = math.rsqrt %57 : vector<32x1xf32>
    %59 = vector.broadcast %58 : vector<32x1xf32> to vector<32x128xf32>
    %60 = arith.mulf %55, %59 : vector<32x128xf32>
    %61 = vector.broadcast %39 : vector<1x128xf32> to vector<32x128xf32>
    %62 = arith.mulf %60, %61 : vector<32x128xf32>
    %63 = vector.broadcast %40 : vector<1x128xf32> to vector<32x128xf32>
    %64 = arith.addf %62, %63 : vector<32x128xf32>
    %65 = arith.truncf %64 : vector<32x128xf32> to vector<32x128xbf16>
    %c0_28 = arith.constant 0 : index
    %c0_29 = arith.constant 0 : index
    %66 = vector.load %arg10[%c0_28, %c0_29] : memref<128x128xbf16, #tpu.memory_space<vmem>>, vector<128x128xbf16>
    %cst_30 = arith.constant dense<0.000000e+00> : vector<32x128xf32>
    %67 = tpu.matmul %65, %66, %cst_30 {dimension_numbers = #tpu.dot_dimension_numbers<[1], [0], [0], [1], [0, 0, 1, 1], [], []>} : vector<32x128xbf16>, vector<128x128xbf16>, vector<32x128xf32> -> vector<32x128xf32>
    %c0_31 = arith.constant 0 : index
    %c0_32 = arith.constant 0 : index
    %68 = vector.load %arg11[%c0_31, %c0_32] : memref<1x128xf32, #tpu.memory_space<vmem>>, vector<1x128xf32>
    %69 = vector.broadcast %68 : vector<1x128xf32> to vector<32x128xf32>
    %70 = arith.addf %67, %69 : vector<32x128xf32>
    %cst_33 = arith.constant 0.000000e+00 : f32
    %71 = vector.broadcast %cst_33 : f32 to vector<32x128xf32>
    %72 = arith.maximumf %70, %71 : vector<32x128xf32>
    %c0_34 = arith.constant 0 : index
    %c0_35 = arith.constant 0 : index
    %73 = vector.load %arg12[%c0_34, %c0_35] : memref<1x128xf32, #tpu.memory_space<vmem>>, vector<1x128xf32>
    %c0_36 = arith.constant 0 : index
    %c0_37 = arith.constant 0 : index
    %74 = vector.load %arg13[%c0_36, %c0_37] : memref<1x128xf32, #tpu.memory_space<vmem>>, vector<1x128xf32>
    %cst_38 = arith.constant dense<0.000000e+00> : vector<32xf32>
    %75 = vector.multi_reduction <add>, %72, %cst_38 [1] : vector<32x128xf32> to vector<32xf32>
    %76 = vector.shape_cast %75 : vector<32xf32> to vector<32x1xf32>
    %cst_39 = arith.constant 0.020833334 : f32
    %77 = vector.broadcast %cst_39 : f32 to vector<32x1xf32>
    %78 = arith.mulf %76, %77 : vector<32x1xf32>
    %79 = arith.mulf %72, %72 : vector<32x128xf32>
    %cst_40 = arith.constant dense<0.000000e+00> : vector<32xf32>
    %80 = vector.multi_reduction <add>, %79, %cst_40 [1] : vector<32x128xf32> to vector<32xf32>
    %81 = vector.shape_cast %80 : vector<32xf32> to vector<32x1xf32>
    %cst_41 = arith.constant 0.020833334 : f32
    %82 = vector.broadcast %cst_41 : f32 to vector<32x1xf32>
    %83 = arith.mulf %81, %82 : vector<32x1xf32>
    %84 = arith.mulf %78, %78 : vector<32x1xf32>
    %85 = arith.subf %83, %84 : vector<32x1xf32>
    %cst_42 = arith.constant 0.000000e+00 : f32
    %86 = vector.broadcast %cst_42 : f32 to vector<32x1xf32>
    %87 = arith.maximumf %85, %86 : vector<32x1xf32>
    %88 = vector.broadcast %78 : vector<32x1xf32> to vector<32x128xf32>
    %89 = arith.subf %72, %88 : vector<32x128xf32>
    %cst_43 = arith.constant 9.99999974E-6 : f32
    %90 = vector.broadcast %cst_43 : f32 to vector<32x1xf32>
    %91 = arith.addf %87, %90 : vector<32x1xf32>
    %92 = math.rsqrt %91 : vector<32x1xf32>
    %93 = vector.broadcast %92 : vector<32x1xf32> to vector<32x128xf32>
    %94 = arith.mulf %89, %93 : vector<32x128xf32>
    %95 = vector.broadcast %73 : vector<1x128xf32> to vector<32x128xf32>
    %96 = arith.mulf %94, %95 : vector<32x128xf32>
    %97 = vector.broadcast %74 : vector<1x128xf32> to vector<32x128xf32>
    %98 = arith.addf %96, %97 : vector<32x128xf32>
    %99 = arith.truncf %98 : vector<32x128xf32> to vector<32x128xbf16>
    %c0_44 = arith.constant 0 : index
    %c0_45 = arith.constant 0 : index
    %100 = vector.load %arg14[%c0_44, %c0_45] : memref<128x384xbf16, #tpu.memory_space<vmem>>, vector<128x384xbf16>
    %cst_46 = arith.constant dense<0.000000e+00> : vector<32x384xf32>
    %101 = tpu.matmul %99, %100, %cst_46 {dimension_numbers = #tpu.dot_dimension_numbers<[1], [0], [0], [1], [0, 0, 1, 1], [], []>} : vector<32x128xbf16>, vector<128x384xbf16>, vector<32x384xf32> -> vector<32x384xf32>
    %c0_47 = arith.constant 0 : index
    %c0_48 = arith.constant 0 : index
    %102 = vector.load %arg15[%c0_47, %c0_48] : memref<1x384xf32, #tpu.memory_space<vmem>>, vector<1x384xf32>
    %103 = vector.broadcast %102 : vector<1x384xf32> to vector<32x384xf32>
    %104 = arith.addf %101, %103 : vector<32x384xf32>
    %105 = arith.truncf %104 : vector<32x384xf32> to vector<32x384xbf16>
    %106 = vector.shape_cast %105 : vector<32x384xbf16> to vector<4x8x384xbf16>
    %c0_49 = arith.constant 0 : index
    %c0_50 = arith.constant 0 : index
    %c0_51 = arith.constant 0 : index
    %107 = vector.load %arg23[%c0_49, %c0_50, %c0_51] : memref<4x8x384xbf16, #tpu.memory_space<vmem>>, vector<4x8x384xbf16>
    tpu.vector_store %arg23[%c0_49, %c0_50, %c0_51], %106 {strides = array<i32>} : memref<4x8x384xbf16, #tpu.memory_space<vmem>>, vector<4x8x384xbf16>,
    %c0_52 = arith.constant 0 : index
    %c0_53 = arith.constant 0 : index
    %108 = vector.load %arg16[%c0_52, %c0_53] : memref<128x384xbf16, #tpu.memory_space<vmem>>, vector<128x384xbf16>
    %c0_54 = arith.constant 0 : index
    %c0_55 = arith.constant 0 : index
    %109 = vector.load %arg17[%c0_54, %c0_55] : memref<1x384xf32, #tpu.memory_space<vmem>>, vector<1x384xf32>
    %c0_56 = arith.constant 0 : index
    %c0_57 = arith.constant 0 : index
    %110 = vector.load %arg22[%c0_56, %c0_57] : memref<8x128xf32, #tpu.memory_space<vmem>>, vector<8x128xf32>
    %111 = arith.truncf %110 : vector<8x128xf32> to vector<8x128xbf16>
    %cst_58 = arith.constant dense<0.000000e+00> : vector<8x384xf32>
    %112 = tpu.matmul %111, %108, %cst_58 {dimension_numbers = #tpu.dot_dimension_numbers<[1], [0], [0], [1], [0, 0, 1, 1], [], []>} : vector<8x128xbf16>, vector<128x384xbf16>, vector<8x384xf32> -> vector<8x384xf32>
    %113 = vector.broadcast %109 : vector<1x384xf32> to vector<8x384xf32>
    %114 = arith.addf %112, %113 : vector<8x384xf32>
    %c0_59 = arith.constant 0 : index
    %c0_60 = arith.constant 0 : index
    %c0_61 = arith.constant 0 : index
    %115 = vector.load %arg23[%c0_59, %c0_60, %c0_61] : memref<4x8x384xbf16, #tpu.memory_space<vmem>>, vector<1x8x384xbf16>
    %116 = vector.shape_cast %115 : vector<1x8x384xbf16> to vector<8x384xbf16>
    %117 = arith.extf %116 : vector<8x384xbf16> to vector<8x384xf32>
    %118 = vector.extract_strided_slice %117 {offsets = [0, 0], sizes = [8, 256], strides = [1, 1]} : vector<8x384xf32> to vector<8x256xf32>
    %119 = vector.extract_strided_slice %114 {offsets = [0, 0], sizes = [8, 256], strides = [1, 1]} : vector<8x384xf32> to vector<8x256xf32>
    %120 = arith.addf %118, %119 : vector<8x256xf32>
    %121 = arith.negf %120 : vector<8x256xf32>
    %122 = math.exp %121 : vector<8x256xf32>
    %cst_62 = arith.constant 1.000000e+00 : f32
    %123 = vector.broadcast %cst_62 : f32 to vector<8x256xf32>
    %124 = arith.addf %123, %122 : vector<8x256xf32>
    %125 = arith.divf %123, %124 : vector<8x256xf32>
    %126 = vector.extract_strided_slice %125 {offsets = [0, 0], sizes = [8, 128], strides = [1, 1]} : vector<8x256xf32> to vector<8x128xf32>
    %127 = vector.extract_strided_slice %125 {offsets = [0, 128], sizes = [8, 128], strides = [1, 1]} : vector<8x256xf32> to vector<8x128xf32>
    %128 = vector.extract_strided_slice %117 {offsets = [0, 256], sizes = [8, 128], strides = [1, 1]} : vector<8x384xf32> to vector<8x128xf32>
    %129 = vector.extract_strided_slice %114 {offsets = [0, 256], sizes = [8, 128], strides = [1, 1]} : vector<8x384xf32> to vector<8x128xf32>
    %130 = arith.mulf %126, %129 : vector<8x128xf32>
    %131 = arith.addf %128, %130 : vector<8x128xf32>
    %132 = math.tanh %131 : vector<8x128xf32>
    %cst_63 = arith.constant 1.000000e+00 : f32
    %133 = vector.broadcast %cst_63 : f32 to vector<8x128xf32>
    %134 = arith.subf %133, %127 : vector<8x128xf32>
    %135 = arith.mulf %134, %132 : vector<8x128xf32>
    %136 = arith.mulf %127, %110 : vector<8x128xf32>
    %137 = arith.addf %135, %136 : vector<8x128xf32>
    %c4_i32 = arith.constant 4 : i32
    %138 = arith.muli %arg1, %c4_i32 : i32
    %c0_i32_64 = arith.constant 0 : i32
    %139 = arith.addi %138, %c0_i32_64 : i32
    %c10_i32 = arith.constant 10 : i32
    %140 = arith.cmpi slt, %139, %c10_i32 : i32
    %141 = arith.select %140, %137, %110 : vector<8x128xf32>
    %c0_65 = arith.constant 0 : index
    %c0_66 = arith.constant 0 : index
    %c0_67 = arith.constant 0 : index
    %142 = vector.load %arg24[%c0_65, %c0_66, %c0_67] : memref<4x8x128xf32, #tpu.memory_space<vmem>>, vector<1x8x128xf32>
    %143 = vector.shape_cast %142 : vector<1x8x128xf32> to vector<8x128xf32>
    %144 = vector.shape_cast %141 : vector<8x128xf32> to vector<1x8x128xf32>
    tpu.vector_store %arg24[%c0_65, %c0_66, %c0_67], %144 {strides = array<i32>} : memref<4x8x128xf32, #tpu.memory_space<vmem>>, vector<1x8x128xf32>,
    %145 = arith.truncf %141 : vector<8x128xf32> to vector<8x128xbf16>
    %cst_68 = arith.constant dense<0.000000e+00> : vector<8x384xf32>
    %146 = tpu.matmul %145, %108, %cst_68 {dimension_numbers = #tpu.dot_dimension_numbers<[1], [0], [0], [1], [0, 0, 1, 1], [], []>} : vector<8x128xbf16>, vector<128x384xbf16>, vector<8x384xf32> -> vector<8x384xf32>
    %147 = vector.broadcast %109 : vector<1x384xf32> to vector<8x384xf32>
    %148 = arith.addf %146, %147 : vector<8x384xf32>
    %c1 = arith.constant 1 : index
    %c0_69 = arith.constant 0 : index
    %c0_70 = arith.constant 0 : index
    %149 = vector.load %arg23[%c1, %c0_69, %c0_70] : memref<4x8x384xbf16, #tpu.memory_space<vmem>>, vector<1x8x384xbf16>
    %150 = vector.shape_cast %149 : vector<1x8x384xbf16> to vector<8x384xbf16>
    %151 = arith.extf %150 : vector<8x384xbf16> to vector<8x384xf32>
    %152 = vector.extract_strided_slice %151 {offsets = [0, 0], sizes = [8, 256], strides = [1, 1]} : vector<8x384xf32> to vector<8x256xf32>
    %153 = vector.extract_strided_slice %148 {offsets = [0, 0], sizes = [8, 256], strides = [1, 1]} : vector<8x384xf32> to vector<8x256xf32>
    %154 = arith.addf %152, %153 : vector<8x256xf32>
    %155 = arith.negf %154 : vector<8x256xf32>
    %156 = math.exp %155 : vector<8x256xf32>
    %cst_71 = arith.constant 1.000000e+00 : f32
    %157 = vector.broadcast %cst_71 : f32 to vector<8x256xf32>
    %158 = arith.addf %157, %156 : vector<8x256xf32>
    %159 = arith.divf %157, %158 : vector<8x256xf32>
    %160 = vector.extract_strided_slice %159 {offsets = [0, 0], sizes = [8, 128], strides = [1, 1]} : vector<8x256xf32> to vector<8x128xf32>
    %161 = vector.extract_strided_slice %159 {offsets = [0, 128], sizes = [8, 128], strides = [1, 1]} : vector<8x256xf32> to vector<8x128xf32>
    %162 = vector.extract_strided_slice %151 {offsets = [0, 256], sizes = [8, 128], strides = [1, 1]} : vector<8x384xf32> to vector<8x128xf32>
    %163 = vector.extract_strided_slice %148 {offsets = [0, 256], sizes = [8, 128], strides = [1, 1]} : vector<8x384xf32> to vector<8x128xf32>
    %164 = arith.mulf %160, %163 : vector<8x128xf32>
    %165 = arith.addf %162, %164 : vector<8x128xf32>
    %166 = math.tanh %165 : vector<8x128xf32>
    %cst_72 = arith.constant 1.000000e+00 : f32
    %167 = vector.broadcast %cst_72 : f32 to vector<8x128xf32>
    %168 = arith.subf %167, %161 : vector<8x128xf32>
    %169 = arith.mulf %168, %166 : vector<8x128xf32>
    %170 = arith.mulf %161, %141 : vector<8x128xf32>
    %171 = arith.addf %169, %170 : vector<8x128xf32>
    %c4_i32_73 = arith.constant 4 : i32
    %172 = arith.muli %arg1, %c4_i32_73 : i32
    %c1_i32 = arith.constant 1 : i32
    %173 = arith.addi %172, %c1_i32 : i32
    %c10_i32_74 = arith.constant 10 : i32
    %174 = arith.cmpi slt, %173, %c10_i32_74 : i32
    %175 = arith.select %174, %171, %141 : vector<8x128xf32>
    %c1_75 = arith.constant 1 : index
    %c0_76 = arith.constant 0 : index
    %c0_77 = arith.constant 0 : index
    %176 = vector.load %arg24[%c1_75, %c0_76, %c0_77] : memref<4x8x128xf32, #tpu.memory_space<vmem>>, vector<1x8x128xf32>
    %177 = vector.shape_cast %176 : vector<1x8x128xf32> to vector<8x128xf32>
    %178 = vector.shape_cast %175 : vector<8x128xf32> to vector<1x8x128xf32>
    tpu.vector_store %arg24[%c1_75, %c0_76, %c0_77], %178 {strides = array<i32>} : memref<4x8x128xf32, #tpu.memory_space<vmem>>, vector<1x8x128xf32>,
    %179 = arith.truncf %175 : vector<8x128xf32> to vector<8x128xbf16>
    %cst_78 = arith.constant dense<0.000000e+00> : vector<8x384xf32>
    %180 = tpu.matmul %179, %108, %cst_78 {dimension_numbers = #tpu.dot_dimension_numbers<[1], [0], [0], [1], [0, 0, 1, 1], [], []>} : vector<8x128xbf16>, vector<128x384xbf16>, vector<8x384xf32> -> vector<8x384xf32>
    %181 = vector.broadcast %109 : vector<1x384xf32> to vector<8x384xf32>
    %182 = arith.addf %180, %181 : vector<8x384xf32>
    %c2 = arith.constant 2 : index
    %c0_79 = arith.constant 0 : index
    %c0_80 = arith.constant 0 : index
    %183 = vector.load %arg23[%c2, %c0_79, %c0_80] : memref<4x8x384xbf16, #tpu.memory_space<vmem>>, vector<1x8x384xbf16>
    %184 = vector.shape_cast %183 : vector<1x8x384xbf16> to vector<8x384xbf16>
    %185 = arith.extf %184 : vector<8x384xbf16> to vector<8x384xf32>
    %186 = vector.extract_strided_slice %185 {offsets = [0, 0], sizes = [8, 256], strides = [1, 1]} : vector<8x384xf32> to vector<8x256xf32>
    %187 = vector.extract_strided_slice %182 {offsets = [0, 0], sizes = [8, 256], strides = [1, 1]} : vector<8x384xf32> to vector<8x256xf32>
    %188 = arith.addf %186, %187 : vector<8x256xf32>
    %189 = arith.negf %188 : vector<8x256xf32>
    %190 = math.exp %189 : vector<8x256xf32>
    %cst_81 = arith.constant 1.000000e+00 : f32
    %191 = vector.broadcast %cst_81 : f32 to vector<8x256xf32>
    %192 = arith.addf %191, %190 : vector<8x256xf32>
    %193 = arith.divf %191, %192 : vector<8x256xf32>
    %194 = vector.extract_strided_slice %193 {offsets = [0, 0], sizes = [8, 128], strides = [1, 1]} : vector<8x256xf32> to vector<8x128xf32>
    %195 = vector.extract_strided_slice %193 {offsets = [0, 128], sizes = [8, 128], strides = [1, 1]} : vector<8x256xf32> to vector<8x128xf32>
    %196 = vector.extract_strided_slice %185 {offsets = [0, 256], sizes = [8, 128], strides = [1, 1]} : vector<8x384xf32> to vector<8x128xf32>
    %197 = vector.extract_strided_slice %182 {offsets = [0, 256], sizes = [8, 128], strides = [1, 1]} : vector<8x384xf32> to vector<8x128xf32>
    %198 = arith.mulf %194, %197 : vector<8x128xf32>
    %199 = arith.addf %196, %198 : vector<8x128xf32>
    %200 = math.tanh %199 : vector<8x128xf32>
    %cst_82 = arith.constant 1.000000e+00 : f32
    %201 = vector.broadcast %cst_82 : f32 to vector<8x128xf32>
    %202 = arith.subf %201, %195 : vector<8x128xf32>
    %203 = arith.mulf %202, %200 : vector<8x128xf32>
    %204 = arith.mulf %195, %175 : vector<8x128xf32>
    %205 = arith.addf %203, %204 : vector<8x128xf32>
    %c4_i32_83 = arith.constant 4 : i32
    %206 = arith.muli %arg1, %c4_i32_83 : i32
    %c2_i32 = arith.constant 2 : i32
    %207 = arith.addi %206, %c2_i32 : i32
    %c10_i32_84 = arith.constant 10 : i32
    %208 = arith.cmpi slt, %207, %c10_i32_84 : i32
    %209 = arith.select %208, %205, %175 : vector<8x128xf32>
    %c2_85 = arith.constant 2 : index
    %c0_86 = arith.constant 0 : index
    %c0_87 = arith.constant 0 : index
    %210 = vector.load %arg24[%c2_85, %c0_86, %c0_87] : memref<4x8x128xf32, #tpu.memory_space<vmem>>, vector<1x8x128xf32>
    %211 = vector.shape_cast %210 : vector<1x8x128xf32> to vector<8x128xf32>
    %212 = vector.shape_cast %209 : vector<8x128xf32> to vector<1x8x128xf32>
    tpu.vector_store %arg24[%c2_85, %c0_86, %c0_87], %212 {strides = array<i32>} : memref<4x8x128xf32, #tpu.memory_space<vmem>>, vector<1x8x128xf32>,
    %213 = arith.truncf %209 : vector<8x128xf32> to vector<8x128xbf16>
    %cst_88 = arith.constant dense<0.000000e+00> : vector<8x384xf32>
    %214 = tpu.matmul %213, %108, %cst_88 {dimension_numbers = #tpu.dot_dimension_numbers<[1], [0], [0], [1], [0, 0, 1, 1], [], []>} : vector<8x128xbf16>, vector<128x384xbf16>, vector<8x384xf32> -> vector<8x384xf32>
    %215 = vector.broadcast %109 : vector<1x384xf32> to vector<8x384xf32>
    %216 = arith.addf %214, %215 : vector<8x384xf32>
    %c3 = arith.constant 3 : index
    %c0_89 = arith.constant 0 : index
    %c0_90 = arith.constant 0 : index
    %217 = vector.load %arg23[%c3, %c0_89, %c0_90] : memref<4x8x384xbf16, #tpu.memory_space<vmem>>, vector<1x8x384xbf16>
    %218 = vector.shape_cast %217 : vector<1x8x384xbf16> to vector<8x384xbf16>
    %219 = arith.extf %218 : vector<8x384xbf16> to vector<8x384xf32>
    %220 = vector.extract_strided_slice %219 {offsets = [0, 0], sizes = [8, 256], strides = [1, 1]} : vector<8x384xf32> to vector<8x256xf32>
    %221 = vector.extract_strided_slice %216 {offsets = [0, 0], sizes = [8, 256], strides = [1, 1]} : vector<8x384xf32> to vector<8x256xf32>
    %222 = arith.addf %220, %221 : vector<8x256xf32>
    %223 = arith.negf %222 : vector<8x256xf32>
    %224 = math.exp %223 : vector<8x256xf32>
    %cst_91 = arith.constant 1.000000e+00 : f32
    %225 = vector.broadcast %cst_91 : f32 to vector<8x256xf32>
    %226 = arith.addf %225, %224 : vector<8x256xf32>
    %227 = arith.divf %225, %226 : vector<8x256xf32>
    %228 = vector.extract_strided_slice %227 {offsets = [0, 0], sizes = [8, 128], strides = [1, 1]} : vector<8x256xf32> to vector<8x128xf32>
    %229 = vector.extract_strided_slice %227 {offsets = [0, 128], sizes = [8, 128], strides = [1, 1]} : vector<8x256xf32> to vector<8x128xf32>
    %230 = vector.extract_strided_slice %219 {offsets = [0, 256], sizes = [8, 128], strides = [1, 1]} : vector<8x384xf32> to vector<8x128xf32>
    %231 = vector.extract_strided_slice %216 {offsets = [0, 256], sizes = [8, 128], strides = [1, 1]} : vector<8x384xf32> to vector<8x128xf32>
    %232 = arith.mulf %228, %231 : vector<8x128xf32>
    %233 = arith.addf %230, %232 : vector<8x128xf32>
    %234 = math.tanh %233 : vector<8x128xf32>
    %cst_92 = arith.constant 1.000000e+00 : f32
    %235 = vector.broadcast %cst_92 : f32 to vector<8x128xf32>
    %236 = arith.subf %235, %229 : vector<8x128xf32>
    %237 = arith.mulf %236, %234 : vector<8x128xf32>
    %238 = arith.mulf %229, %209 : vector<8x128xf32>
    %239 = arith.addf %237, %238 : vector<8x128xf32>
    %c4_i32_93 = arith.constant 4 : i32
    %240 = arith.muli %arg1, %c4_i32_93 : i32
    %c3_i32 = arith.constant 3 : i32
    %241 = arith.addi %240, %c3_i32 : i32
    %c10_i32_94 = arith.constant 10 : i32
    %242 = arith.cmpi slt, %241, %c10_i32_94 : i32
    %243 = arith.select %242, %239, %209 : vector<8x128xf32>
    %c3_95 = arith.constant 3 : index
    %c0_96 = arith.constant 0 : index
    %c0_97 = arith.constant 0 : index
    %244 = vector.load %arg24[%c3_95, %c0_96, %c0_97] : memref<4x8x128xf32, #tpu.memory_space<vmem>>, vector<1x8x128xf32>
    %245 = vector.shape_cast %244 : vector<1x8x128xf32> to vector<8x128xf32>
    %246 = vector.shape_cast %243 : vector<8x128xf32> to vector<1x8x128xf32>
    tpu.vector_store %arg24[%c3_95, %c0_96, %c0_97], %246 {strides = array<i32>} : memref<4x8x128xf32, #tpu.memory_space<vmem>>, vector<1x8x128xf32>,
    %c0_98 = arith.constant 0 : index
    %c0_99 = arith.constant 0 : index
    %247 = vector.load %arg22[%c0_98, %c0_99] : memref<8x128xf32, #tpu.memory_space<vmem>>, vector<8x128xf32>
    tpu.vector_store %arg22[%c0_98, %c0_99], %243 {strides = array<i32>} : memref<8x128xf32, #tpu.memory_space<vmem>>, vector<8x128xf32>,
    %c0_100 = arith.constant 0 : index
    %c0_101 = arith.constant 0 : index
    %c0_102 = arith.constant 0 : index
    %248 = vector.load %arg24[%c0_100, %c0_101, %c0_102] : memref<4x8x128xf32, #tpu.memory_space<vmem>>, vector<4x8x128xf32>
    %c0_103 = arith.constant 0 : index
    %c0_104 = arith.constant 0 : index
    %249 = vector.load %arg18[%c0_103, %c0_104] : memref<1x128xf32, #tpu.memory_space<vmem>>, vector<1x128xf32>
    %c0_105 = arith.constant 0 : index
    %c0_106 = arith.constant 0 : index
    %250 = vector.load %arg19[%c0_105, %c0_106] : memref<1x128xf32, #tpu.memory_space<vmem>>, vector<1x128xf32>
    %cst_107 = arith.constant dense<0.000000e+00> : vector<4x8xf32>
    %251 = vector.multi_reduction <add>, %248, %cst_107 [2] : vector<4x8x128xf32> to vector<4x8xf32>
    %252 = vector.shape_cast %251 : vector<4x8xf32> to vector<4x8x1xf32>
    %cst_108 = arith.constant 3.125000e-02 : f32
    %253 = vector.broadcast %cst_108 : f32 to vector<4x8x1xf32>
    %254 = arith.mulf %252, %253 : vector<4x8x1xf32>
    %255 = arith.mulf %248, %248 : vector<4x8x128xf32>
    %cst_109 = arith.constant dense<0.000000e+00> : vector<4x8xf32>
    %256 = vector.multi_reduction <add>, %255, %cst_109 [2] : vector<4x8x128xf32> to vector<4x8xf32>
    %257 = vector.shape_cast %256 : vector<4x8xf32> to vector<4x8x1xf32>
    %cst_110 = arith.constant 3.125000e-02 : f32
    %258 = vector.broadcast %cst_110 : f32 to vector<4x8x1xf32>
    %259 = arith.mulf %257, %258 : vector<4x8x1xf32>
    %260 = arith.mulf %254, %254 : vector<4x8x1xf32>
    %261 = arith.subf %259, %260 : vector<4x8x1xf32>
    %cst_111 = arith.constant 0.000000e+00 : f32
    %262 = vector.broadcast %cst_111 : f32 to vector<4x8x1xf32>
    %263 = arith.maximumf %261, %262 : vector<4x8x1xf32>
    %264 = vector.broadcast %254 : vector<4x8x1xf32> to vector<4x8x128xf32>
    %265 = arith.subf %248, %264 : vector<4x8x128xf32>
    %cst_112 = arith.constant 9.99999974E-6 : f32
    %266 = vector.broadcast %cst_112 : f32 to vector<4x8x1xf32>
    %267 = arith.addf %263, %266 : vector<4x8x1xf32>
    %268 = math.rsqrt %267 : vector<4x8x1xf32>
    %269 = vector.broadcast %268 : vector<4x8x1xf32> to vector<4x8x128xf32>
    %270 = arith.mulf %265, %269 : vector<4x8x128xf32>
    %271 = vector.shape_cast %249 : vector<1x128xf32> to vector<1x1x128xf32>
    %272 = vector.broadcast %271 : vector<1x1x128xf32> to vector<4x8x128xf32>
    %273 = arith.mulf %270, %272 : vector<4x8x128xf32>
    %274 = vector.shape_cast %250 : vector<1x128xf32> to vector<1x1x128xf32>
    %275 = vector.broadcast %274 : vector<1x1x128xf32> to vector<4x8x128xf32>
    %276 = arith.addf %273, %275 : vector<4x8x128xf32>
    %c0_113 = arith.constant 0 : index
    %c0_114 = arith.constant 0 : index
    %c0_115 = arith.constant 0 : index
    %277 = vector.load %arg20[%c0_113, %c0_114, %c0_115] : memref<4x8x128xf32, #tpu.memory_space<vmem>>, vector<4x8x128xf32>
    tpu.vector_store %arg20[%c0_113, %c0_114, %c0_115], %276 {strides = array<i32>} : memref<4x8x128xf32, #tpu.memory_space<vmem>>, vector<4x8x128xf32>,
    %c2_i32_116 = arith.constant 2 : i32
    %278 = arith.cmpi eq, %arg1, %c2_i32_116 : i32
    %279 = arith.extui %278 : i1 to i32
    %c0_i32_117 = arith.constant 0 : i32
    %280 = arith.cmpi ne, %279, %c0_i32_117 : i32
    scf.if %280 {
      %c0_118 = arith.constant 0 : index
      %c0_119 = arith.constant 0 : index
      %281 = vector.load %arg21[%c0_118, %c0_119] : memref<8x128xf32, #tpu.memory_space<vmem>>, vector<8x128xf32>
      tpu.vector_store %arg21[%c0_118, %c0_119], %243 {strides = array<i32>} : memref<8x128xf32, #tpu.memory_space<vmem>>, vector<8x128xf32>,
    } else {
    }
    return
  }
  func.func @transform_0(%arg0: i32, %arg1: i32) -> (i32, i32, i32) {
    %c0_i32 = arith.constant 0 : i32
    %c0_i32_0 = arith.constant 0 : i32
    return %arg1, %arg0, %c0_i32 : i32, i32, i32
  }
  func.func @transform_1(%arg0: i32, %arg1: i32) -> (i32, i32) {
    %c0_i32 = arith.constant 0 : i32
    %c0_i32_0 = arith.constant 0 : i32
    return %arg0, %c0_i32 : i32, i32
  }
  func.func @transform_2(%arg0: i32, %arg1: i32) -> (i32, i32) {
    %c0_i32 = arith.constant 0 : i32
    %c0_i32_0 = arith.constant 0 : i32
    %c0_i32_1 = arith.constant 0 : i32
    return %c0_i32, %c0_i32_0 : i32, i32
  }
  func.func @transform_3(%arg0: i32, %arg1: i32) -> (i32, i32) {
    %c0_i32 = arith.constant 0 : i32
    %c0_i32_0 = arith.constant 0 : i32
    %c0_i32_1 = arith.constant 0 : i32
    return %c0_i32, %c0_i32_0 : i32, i32
  }
  func.func @transform_4(%arg0: i32, %arg1: i32) -> (i32, i32) {
    %c0_i32 = arith.constant 0 : i32
    %c0_i32_0 = arith.constant 0 : i32
    %c0_i32_1 = arith.constant 0 : i32
    return %c0_i32, %c0_i32_0 : i32, i32
  }
  func.func @transform_5(%arg0: i32, %arg1: i32) -> (i32, i32) {
    %c0_i32 = arith.constant 0 : i32
    %c0_i32_0 = arith.constant 0 : i32
    %c0_i32_1 = arith.constant 0 : i32
    return %c0_i32, %c0_i32_0 : i32, i32
  }
  func.func @transform_6(%arg0: i32, %arg1: i32) -> (i32, i32) {
    %c0_i32 = arith.constant 0 : i32
    %c0_i32_0 = arith.constant 0 : i32
    %c0_i32_1 = arith.constant 0 : i32
    return %c0_i32, %c0_i32_0 : i32, i32
  }
  func.func @transform_7(%arg0: i32, %arg1: i32) -> (i32, i32) {
    %c0_i32 = arith.constant 0 : i32
    %c0_i32_0 = arith.constant 0 : i32
    %c0_i32_1 = arith.constant 0 : i32
    return %c0_i32, %c0_i32_0 : i32, i32
  }
  func.func @transform_8(%arg0: i32, %arg1: i32) -> (i32, i32) {
    %c0_i32 = arith.constant 0 : i32
    %c0_i32_0 = arith.constant 0 : i32
    %c0_i32_1 = arith.constant 0 : i32
    return %c0_i32, %c0_i32_0 : i32, i32
  }
  func.func @transform_9(%arg0: i32, %arg1: i32) -> (i32, i32) {
    %c0_i32 = arith.constant 0 : i32
    %c0_i32_0 = arith.constant 0 : i32
    %c0_i32_1 = arith.constant 0 : i32
    return %c0_i32, %c0_i32_0 : i32, i32
  }
  func.func @transform_10(%arg0: i32, %arg1: i32) -> (i32, i32) {
    %c0_i32 = arith.constant 0 : i32
    %c0_i32_0 = arith.constant 0 : i32
    %c0_i32_1 = arith.constant 0 : i32
    return %c0_i32, %c0_i32_0 : i32, i32
  }
  func.func @transform_11(%arg0: i32, %arg1: i32) -> (i32, i32) {
    %c0_i32 = arith.constant 0 : i32
    %c0_i32_0 = arith.constant 0 : i32
    %c0_i32_1 = arith.constant 0 : i32
    return %c0_i32, %c0_i32_0 : i32, i32
  }
  func.func @transform_12(%arg0: i32, %arg1: i32) -> (i32, i32) {
    %c0_i32 = arith.constant 0 : i32
    %c0_i32_0 = arith.constant 0 : i32
    %c0_i32_1 = arith.constant 0 : i32
    return %c0_i32, %c0_i32_0 : i32, i32
  }
  func.func @transform_13(%arg0: i32, %arg1: i32) -> (i32, i32) {
    %c0_i32 = arith.constant 0 : i32
    %c0_i32_0 = arith.constant 0 : i32
    %c0_i32_1 = arith.constant 0 : i32
    return %c0_i32, %c0_i32_0 : i32, i32
  }
  func.func @transform_14(%arg0: i32, %arg1: i32) -> (i32, i32) {
    %c0_i32 = arith.constant 0 : i32
    %c0_i32_0 = arith.constant 0 : i32
    %c0_i32_1 = arith.constant 0 : i32
    return %c0_i32, %c0_i32_0 : i32, i32
  }
  func.func @transform_15(%arg0: i32, %arg1: i32) -> (i32, i32) {
    %c0_i32 = arith.constant 0 : i32
    %c0_i32_0 = arith.constant 0 : i32
    %c0_i32_1 = arith.constant 0 : i32
    return %c0_i32, %c0_i32_0 : i32, i32
  }
  func.func @transform_16(%arg0: i32, %arg1: i32) -> (i32, i32) {
    %c0_i32 = arith.constant 0 : i32
    %c0_i32_0 = arith.constant 0 : i32
    %c0_i32_1 = arith.constant 0 : i32
    return %c0_i32, %c0_i32_0 : i32, i32
  }
  func.func @transform_17(%arg0: i32, %arg1: i32) -> (i32, i32) {
    %c0_i32 = arith.constant 0 : i32
    %c0_i32_0 = arith.constant 0 : i32
    %c0_i32_1 = arith.constant 0 : i32
    return %c0_i32, %c0_i32_0 : i32, i32
  }
  func.func @transform_18(%arg0: i32, %arg1: i32) -> (i32, i32, i32) {
    %c0_i32 = arith.constant 0 : i32
    %c0_i32_0 = arith.constant 0 : i32
    return %arg1, %arg0, %c0_i32 : i32, i32, i32
  }
  func.func @transform_19(%arg0: i32, %arg1: i32) -> (i32, i32) {
    %c0_i32 = arith.constant 0 : i32
    %c0_i32_0 = arith.constant 0 : i32
    return %arg0, %c0_i32 : i32, i32
  }
}

</mosaic_0001>

<llo_original>
// kernel: tpu_custom_call.1
$region0: #{tpu_custom_call.1}
  #allocation0 [shape = 'u32[]', space=smem, size = 0x4, offset = 0x4, fixed_abs, tag = 'smem constant byte address 0x4 - core index']
  #allocation1 [shape = 'u32[144,128]{1,0:T(1,128)}', space=vmem, size = 0x12000, scoped, tag = 'internal scratch']
  #allocation2 [shape = 'f32[8,128]{1,0:T(8,128)}', space=vmem, size = 0x1000, scoped, tag = 'scratch operand']
  #allocation3 [shape = 'bf16[4,8,384]{2,1,0:T(8,128)(2,1)}', space=vmem, size = 0x6000, scoped, tag = 'scratch operand']
  #allocation4 [shape = 'f32[4,8,128]{2,1,0:T(8,128)}', space=vmem, size = 0x4000, scoped, tag = 'scratch operand']
  %s0 = inlined_call_operand.hbm [shape: f32[12,8,32], index: 0, kind: input, shape index: {}]
  %s1 = inlined_call_operand.hbm [shape: f32[8,128], index: 1, kind: input, shape index: {}]
  %s2 = inlined_call_operand.vmem [shape: f32[1,32], index: 2, kind: input, shape index: {}]
  %s3 = inlined_call_operand.vmem [shape: f32[1,32], index: 3, kind: input, shape index: {}]
  %s4 = inlined_call_operand.hbm [shape: bf16[32,128], index: 4, kind: input, shape index: {}]
  %s5 = inlined_call_operand.vmem [shape: f32[1,128], index: 5, kind: input, shape index: {}]
  %s6 = inlined_call_operand.vmem [shape: f32[1,128], index: 6, kind: input, shape index: {}]
  %s7 = inlined_call_operand.vmem [shape: f32[1,128], index: 7, kind: input, shape index: {}]
  %s8 = inlined_call_operand.hbm [shape: bf16[128,128], index: 8, kind: input, shape index: {}]
  %s9 = inlined_call_operand.vmem [shape: f32[1,128], index: 9, kind: input, shape index: {}]
  %s10 = inlined_call_operand.vmem [shape: f32[1,128], index: 10, kind: input, shape index: {}]
  %s11 = inlined_call_operand.vmem [shape: f32[1,128], index: 11, kind: input, shape index: {}]
  %s12 = inlined_call_operand.hbm [shape: bf16[128,384], index: 12, kind: input, shape index: {}]
  %s13 = inlined_call_operand.vmem [shape: f32[1,384], index: 13, kind: input, shape index: {}]
  %s14 = inlined_call_operand.hbm [shape: bf16[128,384], index: 14, kind: input, shape index: {}]
  %s15 = inlined_call_operand.vmem [shape: f32[1,384], index: 15, kind: input, shape index: {}]
  %s16 = inlined_call_operand.vmem [shape: f32[1,128], index: 16, kind: input, shape index: {}]
  %s17 = inlined_call_operand.vmem [shape: f32[1,128], index: 17, kind: input, shape index: {}]
  %s18 = inlined_call_operand.hbm [shape: f32[12,8,128], index: 18, kind: output, shape index: {0}]
  %s19 = inlined_call_operand.hbm [shape: f32[8,128], index: 19, kind: output, shape index: {1}]
  %20 = xla_tuple %s18, %s19
  %s21 = sld [smem:[#allocation0]]
  $region145: #{tpu_custom_call.1} parent=0
    _
  %s23 = ssub.s32 1, %s21
  %s24 = scalar_select 0, %s23, %s21
  $region1: #{tpu_custom_call.1} parent=0
    #allocation5 [shape = 'u8[32768]{0}', space=vmem, size = 0x8000, scoped, tag = 'input window, operand 0']
    #allocation6 [shape = 's32[2]{0}', space=sflag, size = 0x8, scoped, tag = 'scoped memory for tpu_custom_call.1']
    #allocation7 [shape = 's32[2]{0}', space=sflag, size = 0x8, scoped, tag = 'scoped memory for tpu_custom_call.1']
    #allocation8 [shape = 'u8[4096]{0}', space=vmem, size = 0x1000, scoped, tag = 'input window, operand 1, single buffered']
    #allocation9 [shape = 's32[1]{0}', space=sflag, size = 0x4, scoped, tag = 'scoped memory for tpu_custom_call.1']
    #allocation10 [shape = 'u8[8192]{0}', space=vmem, size = 0x2000, scoped, tag = 'input window, operand 4, single buffered']
    #allocation11 [shape = 'u8[32768]{0}', space=vmem, size = 0x8000, scoped, tag = 'input window, operand 8, single buffered']
    #allocation12 [shape = 's32[1]{0}', space=sflag, size = 0x4, scoped, tag = 'scoped memory for tpu_custom_call.1']
    #allocation13 [shape = 'u8[98304]{0}', space=vmem, size = 0x18000, scoped, tag = 'input window, operand 12, single buffered']
    #allocation14 [shape = 'u8[98304]{0}', space=vmem, size = 0x18000, scoped, tag = 'input window, operand 14, single buffered']
    #allocation15 [shape = 's32[1]{0}', space=sflag, size = 0x4, scoped, tag = 'scoped memory for tpu_custom_call.1']
    #allocation16 [shape = 'u8[32768]{0}', space=vmem, size = 0x8000, scoped, tag = 'output window, operand 0']
    #allocation17 [shape = 'u8[4096]{0}', space=vmem, size = 0x1000, scoped, tag = 'output window, operand 1, single buffered']
    #allocation18 [shape = 's32[1]{0}', space=sflag, size = 0x4, scoped, tag = 'scoped memory for tpu_custom_call.1']
    %25 = vsyncpa [#allocation6], 0
    %s26 = scalar_lea.sflag [#allocation6], 1
    %27 = vsyncpa %s26, 0
    %28 = vsyncpa [#allocation9], 0
    %29 = vsyncpa [#allocation12], 0
    %30 = vsyncpa [#allocation15], 0
    %31 = vsyncpa [#allocation7], 0
    %s32 = scalar_lea.sflag [#allocation7], 1
    %33 = vsyncpa %s32, 0
    %34 = vsyncpa [#allocation18], 0
    loop: start=0, step=1, limit=5
    $region2: #{tpu_custom_call.1} parent=1 // loop_pre_header
      _
    $region3: #{tpu_custom_call.1} parent=1 // loop_header
      %s36 = sphi 0, %s40
      %p37 = scmp.ge.s32.totalorder %s36, 5
      %s43 = sphi 0, %s55
      %s44 = sphi 0, %s51
      %s45 = sphi 0, %s43
      %s46 = sphi 0, %s44
      %s47 = sphi 0, %s45
      %s48 = sphi 0, %s46
      %s60 = sphi 0, %s62
      %s63 = sphi 0, %s60
      %s64 = sphi 0, %s63
      %s80 = sphi 0, %s64
      %s86 = sphi 0, %s88
      %s89 = sphi 0, %s86
      %s90 = sphi 0, %s89
      %s106 = sphi 0, %s90
      %s110 = sphi 0, %s110
      %s112 = sphi 0, %s110
      %s113 = sphi 0, %s112
      %s127 = sphi 0, %s113
      %s131 = sphi 0, %s131
      %s133 = sphi 0, %s131
      %s134 = sphi 0, %s133
      %s148 = sphi 0, %s134
      %s152 = sphi 0, %s152
      %s154 = sphi 0, %s152
      %s155 = sphi 0, %s154
      %s169 = sphi 0, %s155
      %s173 = sphi 0, %s173
      %s175 = sphi 0, %s173
      %s176 = sphi 0, %s175
      %s190 = sphi 0, %s176
      %s194 = sphi 0, %s194
      %s196 = sphi 0, %s194
      %s197 = sphi 0, %s196
      %s211 = sphi 0, %s197
      %s215 = sphi 0, %s215
      %s217 = sphi 0, %s215
      %s218 = sphi 0, %s217
      %s232 = sphi 0, %s218
      %s236 = sphi 0, %s236
      %s238 = sphi 0, %s236
      %s239 = sphi 0, %s238
      %s253 = sphi 0, %s239
      %s257 = sphi 0, %s257
      %s259 = sphi 0, %s257
      %s260 = sphi 0, %s259
      %s274 = sphi 0, %s260
      %s278 = sphi 0, %s278
      %s280 = sphi 0, %s278
      %s281 = sphi 0, %s280
      %s295 = sphi 0, %s281
      %s299 = sphi 0, %s299
      %s301 = sphi 0, %s299
      %s302 = sphi 0, %s301
      %s316 = sphi 0, %s302
      %s320 = sphi 0, %s320
      %s322 = sphi 0, %s320
      %s323 = sphi 0, %s322
      %s337 = sphi 0, %s323
      %s341 = sphi 0, %s341
      %s343 = sphi 0, %s341
      %s344 = sphi 0, %s343
      %s358 = sphi 0, %s344
      %s362 = sphi 0, %s362
      %s364 = sphi 0, %s362
      %s365 = sphi 0, %s364
      %s379 = sphi 0, %s365
      %s383 = sphi 0, %s383
      %s385 = sphi 0, %s383
      %s386 = sphi 0, %s385
      %s400 = sphi 0, %s386
      %s404 = sphi 0, %s404
      %s406 = sphi 0, %s404
      %s407 = sphi 0, %s406
      %s421 = sphi 0, %s407
      %s425 = sphi 0, %s425
      %s427 = sphi 0, %s425
      %s428 = sphi 0, %s427
      %s442 = sphi 0, %s428
      %s450 = sphi 0, %s452
      %s453 = sphi 0, %s450
      %s454 = sphi 0, %s453
      %s470 = sphi 0, %s454
      %s476 = sphi 0, %s478
      %s479 = sphi 0, %s476
      %s480 = sphi 0, %s479
      %s496 = sphi 0, %s480
    $region4: #{tpu_custom_call.1} parent=1 // loop_header_branch
      %39 = sbr.rel (%p37) target = $region8
    $region5: #{tpu_custom_call.1} parent=1 // loop_body
      %s41 = ssub.s32 %s36, 1
      %s42 = ssub.s32 %s36, 2
      %s49 = sadd.s32 1, %s44
      %p50 = scmp.ge.s32.totalorder %s49, 3
      %s51 = scalar_select %p50, 0, %s49
      %s52 = sadd.s32 1, %s43
      %s53 = scalar_select %p50, %s52, %s43
      %p54 = scmp.ge.s32.totalorder %s53, 1
      %s55 = scalar_select %p54, 0, %s53
      %s56 = ssub.s32 %s44, %s51
      %s57 = ssub.s32 %s43, %s55
      %s58 = sor.u32 %s56, %s57
      %p59 = scmp.eq.s32.totalorder %s58, 0
      %s61 = sadd.s32 %s60, 1
      %s62 = scalar_select %p59, %s60, %s61
      %p65 = pneg %p59
      %p66 = scmp.eq.s32.totalorder %s36, 2
      %p67 = por %p65, %p66
      %p68 = scmp.ne.s32.totalorder %s60, %s63
      %p69 = scmp.eq.s32.totalorder %s36, 0
      %p70 = por %p68, %p69
      %p71 = scmp.ne.s32.totalorder %s60, %s63
      %p72 = scmp.eq.s32.totalorder %s41, 2
      %p73 = por %p71, %p72
      %p74 = scmp.ne.s32.totalorder %s63, %s64
      %p75 = scmp.eq.s32.totalorder %s41, 0
      %p76 = por %p74, %p75
      %p77 = scmp.ne.s32.totalorder %s63, %s64
      %p78 = scmp.eq.s32.totalorder %s42, 2
      %p79 = por %p77, %p78
      %p81 = scmp.ne.s32.totalorder %s64, %s80
      %p82 = scmp.eq.s32.totalorder %s42, 0
      %p83 = por %p81, %p82
      %s84 = ssub.s32 %s43, %s55
      %p85 = scmp.eq.s32.totalorder %s84, 0
      %s87 = sadd.s32 %s86, 1
      %s88 = scalar_select %p85, %s86, %s87
      %p91 = pneg %p85
      %p92 = scmp.eq.s32.totalorder %s36, 2
      %p93 = por %p91, %p92
      %p94 = scmp.ne.s32.totalorder %s86, %s89
      %p95 = scmp.eq.s32.totalorder %s36, 0
      %p96 = por %p94, %p95
      %p97 = scmp.ne.s32.totalorder %s86, %s89
      %p98 = scmp.eq.s32.totalorder %s41, 2
      %p99 = por %p97, %p98
      %p100 = scmp.ne.s32.totalorder %s89, %s90
      %p101 = scmp.eq.s32.totalorder %s41, 0
      %p102 = por %p100, %p101
      %p103 = scmp.ne.s32.totalorder %s89, %s90
      %p104 = scmp.eq.s32.totalorder %s42, 2
      %p105 = por %p103, %p104
      %p107 = scmp.ne.s32.totalorder %s90, %s106
      %p108 = scmp.eq.s32.totalorder %s42, 0
      %p109 = por %p107, %p108
      %s111 = sadd.s32 %s110, 1
      %p114 = scmp.eq.s32.totalorder %s36, 2
      %p115 = scmp.ne.s32.totalorder %s110, %s112
      %p116 = scmp.eq.s32.totalorder %s36, 0
      %p117 = por %p115, %p116
      %p118 = scmp.ne.s32.totalorder %s110, %s112
      %p119 = scmp.eq.s32.totalorder %s41, 2
      %p120 = por %p118, %p119
      %p121 = scmp.ne.s32.totalorder %s112, %s113
      %p122 = scmp.eq.s32.totalorder %s41, 0
      %p123 = por %p121, %p122
      %p124 = scmp.ne.s32.totalorder %s112, %s113
      %p125 = scmp.eq.s32.totalorder %s42, 2
      %p126 = por %p124, %p125
      %p128 = scmp.ne.s32.totalorder %s113, %s127
      %p129 = scmp.eq.s32.totalorder %s42, 0
      %p130 = por %p128, %p129
      %s132 = sadd.s32 %s131, 1
      %p135 = scmp.eq.s32.totalorder %s36, 2
      %p136 = scmp.ne.s32.totalorder %s131, %s133
      %p137 = scmp.eq.s32.totalorder %s36, 0
      %p138 = por %p136, %p137
      %p139 = scmp.ne.s32.totalorder %s131, %s133
      %p140 = scmp.eq.s32.totalorder %s41, 2
      %p141 = por %p139, %p140
      %p142 = scmp.ne.s32.totalorder %s133, %s134
      %p143 = scmp.eq.s32.totalorder %s41, 0
      %p144 = por %p142, %p143
      %p145 = scmp.ne.s32.totalorder %s133, %s134
      %p146 = scmp.eq.s32.totalorder %s42, 2
      %p147 = por %p145, %p146
      %p149 = scmp.ne.s32.totalorder %s134, %s148
      %p150 = scmp.eq.s32.totalorder %s42, 0
      %p151 = por %p149, %p150
      %s153 = sadd.s32 %s152, 1
      %p156 = scmp.eq.s32.totalorder %s36, 2
      %p157 = scmp.ne.s32.totalorder %s152, %s154
      %p158 = scmp.eq.s32.totalorder %s36, 0
      %p159 = por %p157, %p158
      %p160 = scmp.ne.s32.totalorder %s152, %s154
      %p161 = scmp.eq.s32.totalorder %s41, 2
      %p162 = por %p160, %p161
      %p163 = scmp.ne.s32.totalorder %s154, %s155
      %p164 = scmp.eq.s32.totalorder %s41, 0
      %p165 = por %p163, %p164
      %p166 = scmp.ne.s32.totalorder %s154, %s155
      %p167 = scmp.eq.s32.totalorder %s42, 2
      %p168 = por %p166, %p167
      %p170 = scmp.ne.s32.totalorder %s155, %s169
      %p171 = scmp.eq.s32.totalorder %s42, 0
      %p172 = por %p170, %p171
      %s174 = sadd.s32 %s173, 1
      %p177 = scmp.eq.s32.totalorder %s36, 2
      %p178 = scmp.ne.s32.totalorder %s173, %s175
      %p179 = scmp.eq.s32.totalorder %s36, 0
      %p180 = por %p178, %p179
      %p181 = scmp.ne.s32.totalorder %s173, %s175
      %p182 = scmp.eq.s32.totalorder %s41, 2
      %p183 = por %p181, %p182
      %p184 = scmp.ne.s32.totalorder %s175, %s176
      %p185 = scmp.eq.s32.totalorder %s41, 0
      %p186 = por %p184, %p185
      %p187 = scmp.ne.s32.totalorder %s175, %s176
      %p188 = scmp.eq.s32.totalorder %s42, 2
      %p189 = por %p187, %p188
      %p191 = scmp.ne.s32.totalorder %s176, %s190
      %p192 = scmp.eq.s32.totalorder %s42, 0
      %p193 = por %p191, %p192
      %s195 = sadd.s32 %s194, 1
      %p198 = scmp.eq.s32.totalorder %s36, 2
      %p199 = scmp.ne.s32.totalorder %s194, %s196
      %p200 = scmp.eq.s32.totalorder %s36, 0
      %p201 = por %p199, %p200
      %p202 = scmp.ne.s32.totalorder %s194, %s196
      %p203 = scmp.eq.s32.totalorder %s41, 2
      %p204 = por %p202, %p203
      %p205 = scmp.ne.s32.totalorder %s196, %s197
      %p206 = scmp.eq.s32.totalorder %s41, 0
      %p207 = por %p205, %p206
      %p208 = scmp.ne.s32.totalorder %s196, %s197
      %p209 = scmp.eq.s32.totalorder %s42, 2
      %p210 = por %p208, %p209
      %p212 = scmp.ne.s32.totalorder %s197, %s211
      %p213 = scmp.eq.s32.totalorder %s42, 0
      %p214 = por %p212, %p213
      %s216 = sadd.s32 %s215, 1
      %p219 = scmp.eq.s32.totalorder %s36, 2
      %p220 = scmp.ne.s32.totalorder %s215, %s217
      %p221 = scmp.eq.s32.totalorder %s36, 0
      %p222 = por %p220, %p221
      %p223 = scmp.ne.s32.totalorder %s215, %s217
      %p224 = scmp.eq.s32.totalorder %s41, 2
      %p225 = por %p223, %p224
      %p226 = scmp.ne.s32.totalorder %s217, %s218
      %p227 = scmp.eq.s32.totalorder %s41, 0
      %p228 = por %p226, %p227
      %p229 = scmp.ne.s32.totalorder %s217, %s218
      %p230 = scmp.eq.s32.totalorder %s42, 2
      %p231 = por %p229, %p230
      %p233 = scmp.ne.s32.totalorder %s218, %s232
      %p234 = scmp.eq.s32.totalorder %s42, 0
      %p235 = por %p233, %p234
      %s237 = sadd.s32 %s236, 1
      %p240 = scmp.eq.s32.totalorder %s36, 2
      %p241 = scmp.ne.s32.totalorder %s236, %s238
      %p242 = scmp.eq.s32.totalorder %s36, 0
      %p243 = por %p241, %p242
      %p244 = scmp.ne.s32.totalorder %s236, %s238
      %p245 = scmp.eq.s32.totalorder %s41, 2
      %p246 = por %p244, %p245
      %p247 = scmp.ne.s32.totalorder %s238, %s239
      %p248 = scmp.eq.s32.totalorder %s41, 0
      %p249 = por %p247, %p248
      %p250 = scmp.ne.s32.totalorder %s238, %s239
      %p251 = scmp.eq.s32.totalorder %s42, 2
      %p252 = por %p250, %p251
      %p254 = scmp.ne.s32.totalorder %s239, %s253
      %p255 = scmp.eq.s32.totalorder %s42, 0
      %p256 = por %p254, %p255
      %s258 = sadd.s32 %s257, 1
      %p261 = scmp.eq.s32.totalorder %s36, 2
      %p262 = scmp.ne.s32.totalorder %s257, %s259
      %p263 = scmp.eq.s32.totalorder %s36, 0
      %p264 = por %p262, %p263
      %p265 = scmp.ne.s32.totalorder %s257, %s259
      %p266 = scmp.eq.s32.totalorder %s41, 2
      %p267 = por %p265, %p266
      %p268 = scmp.ne.s32.totalorder %s259, %s260
      %p269 = scmp.eq.s32.totalorder %s41, 0
      %p270 = por %p268, %p269
      %p271 = scmp.ne.s32.totalorder %s259, %s260
      %p272 = scmp.eq.s32.totalorder %s42, 2
      %p273 = por %p271, %p272
      %p275 = scmp.ne.s32.totalorder %s260, %s274
      %p276 = scmp.eq.s32.totalorder %s42, 0
      %p277 = por %p275, %p276
      %s279 = sadd.s32 %s278, 1
      %p282 = scmp.eq.s32.totalorder %s36, 2
      %p283 = scmp.ne.s32.totalorder %s278, %s280
      %p284 = scmp.eq.s32.totalorder %s36, 0
      %p285 = por %p283, %p284
      %p286 = scmp.ne.s32.totalorder %s278, %s280
      %p287 = scmp.eq.s32.totalorder %s41, 2
      %p288 = por %p286, %p287
      %p289 = scmp.ne.s32.totalorder %s280, %s281
      %p290 = scmp.eq.s32.totalorder %s41, 0
      %p291 = por %p289, %p290
      %p292 = scmp.ne.s32.totalorder %s280, %s281
      %p293 = scmp.eq.s32.totalorder %s42, 2
      %p294 = por %p292, %p293
      %p296 = scmp.ne.s32.totalorder %s281, %s295
      %p297 = scmp.eq.s32.totalorder %s42, 0
      %p298 = por %p296, %p297
      %s300 = sadd.s32 %s299, 1
      %p303 = scmp.eq.s32.totalorder %s36, 2
      %p304 = scmp.ne.s32.totalorder %s299, %s301
      %p305 = scmp.eq.s32.totalorder %s36, 0
      %p306 = por %p304, %p305
      %p307 = scmp.ne.s32.totalorder %s299, %s301
      %p308 = scmp.eq.s32.totalorder %s41, 2
      %p309 = por %p307, %p308
      %p310 = scmp.ne.s32.totalorder %s301, %s302
      %p311 = scmp.eq.s32.totalorder %s41, 0
      %p312 = por %p310, %p311
      %p313 = scmp.ne.s32.totalorder %s301, %s302
      %p314 = scmp.eq.s32.totalorder %s42, 2
      %p315 = por %p313, %p314
      %p317 = scmp.ne.s32.totalorder %s302, %s316
      %p318 = scmp.eq.s32.totalorder %s42, 0
      %p319 = por %p317, %p318
      %s321 = sadd.s32 %s320, 1
      %p324 = scmp.eq.s32.totalorder %s36, 2
      %p325 = scmp.ne.s32.totalorder %s320, %s322
      %p326 = scmp.eq.s32.totalorder %s36, 0
      %p327 = por %p325, %p326
      %p328 = scmp.ne.s32.totalorder %s320, %s322
      %p329 = scmp.eq.s32.totalorder %s41, 2
      %p330 = por %p328, %p329
      %p331 = scmp.ne.s32.totalorder %s322, %s323
      %p332 = scmp.eq.s32.totalorder %s41, 0
      %p333 = por %p331, %p332
      %p334 = scmp.ne.s32.totalorder %s322, %s323
      %p335 = scmp.eq.s32.totalorder %s42, 2
      %p336 = por %p334, %p335
      %p338 = scmp.ne.s32.totalorder %s323, %s337
      %p339 = scmp.eq.s32.totalorder %s42, 0
      %p340 = por %p338, %p339
      %s342 = sadd.s32 %s341, 1
      %p345 = scmp.eq.s32.totalorder %s36, 2
      %p346 = scmp.ne.s32.totalorder %s341, %s343
      %p347 = scmp.eq.s32.totalorder %s36, 0
      %p348 = por %p346, %p347
      %p349 = scmp.ne.s32.totalorder %s341, %s343
      %p350 = scmp.eq.s32.totalorder %s41, 2
      %p351 = por %p349, %p350
      %p352 = scmp.ne.s32.totalorder %s343, %s344
      %p353 = scmp.eq.s32.totalorder %s41, 0
      %p354 = por %p352, %p353
      %p355 = scmp.ne.s32.totalorder %s343, %s344
      %p356 = scmp.eq.s32.totalorder %s42, 2
      %p357 = por %p355, %p356
      %p359 = scmp.ne.s32.totalorder %s344, %s358
      %p360 = scmp.eq.s32.totalorder %s42, 0
      %p361 = por %p359, %p360
      %s363 = sadd.s32 %s362, 1
      %p366 = scmp.eq.s32.totalorder %s36, 2
      %p367 = scmp.ne.s32.totalorder %s362, %s364
      %p368 = scmp.eq.s32.totalorder %s36, 0
      %p369 = por %p367, %p368
      %p370 = scmp.ne.s32.totalorder %s362, %s364
      %p371 = scmp.eq.s32.totalorder %s41, 2
      %p372 = por %p370, %p371
      %p373 = scmp.ne.s32.totalorder %s364, %s365
      %p374 = scmp.eq.s32.totalorder %s41, 0
      %p375 = por %p373, %p374
      %p376 = scmp.ne.s32.totalorder %s364, %s365
      %p377 = scmp.eq.s32.totalorder %s42, 2
      %p378 = por %p376, %p377
      %p380 = scmp.ne.s32.totalorder %s365, %s379
      %p381 = scmp.eq.s32.totalorder %s42, 0
      %p382 = por %p380, %p381
      %s384 = sadd.s32 %s383, 1
      %p387 = scmp.eq.s32.totalorder %s36, 2
      %p388 = scmp.ne.s32.totalorder %s383, %s385
      %p389 = scmp.eq.s32.totalorder %s36, 0
      %p390 = por %p388, %p389
      %p391 = scmp.ne.s32.totalorder %s383, %s385
      %p392 = scmp.eq.s32.totalorder %s41, 2
      %p393 = por %p391, %p392
      %p394 = scmp.ne.s32.totalorder %s385, %s386
      %p395 = scmp.eq.s32.totalorder %s41, 0
      %p396 = por %p394, %p395
      %p397 = scmp.ne.s32.totalorder %s385, %s386
      %p398 = scmp.eq.s32.totalorder %s42, 2
      %p399 = por %p397, %p398
      %p401 = scmp.ne.s32.totalorder %s386, %s400
      %p402 = scmp.eq.s32.totalorder %s42, 0
      %p403 = por %p401, %p402
      %s405 = sadd.s32 %s404, 1
      %p408 = scmp.eq.s32.totalorder %s36, 2
      %p409 = scmp.ne.s32.totalorder %s404, %s406
      %p410 = scmp.eq.s32.totalorder %s36, 0
      %p411 = por %p409, %p410
      %p412 = scmp.ne.s32.totalorder %s404, %s406
      %p413 = scmp.eq.s32.totalorder %s41, 2
      %p414 = por %p412, %p413
      %p415 = scmp.ne.s32.totalorder %s406, %s407
      %p416 = scmp.eq.s32.totalorder %s41, 0
      %p417 = por %p415, %p416
      %p418 = scmp.ne.s32.totalorder %s406, %s407
      %p419 = scmp.eq.s32.totalorder %s42, 2
      %p420 = por %p418, %p419
      %p422 = scmp.ne.s32.totalorder %s407, %s421
      %p423 = scmp.eq.s32.totalorder %s42, 0
      %p424 = por %p422, %p423
      %s426 = sadd.s32 %s425, 1
      %p429 = scmp.eq.s32.totalorder %s36, 2
      %p430 = scmp.ne.s32.totalorder %s425, %s427
      %p431 = scmp.eq.s32.totalorder %s36, 0
      %p432 = por %p430, %p431
      %p433 = scmp.ne.s32.totalorder %s425, %s427
      %p434 = scmp.eq.s32.totalorder %s41, 2
      %p435 = por %p433, %p434
      %p436 = scmp.ne.s32.totalorder %s427, %s428
      %p437 = scmp.eq.s32.totalorder %s41, 0
      %p438 = por %p436, %p437
      %p439 = scmp.ne.s32.totalorder %s427, %s428
      %p440 = scmp.eq.s32.totalorder %s42, 2
      %p441 = por %p439, %p440
      %p443 = scmp.ne.s32.totalorder %s428, %s442
      %p444 = scmp.eq.s32.totalorder %s42, 0
      %p445 = por %p443, %p444
      %s446 = ssub.s32 %s44, %s51
      %s447 = ssub.s32 %s43, %s55
      %s448 = sor.u32 %s446, %s447
      %p449 = scmp.eq.s32.totalorder %s448, 0
      %s451 = sadd.s32 %s450, 1
      %s452 = scalar_select %p449, %s450, %s451
      %p455 = pneg %p449
      %p456 = scmp.eq.s32.totalorder %s36, 2
      %p457 = por %p455, %p456
      %p458 = scmp.ne.s32.totalorder %s450, %s453
      %p459 = scmp.eq.s32.totalorder %s36, 0
      %p460 = por %p458, %p459
      %p461 = scmp.ne.s32.totalorder %s450, %s453
      %p462 = scmp.eq.s32.totalorder %s41, 2
      %p463 = por %p461, %p462
      %p464 = scmp.ne.s32.totalorder %s453, %s454
      %p465 = scmp.eq.s32.totalorder %s41, 0
      %p466 = por %p464, %p465
      %p467 = scmp.ne.s32.totalorder %s453, %s454
      %p468 = scmp.eq.s32.totalorder %s42, 2
      %p469 = por %p467, %p468
      %p471 = scmp.ne.s32.totalorder %s454, %s470
      %p472 = scmp.eq.s32.totalorder %s42, 0
      %p473 = por %p471, %p472
      %s474 = ssub.s32 %s43, %s55
      %p475 = scmp.eq.s32.totalorder %s474, 0
      %s477 = sadd.s32 %s476, 1
      %s478 = scalar_select %p475, %s476, %s477
      %p481 = pneg %p475
      %p482 = scmp.eq.s32.totalorder %s36, 2
      %p483 = por %p481, %p482
      %p484 = scmp.ne.s32.totalorder %s476, %s479
      %p485 = scmp.eq.s32.totalorder %s36, 0
      %p486 = por %p484, %p485
      %p487 = scmp.ne.s32.totalorder %s476, %s479
      %p488 = scmp.eq.s32.totalorder %s41, 2
      %p489 = por %p487, %p488
      %p490 = scmp.ne.s32.totalorder %s479, %s480
      %p491 = scmp.eq.s32.totalorder %s41, 0
      %p492 = por %p490, %p491
      %p493 = scmp.ne.s32.totalorder %s479, %s480
      %p494 = scmp.eq.s32.totalorder %s42, 2
      %p495 = por %p493, %p494
      %p497 = scmp.ne.s32.totalorder %s480, %s496
      %p498 = scmp.eq.s32.totalorder %s42, 0
      %p499 = por %p497, %p498
      %p500 = scmp.le.s32.totalorder 1, %s36
      %p501 = scmp.lt.s32.totalorder %s36, 4
      %p502 = pnand %p500, %p501
      %p503 = pneg %p502
      // Predicated region
      $region9: #{tpu_custom_call.1} parent=5 // pred_check
        _
      $region10: #{tpu_custom_call.1} parent=5 // pred_check_branch
        %505 = sbr.rel (%p502) target = $region12
      $region11: #{tpu_custom_call.1} parent=5 // pred_region
        %s506 = ssub.s32 %s36, 1
        // Predicated region
        $region13: #{tpu_custom_call.1} parent=11 // pred_check
          %p507 = pneg %p102
        $region14: #{tpu_custom_call.1} parent=11 // pred_check_branch
          %509 = sbr.rel (%p507) target = $region16
        $region15: #{tpu_custom_call.1} parent=11 // pred_region
          %s511 = ssub.s32 128, 128
          %512 = vsyncadd [#allocation9], %s511
          %s513 = smul.addr %s45, 128
          %s514 = scalar_lea.hbm %s1, %s513
          %s516 = sshll.u32 [#allocation8], 4
          %s517 = int_to_ptr.vmem [resolvable:$true] %s516
          %519 = dma.hbm_to_vmem [thread:$0]  %s514, 128, %s517, [#allocation9]
        $region16: #{tpu_custom_call.1} parent=11 // pred_fallthru
          _
        // Predicated region
        $region17: #{tpu_custom_call.1} parent=11 // pred_check
          %p520 = pneg %p123
        $region18: #{tpu_custom_call.1} parent=11 // pred_check_branch
          %522 = sbr.rel (%p520) target = $region20
        $region19: #{tpu_custom_call.1} parent=11 // pred_region
          _
        $region20: #{tpu_custom_call.1} parent=11 // pred_fallthru
          _
        // Predicated region
        $region21: #{tpu_custom_call.1} parent=11 // pred_check
          %p523 = pneg %p144
        $region22: #{tpu_custom_call.1} parent=11 // pred_check_branch
          %525 = sbr.rel (%p523) target = $region24
        $region23: #{tpu_custom_call.1} parent=11 // pred_region
          _
        $region24: #{tpu_custom_call.1} parent=11 // pred_fallthru
          _
        // Predicated region
        $region25: #{tpu_custom_call.1} parent=11 // pred_check
          %p526 = pneg %p165
        $region26: #{tpu_custom_call.1} parent=11 // pred_check_branch
          %528 = sbr.rel (%p526) target = $region28
        $region27: #{tpu_custom_call.1} parent=11 // pred_region
          %s530 = ssub.s32 256, 256
          %531 = vsyncadd [#allocation9], %s530
          %s532 = sshll.u32 [#allocation10], 4
          %s533 = int_to_ptr.vmem [resolvable:$true] %s532
          %538 = dma.hbm_to_vmem [thread:$0]  %s4, 256, %s533, [#allocation9], 64, 64, 4
        $region28: #{tpu_custom_call.1} parent=11 // pred_fallthru
          _
        // Predicated region
        $region29: #{tpu_custom_call.1} parent=11 // pred_check
          %p539 = pneg %p186
        $region30: #{tpu_custom_call.1} parent=11 // pred_check_branch
          %541 = sbr.rel (%p539) target = $region32
        $region31: #{tpu_custom_call.1} parent=11 // pred_region
          _
        $region32: #{tpu_custom_call.1} parent=11 // pred_fallthru
          _
        // Predicated region
        $region33: #{tpu_custom_call.1} parent=11 // pred_check
          %p542 = pneg %p207
        $region34: #{tpu_custom_call.1} parent=11 // pred_check_branch
          %544 = sbr.rel (%p542) target = $region36
        $region35: #{tpu_custom_call.1} parent=11 // pred_region
          _
        $region36: #{tpu_custom_call.1} parent=11 // pred_fallthru
          _
        // Predicated region
        $region37: #{tpu_custom_call.1} parent=11 // pred_check
          %p545 = pneg %p228
        $region38: #{tpu_custom_call.1} parent=11 // pred_check_branch
          %547 = sbr.rel (%p545) target = $region40
        $region39: #{tpu_custom_call.1} parent=11 // pred_region
          _
        $region40: #{tpu_custom_call.1} parent=11 // pred_fallthru
          _
        // Predicated region
        $region41: #{tpu_custom_call.1} parent=11 // pred_check
          %p548 = pneg %p249
        $region42: #{tpu_custom_call.1} parent=11 // pred_check_branch
          %550 = sbr.rel (%p548) target = $region44
        $region43: #{tpu_custom_call.1} parent=11 // pred_region
          %s552 = ssub.s32 1024, 1024
          %553 = vsyncadd [#allocation12], %s552
          %s554 = sshll.u32 [#allocation11], 4
          %s555 = int_to_ptr.vmem [resolvable:$true] %s554
          %560 = dma.hbm_to_vmem [thread:$0]  %s8, 1024, %s555, [#allocation12], 64, 64, 4
        $region44: #{tpu_custom_call.1} parent=11 // pred_fallthru
          _
        // Predicated region
        $region45: #{tpu_custom_call.1} parent=11 // pred_check
          %p561 = pneg %p270
        $region46: #{tpu_custom_call.1} parent=11 // pred_check_branch
          %563 = sbr.rel (%p561) target = $region48
        $region47: #{tpu_custom_call.1} parent=11 // pred_region
          _
        $region48: #{tpu_custom_call.1} parent=11 // pred_fallthru
          _
        // Predicated region
        $region49: #{tpu_custom_call.1} parent=11 // pred_check
          %p564 = pneg %p291
        $region50: #{tpu_custom_call.1} parent=11 // pred_check_branch
          %566 = sbr.rel (%p564) target = $region52
        $region51: #{tpu_custom_call.1} parent=11 // pred_region
          _
        $region52: #{tpu_custom_call.1} parent=11 // pred_fallthru
          _
        // Predicated region
        $region53: #{tpu_custom_call.1} parent=11 // pred_check
          %p567 = pneg %p312
        $region54: #{tpu_custom_call.1} parent=11 // pred_check_branch
          %569 = sbr.rel (%p567) target = $region56
        $region55: #{tpu_custom_call.1} parent=11 // pred_region
          _
        $region56: #{tpu_custom_call.1} parent=11 // pred_fallthru
          _
        // Predicated region
        $region57: #{tpu_custom_call.1} parent=11 // pred_check
          %p570 = pneg %p333
        $region58: #{tpu_custom_call.1} parent=11 // pred_check_branch
          %572 = sbr.rel (%p570) target = $region60
        $region59: #{tpu_custom_call.1} parent=11 // pred_region
          %s574 = ssub.s32 3072, 3072
          %575 = vsyncadd [#allocation12], %s574
          %s576 = sshll.u32 [#allocation13], 4
          %s577 = int_to_ptr.vmem [resolvable:$true] %s576
          %582 = dma.hbm_to_vmem [thread:$0]  %s12, 3072, %s577, [#allocation12], 192, 192, 12
        $region60: #{tpu_custom_call.1} parent=11 // pred_fallthru
          _
        // Predicated region
        $region61: #{tpu_custom_call.1} parent=11 // pred_check
          %p583 = pneg %p354
        $region62: #{tpu_custom_call.1} parent=11 // pred_check_branch
          %585 = sbr.rel (%p583) target = $region64
        $region63: #{tpu_custom_call.1} parent=11 // pred_region
          _
        $region64: #{tpu_custom_call.1} parent=11 // pred_fallthru
          _
        // Predicated region
        $region65: #{tpu_custom_call.1} parent=11 // pred_check
          %p586 = pneg %p375
        $region66: #{tpu_custom_call.1} parent=11 // pred_check_branch
          %588 = sbr.rel (%p586) target = $region68
        $region67: #{tpu_custom_call.1} parent=11 // pred_region
          %s590 = ssub.s32 3072, 3072
          %591 = vsyncadd [#allocation15], %s590
          %s592 = sshll.u32 [#allocation14], 4
          %s593 = int_to_ptr.vmem [resolvable:$true] %s592
          %598 = dma.hbm_to_vmem [thread:$0]  %s14, 3072, %s593, [#allocation15], 192, 192, 12
        $region68: #{tpu_custom_call.1} parent=11 // pred_fallthru
          _
        // Predicated region
        $region69: #{tpu_custom_call.1} parent=11 // pred_check
          %p599 = pneg %p396
        $region70: #{tpu_custom_call.1} parent=11 // pred_check_branch
          %601 = sbr.rel (%p599) target = $region72
        $region71: #{tpu_custom_call.1} parent=11 // pred_region
          _
        $region72: #{tpu_custom_call.1} parent=11 // pred_fallthru
          _
        // Predicated region
        $region73: #{tpu_custom_call.1} parent=11 // pred_check
          %p602 = pneg %p417
        $region74: #{tpu_custom_call.1} parent=11 // pred_check_branch
          %604 = sbr.rel (%p602) target = $region76
        $region75: #{tpu_custom_call.1} parent=11 // pred_region
          _
        $region76: #{tpu_custom_call.1} parent=11 // pred_fallthru
          _
        // Predicated region
        $region77: #{tpu_custom_call.1} parent=11 // pred_check
          %p605 = pneg %p438
        $region78: #{tpu_custom_call.1} parent=11 // pred_check_branch
          %607 = sbr.rel (%p605) target = $region80
        $region79: #{tpu_custom_call.1} parent=11 // pred_region
          _
        $region80: #{tpu_custom_call.1} parent=11 // pred_fallthru
          _
      $region12: #{tpu_custom_call.1} parent=5 // pred_fallthru
        _
      %p608 = scmp.lt.s32.totalorder %s36, 3
      // Predicated region
      $region81: #{tpu_custom_call.1} parent=5 // pred_check
        %p609 = pneg %p608
      $region82: #{tpu_custom_call.1} parent=5 // pred_check_branch
        %611 = sbr.rel (%p609) target = $region84
      $region83: #{tpu_custom_call.1} parent=5 // pred_region
        // Predicated region
        $region85: #{tpu_custom_call.1} parent=83 // pred_check
          %p612 = pneg %p70
        $region86: #{tpu_custom_call.1} parent=83 // pred_check_branch
          %614 = sbr.rel (%p612) target = $region88
        $region87: #{tpu_custom_call.1} parent=83 // pred_region
          %s615 = sand.u32 %s60, 1
          %s616 = scalar_lea.sflag [#allocation6], %s615
          %s617 = sand.u32 %s60, 1
          %s618 = smul.addr %s617, 32
          %s619 = scalar_lea.vmem [#allocation5], %s618
          %s620 = smul.u32 4, %s44
          %s622 = ssub.s32 512, 512
          %623 = vsyncadd %s616, %s622
          %s624 = sadd.s32 %s43, %s620
          %s625 = smul.addr %s624, 128
          %s626 = scalar_lea.hbm %s0, %s625
          %s627 = sshll.u32 %s619, 4
          %s628 = int_to_ptr.vmem [resolvable:$true] %s627
          %633 = dma.hbm_to_vmem [thread:$0]  %s626, 512, %s628, %s616, 128, 128, 8
        $region88: #{tpu_custom_call.1} parent=83 // pred_fallthru
          _
      $region84: #{tpu_custom_call.1} parent=5 // pred_fallthru
        _
      %p634 = scmp.le.s32.totalorder 1, %s36
      %p635 = scmp.lt.s32.totalorder %s36, 4
      %p636 = pnand %p634, %p635
      %p637 = pneg %p636
      // Predicated region
      $region89: #{tpu_custom_call.1} parent=5 // pred_check
        _
      $region90: #{tpu_custom_call.1} parent=5 // pred_check_branch
        %639 = sbr.rel (%p636) target = $region92
      $region91: #{tpu_custom_call.1} parent=5 // pred_region
        %s640 = ssub.s32 %s36, 1
        %s641 = sand.u32 %s63, 1
        %s642 = scalar_lea.sflag [#allocation6], %s641
        %s643 = sand.u32 %s63, 1
        %s644 = smul.addr %s643, 32
        %s645 = scalar_lea.vmem [#allocation5], %s644
        // Predicated region
        $region93: #{tpu_custom_call.1} parent=91 // pred_check
          %p646 = pneg %p76
        $region94: #{tpu_custom_call.1} parent=91 // pred_check_branch
          %648 = sbr.rel (%p646) target = $region96
        $region95: #{tpu_custom_call.1} parent=91 // pred_region
          %649 = dma.done %s642, 512
        $region96: #{tpu_custom_call.1} parent=91 // pred_fallthru
          _
        // Predicated region
        $region97: #{tpu_custom_call.1} parent=91 // pred_check
          %p650 = pneg %p102
        $region98: #{tpu_custom_call.1} parent=91 // pred_check_branch
          %652 = sbr.rel (%p650) target = $region100
        $region99: #{tpu_custom_call.1} parent=91 // pred_region
          %653 = dma.done [#allocation9], 128
        $region100: #{tpu_custom_call.1} parent=91 // pred_fallthru
          _
        // Predicated region
        $region101: #{tpu_custom_call.1} parent=91 // pred_check
          %p654 = pneg %p165
        $region102: #{tpu_custom_call.1} parent=91 // pred_check_branch
          %656 = sbr.rel (%p654) target = $region104
        $region103: #{tpu_custom_call.1} parent=91 // pred_region
          %657 = dma.done [#allocation9], 256
        $region104: #{tpu_custom_call.1} parent=91 // pred_fallthru
          _
        // Predicated region
        $region105: #{tpu_custom_call.1} parent=91 // pred_check
          %p658 = pneg %p249
        $region106: #{tpu_custom_call.1} parent=91 // pred_check_branch
          %660 = sbr.rel (%p658) target = $region108
        $region107: #{tpu_custom_call.1} parent=91 // pred_region
          %661 = dma.done [#allocation12], 1024
        $region108: #{tpu_custom_call.1} parent=91 // pred_fallthru
          _
        // Predicated region
        $region109: #{tpu_custom_call.1} parent=91 // pred_check
          %p662 = pneg %p333
        $region110: #{tpu_custom_call.1} parent=91 // pred_check_branch
          %664 = sbr.rel (%p662) target = $region112
        $region111: #{tpu_custom_call.1} parent=91 // pred_region
          %665 = dma.done [#allocation12], 3072
        $region112: #{tpu_custom_call.1} parent=91 // pred_fallthru
          _
        // Predicated region
        $region113: #{tpu_custom_call.1} parent=91 // pred_check
          %p666 = pneg %p375
        $region114: #{tpu_custom_call.1} parent=91 // pred_check_branch
          %668 = sbr.rel (%p666) target = $region116
        $region115: #{tpu_custom_call.1} parent=91 // pred_region
          %669 = dma.done [#allocation15], 3072
        $region116: #{tpu_custom_call.1} parent=91 // pred_fallthru
          _
        %s670 = sand.u32 %s63, 1
        %s671 = scalar_lea.sflag [#allocation6], %s670
        %s672 = sand.u32 %s63, 1
        %s673 = smul.addr %s672, 32
        %s674 = scalar_lea.vmem [#allocation5], %s673
        %p675 = pneg %p76
        %p676 = pneg %p73
        %p677 = pneg %p102
        %p678 = pneg %p99
        %p679 = pneg %p123
        %p680 = pneg %p120
        %p681 = pneg %p144
        %p682 = pneg %p141
        %p683 = pneg %p165
        %p684 = pneg %p162
        %p685 = pneg %p186
        %p686 = pneg %p183
        %p687 = pneg %p207
        %p688 = pneg %p204
        %p689 = pneg %p228
        %p690 = pneg %p225
        %p691 = pneg %p249
        %p692 = pneg %p246
        %p693 = pneg %p270
        %p694 = pneg %p267
        %p695 = pneg %p291
        %p696 = pneg %p288
        %p697 = pneg %p312
        %p698 = pneg %p309
        %p699 = pneg %p333
        %p700 = pneg %p330
        %p701 = pneg %p354
        %p702 = pneg %p351
        %p703 = pneg %p375
        %p704 = pneg %p372
        %p705 = pneg %p396
        %p706 = pneg %p393
        %p707 = pneg %p417
        %p708 = pneg %p414
        %p709 = pneg %p438
        %p710 = pneg %p435
        %p711 = pneg %p466
        %p712 = pneg %p463
        %s713 = sand.u32 %s453, 1
        %s714 = scalar_lea.sflag [#allocation7], %s713
        %s715 = sand.u32 %s453, 1
        %s716 = smul.addr %s715, 32
        %s717 = scalar_lea.vmem [#allocation16], %s716
        %p718 = pneg %p492
        %p719 = pneg %p489
        %s720 = smul.u32 4, %s46
        %s721 = smul.u32 4, %s46
        %p723 = scmp.eq.s32.totalorder %s46, 0
        // Predicated region
        $region117: #{tpu_custom_call.1} parent=91 // pred_check
          %p724 = pneg %p723
        $region118: #{tpu_custom_call.1} parent=91 // pred_check_branch
          %726 = sbr.rel (%p724) target = $region120
        $region119: #{tpu_custom_call.1} parent=91 // pred_region
          %v727 = vld [vmem:[#allocation8] sm:$0xff]
          %728 = vst [vmem:[#allocation2] sm:$0xff] %v727
        $region120: #{tpu_custom_call.1} parent=91 // pred_fallthru
          _
        %v729 = vld [vmem:[%s645] sm:$0xff]
        %v730 = vld [vmem:[%s645 + $0x8] sm:$0xff]
        %v731 = vld [vmem:[%s645 + $0x10] sm:$0xff]
        %v732 = vld [vmem:[%s645 + $0x18] sm:$0xff]
        %v733 = vld [vmem:[%s2] sm:$0x1]
        %v734 = vld [vmem:[%s3] sm:$0x1]
        %vm735 = vcmask 261120
        %v736 = vsel %vm735, %v729, 0.0
        %737 = vadd.xlane.f32.xlu0 %v736
        %v738 = vpop.xlane.xlu0 %737
        %v739 = vsel %vm735, %v730, 0.0
        %740 = vadd.xlane.f32.xlu0 %v739
        %v741 = vpop.xlane.xlu0 %740
        %v742 = vsel %vm735, %v731, 0.0
        %743 = vadd.xlane.f32.xlu0 %v742
        %v744 = vpop.xlane.xlu0 %743
        %v745 = vsel %vm735, %v732, 0.0
        %746 = vadd.xlane.f32.xlu0 %v745
        %v747 = vpop.xlane.xlu0 %746
        %v748 = vmul.f32 %v738, 0.03125
        %v749 = vmul.f32 %v741, 0.03125
        %v750 = vmul.f32 %v744, 0.03125
        %v751 = vmul.f32 %v747, 0.03125
        %v752 = vmul.f32 %v729, %v729
        %v753 = vmul.f32 %v730, %v730
        %v754 = vmul.f32 %v731, %v731
        %v755 = vmul.f32 %v732, %v732
        %v756 = vsel %vm735, %v752, 0.0
        %757 = vadd.xlane.f32.xlu0 %v756
        %v758 = vpop.xlane.xlu0 %757
        %v759 = vsel %vm735, %v753, 0.0
        %760 = vadd.xlane.f32.xlu0 %v759
        %v761 = vpop.xlane.xlu0 %760
        %v762 = vsel %vm735, %v754, 0.0
        %763 = vadd.xlane.f32.xlu0 %v762
        %v764 = vpop.xlane.xlu0 %763
        %v765 = vsel %vm735, %v755, 0.0
        %766 = vadd.xlane.f32.xlu0 %v765
        %v767 = vpop.xlane.xlu0 %766
        %v768 = vmul.f32 %v758, 0.03125
        %v769 = vmul.f32 %v761, 0.03125
        %v770 = vmul.f32 %v764, 0.03125
        %v771 = vmul.f32 %v767, 0.03125
        %v772 = vmul.f32 %v748, %v748
        %v773 = vmul.f32 %v749, %v749
        %v774 = vmul.f32 %v750, %v750
        %v775 = vmul.f32 %v751, %v751
        %v776 = vsub.f32 %v768, %v772
        %v777 = vsub.f32 %v769, %v773
        %v778 = vsub.f32 %v770, %v774
        %v779 = vsub.f32 %v771, %v775
        %v780 = vmax.f32 %v776, 0.0
        %v781 = vmax.f32 %v777, 0.0
        %v782 = vmax.f32 %v778, 0.0
        %v783 = vmax.f32 %v779, 0.0
        %v784 = vsub.f32 %v729, %v748
        %v785 = vsub.f32 %v730, %v749
        %v786 = vsub.f32 %v731, %v750
        %v787 = vsub.f32 %v732, %v751
        %v788 = vadd.f32 %v780, 1e-05
        %v789 = vadd.f32 %v781, 1e-05
        %v790 = vadd.f32 %v782, 1e-05
        %v791 = vadd.f32 %v783, 1e-05
        %v792 = vrsqrt.pop %v788
        %v793 = vrsqrt.pop %v789
        %v794 = vrsqrt.pop %v790
        %v795 = vrsqrt.pop %v791
        %v796 = vmul.f32 %v784, %v792
        %v797 = vmul.f32 %v785, %v793
        %v798 = vmul.f32 %v786, %v794
        %v799 = vmul.f32 %v787, %v795
        %v801 = vlaneseq
        %v802 = vshrl.u32 %v801, 7
        %v803 = vsub.s32 0, %v802
        %v804 = vrot.slane %v733, %v803
        %v806 = vmul.f32 %v796, %v804
        %v807 = vmul.f32 %v797, %v804
        %v808 = vmul.f32 %v798, %v804
        %v809 = vmul.f32 %v799, %v804
        %v811 = vlaneseq
        %v812 = vshrl.u32 %v811, 7
        %v813 = vsub.s32 0, %v812
        %v814 = vrot.slane %v734, %v813
        %v816 = vadd.f32 %v806, %v814
        %v817 = vadd.f32 %v807, %v814
        %v818 = vadd.f32 %v808, %v814
        %v819 = vadd.f32 %v809, %v814
        %v820 = vpack.c.bf16 %v817, %v816
        %v821 = vpack.c.bf16 %v819, %v818
        %v822 = vld [vmem:[#allocation10] sm:$0xf]
        %v823 = vld [vmem:[#allocation10 + $0x4] sm:$0xf]
        %v824 = vld [vmem:[#allocation10 + $0x8] sm:$0xf]
        %v825 = vld [vmem:[#allocation10 + $0xc] sm:$0xf]
        %v826 = vld [vmem:[%s5] sm:$0x1]
        %v828 = vlaneseq
        %v829 = vshrl.u32 %v828, 7
        %v830 = vsub.s32 0, %v829
        %v831 = vrot.slane %v826, %v830
        %v837 = vunpack.c.l.b16 %v822
        %v838 = vunpack.c.l.b16 %v823
        %v839 = vunpack.c.l.b16 %v824
        %v840 = vunpack.c.l.b16 %v825
        %v841 = vpack.c.b16 %v838, %v837
        %v842 = vpack.c.b16 %v840, %v839
        %v846 = vsel %vm735, %v820, 0
        %v849 = vsel %vm735, %v821, 0
        %851 = vmatprep.subr.bf16.mxu0 0
        %852 = vmatpush1.bf16.msra.mxu0 %v841
        %853 = vmatprep.subr.bf16.mxu0 0
        %854 = vmatpush1.bf16.msra.mxu0 %v842
        %855 = vmatprep.subr.bf16.mxu0 0
        %856 = vmatpush1.bf16.msra.mxu0 0
        %857 = vmatprep.subr.bf16.mxu0 0
        %858 = vmatpush1.bf16.msra.mxu0 0
        %859 = vmatprep.subr.bf16.mxu0 0
        %860 = vmatpush1.bf16.msra.mxu0 0
        %861 = vmatprep.subr.bf16.mxu0 0
        %862 = vmatpush1.bf16.msra.mxu0 0
        %863 = vmatprep.subr.bf16.mxu0 0
        %864 = vmatpush1.bf16.msra.mxu0 0
        %865 = vmatprep.subr.bf16.mxu0 0
        %866 = vmatpush1.bf16.msra.mxu0 0
        %867 = vmatprep.subr.bf16.mxu0 0
        %868 = vmatpush1.bf16.msra.mxu0 0
        %869 = vmatprep.subr.bf16.mxu0 0
        %870 = vmatpush1.bf16.msra.mxu0 0
        %871 = vmatprep.subr.bf16.mxu0 0
        %872 = vmatpush1.bf16.msra.mxu0 0
        %873 = vmatprep.subr.bf16.mxu0 0
        %874 = vmatpush1.bf16.msra.mxu0 0
        %875 = vmatprep.subr.bf16.mxu0 0
        %876 = vmatpush1.bf16.msra.mxu0 0
        %877 = vmatprep.subr.bf16.mxu0 0
        %878 = vmatpush1.bf16.msra.mxu0 0
        %879 = vmatprep.subr.bf16.mxu0 0
        %880 = vmatpush1.bf16.msra.mxu0 0
        %881 = vmatprep.subr.bf16.mxu0 0
        %882 = vmatpush1.bf16.msra.mxu0 0
        %883 = vmatprep.mubr.bf16.mxu0 0
        %884 = vmatmul.mubr.bf16.gmra.mrb[0].mxu0 %v846
        %v885 = vpop.f32.mrb[0].mxu0
        %v886 = vadd.f32 %v831, %v885
        %v887 = vpop.f32.mrb[0].mxu0
        %v888 = vpop.f32.mrb[0].mxu0
        %v889 = vadd.f32 %v831, %v888
        %v890 = vpop.f32.mrb[0].mxu0
        %891 = vmatprep.mubr.bf16.mxu0 0
        %892 = vmatmul.mubr.bf16.gmra.mrb[0].mxu0 %v849
        %v893 = vpop.f32.mrb[0].mxu0
        %v894 = vadd.f32 %v831, %v893
        %v895 = vpop.f32.mrb[0].mxu0
        %v896 = vpop.f32.mrb[0].mxu0
        %v897 = vadd.f32 %v831, %v896
        %v898 = vpop.f32.mrb[0].mxu0
        %899 = vdwg.mxu0
        %v900 = vmax.f32 %v886, 0.0
        %v901 = vmax.f32 %v889, 0.0
        %v902 = vmax.f32 %v894, 0.0
        %v903 = vmax.f32 %v897, 0.0
        %v904 = vld [vmem:[%s6] sm:$0x1]
        %v905 = vld [vmem:[%s7] sm:$0x1]
        %906 = vadd.xlane.f32.xlu0 %v900
        %v907 = vpop.xlane.xlu0 %906
        %908 = vadd.xlane.f32.xlu0 %v901
        %v909 = vpop.xlane.xlu0 %908
        %910 = vadd.xlane.f32.xlu0 %v902
        %v911 = vpop.xlane.xlu0 %910
        %912 = vadd.xlane.f32.xlu0 %v903
        %v913 = vpop.xlane.xlu0 %912
        %v914 = vmul.f32 %v907, 0.020833334
        %v915 = vmul.f32 %v909, 0.020833334
        %v916 = vmul.f32 %v911, 0.020833334
        %v917 = vmul.f32 %v913, 0.020833334
        %v918 = vmul.f32 %v900, %v900
        %v919 = vmul.f32 %v901, %v901
        %v920 = vmul.f32 %v902, %v902
        %v921 = vmul.f32 %v903, %v903
        %922 = vadd.xlane.f32.xlu0 %v918
        %v923 = vpop.xlane.xlu0 %922
        %924 = vadd.xlane.f32.xlu0 %v919
        %v925 = vpop.xlane.xlu0 %924
        %926 = vadd.xlane.f32.xlu0 %v920
        %v927 = vpop.xlane.xlu0 %926
        %928 = vadd.xlane.f32.xlu0 %v921
        %v929 = vpop.xlane.xlu0 %928
        %v930 = vmul.f32 %v923, 0.020833334
        %v931 = vmul.f32 %v925, 0.020833334
        %v932 = vmul.f32 %v927, 0.020833334
        %v933 = vmul.f32 %v929, 0.020833334
        %v934 = vmul.f32 %v914, %v914
        %v935 = vmul.f32 %v915, %v915
        %v936 = vmul.f32 %v916, %v916
        %v937 = vmul.f32 %v917, %v917
        %v938 = vsub.f32 %v930, %v934
        %v939 = vsub.f32 %v931, %v935
        %v940 = vsub.f32 %v932, %v936
        %v941 = vsub.f32 %v933, %v937
        %v942 = vmax.f32 %v938, 0.0
        %v943 = vmax.f32 %v939, 0.0
        %v944 = vmax.f32 %v940, 0.0
        %v945 = vmax.f32 %v941, 0.0
        %v946 = vsub.f32 %v900, %v914
        %v947 = vsub.f32 %v901, %v915
        %v948 = vsub.f32 %v902, %v916
        %v949 = vsub.f32 %v903, %v917
        %v950 = vadd.f32 %v942, 1e-05
        %v951 = vadd.f32 %v943, 1e-05
        %v952 = vadd.f32 %v944, 1e-05
        %v953 = vadd.f32 %v945, 1e-05
        %v954 = vrsqrt.pop %v950
        %v955 = vrsqrt.pop %v951
        %v956 = vrsqrt.pop %v952
        %v957 = vrsqrt.pop %v953
        %v958 = vmul.f32 %v946, %v954
        %v959 = vmul.f32 %v947, %v955
        %v960 = vmul.f32 %v948, %v956
        %v961 = vmul.f32 %v949, %v957
        %v963 = vlaneseq
        %v964 = vshrl.u32 %v963, 7
        %v965 = vsub.s32 0, %v964
        %v966 = vrot.slane %v904, %v965
        %v968 = vmul.f32 %v958, %v966
        %v969 = vmul.f32 %v959, %v966
        %v970 = vmul.f32 %v960, %v966
        %v971 = vmul.f32 %v961, %v966
        %v973 = vlaneseq
        %v974 = vshrl.u32 %v973, 7
        %v975 = vsub.s32 0, %v974
        %v976 = vrot.slane %v905, %v975
        %v978 = vadd.f32 %v968, %v976
        %v979 = vadd.f32 %v969, %v976
        %v980 = vadd.f32 %v970, %v976
        %v981 = vadd.f32 %v971, %v976
        %v982 = vpack.c.bf16 %v979, %v978
        %v983 = vpack.c.bf16 %v981, %v980
        %v984 = vld [vmem:[#allocation11] sm:$0xf]
        %v985 = vld [vmem:[#allocation11 + $0x4] sm:$0xf]
        %v986 = vld [vmem:[#allocation11 + $0x8] sm:$0xf]
        %v987 = vld [vmem:[#allocation11 + $0xc] sm:$0xf]
        %v988 = vld [vmem:[#allocation11 + $0x10] sm:$0xf]
        %v989 = vld [vmem:[#allocation11 + $0x14] sm:$0xf]
        %v990 = vld [vmem:[#allocation11 + $0x18] sm:$0xf]
        %v991 = vld [vmem:[#allocation11 + $0x1c] sm:$0xf]
        %v992 = vld [vmem:[#allocation11 + $0x20] sm:$0xf]
        %v993 = vld [vmem:[#allocation11 + $0x24] sm:$0xf]
        %v994 = vld [vmem:[#allocation11 + $0x28] sm:$0xf]
        %v995 = vld [vmem:[#allocation11 + $0x2c] sm:$0xf]
        %v996 = vld [vmem:[#allocation11 + $0x30] sm:$0xf]
        %v997 = vld [vmem:[#allocation11 + $0x34] sm:$0xf]
        %v998 = vld [vmem:[#allocation11 + $0x38] sm:$0xf]
        %v999 = vld [vmem:[#allocation11 + $0x3c] sm:$0xf]
        %v1000 = vld [vmem:[%s9] sm:$0x1]
        %v1002 = vlaneseq
        %v1003 = vshrl.u32 %v1002, 7
        %v1004 = vsub.s32 0, %v1003
        %v1005 = vrot.slane %v1000, %v1004
        %v1023 = vunpack.c.l.b16 %v984
        %v1024 = vunpack.c.l.b16 %v985
        %v1025 = vunpack.c.l.b16 %v986
        %v1026 = vunpack.c.l.b16 %v987
        %v1027 = vunpack.c.l.b16 %v988
        %v1028 = vunpack.c.l.b16 %v989
        %v1029 = vunpack.c.l.b16 %v990
        %v1030 = vunpack.c.l.b16 %v991
        %v1031 = vunpack.c.l.b16 %v992
        %v1032 = vunpack.c.l.b16 %v993
        %v1033 = vunpack.c.l.b16 %v994
        %v1034 = vunpack.c.l.b16 %v995
        %v1035 = vunpack.c.l.b16 %v996
        %v1036 = vunpack.c.l.b16 %v997
        %v1037 = vunpack.c.l.b16 %v998
        %v1038 = vunpack.c.l.b16 %v999
        %v1039 = vpack.c.b16 %v1024, %v1023
        %v1040 = vpack.c.b16 %v1026, %v1025
        %v1041 = vpack.c.b16 %v1028, %v1027
        %v1042 = vpack.c.b16 %v1030, %v1029
        %v1043 = vpack.c.b16 %v1032, %v1031
        %v1044 = vpack.c.b16 %v1034, %v1033
        %v1045 = vpack.c.b16 %v1036, %v1035
        %v1046 = vpack.c.b16 %v1038, %v1037
        %1055 = vmatprep.subr.bf16.mxu0 0
        %1056 = vmatpush1.bf16.msra.mxu0 %v1039
        %1057 = vmatprep.subr.bf16.mxu0 0
        %1058 = vmatpush1.bf16.msra.mxu0 %v1040
        %1059 = vmatprep.subr.bf16.mxu0 0
        %1060 = vmatpush1.bf16.msra.mxu0 %v1041
        %1061 = vmatprep.subr.bf16.mxu0 0
        %1062 = vmatpush1.bf16.msra.mxu0 %v1042
        %1063 = vmatprep.subr.bf16.mxu0 0
        %1064 = vmatpush1.bf16.msra.mxu0 %v1043
        %1065 = vmatprep.subr.bf16.mxu0 0
        %1066 = vmatpush1.bf16.msra.mxu0 %v1044
        %1067 = vmatprep.subr.bf16.mxu0 0
        %1068 = vmatpush1.bf16.msra.mxu0 %v1045
        %1069 = vmatprep.subr.bf16.mxu0 0
        %1070 = vmatpush1.bf16.msra.mxu0 %v1046
        %1071 = vmatprep.subr.bf16.mxu0 0
        %1072 = vmatpush1.bf16.msra.mxu0 0
        %1073 = vmatprep.subr.bf16.mxu0 0
        %1074 = vmatpush1.bf16.msra.mxu0 0
        %1075 = vmatprep.subr.bf16.mxu0 0
        %1076 = vmatpush1.bf16.msra.mxu0 0
        %1077 = vmatprep.subr.bf16.mxu0 0
        %1078 = vmatpush1.bf16.msra.mxu0 0
        %1079 = vmatprep.subr.bf16.mxu0 0
        %1080 = vmatpush1.bf16.msra.mxu0 0
        %1081 = vmatprep.subr.bf16.mxu0 0
        %1082 = vmatpush1.bf16.msra.mxu0 0
        %1083 = vmatprep.subr.bf16.mxu0 0
        %1084 = vmatpush1.bf16.msra.mxu0 0
        %1085 = vmatprep.subr.bf16.mxu0 0
        %1086 = vmatpush1.bf16.msra.mxu0 0
        %1087 = vmatprep.mubr.bf16.mxu0 0
        %1088 = vmatmul.mubr.bf16.gmra.mrb[0].mxu0 %v982
        %v1089 = vpop.f32.mrb[0].mxu0
        %v1090 = vadd.f32 %v1005, %v1089
        %v1091 = vpop.f32.mrb[0].mxu0
        %v1092 = vpop.f32.mrb[0].mxu0
        %v1093 = vadd.f32 %v1005, %v1092
        %v1094 = vpop.f32.mrb[0].mxu0
        %1095 = vmatprep.mubr.bf16.mxu0 0
        %1096 = vmatmul.mubr.bf16.gmra.mrb[0].mxu0 %v983
        %v1097 = vpop.f32.mrb[0].mxu0
        %v1098 = vadd.f32 %v1005, %v1097
        %v1099 = vpop.f32.mrb[0].mxu0
        %v1100 = vpop.f32.mrb[0].mxu0
        %v1101 = vadd.f32 %v1005, %v1100
        %v1102 = vpop.f32.mrb[0].mxu0
        %1103 = vdwg.mxu0
        %v1104 = vmax.f32 %v1090, 0.0
        %v1105 = vmax.f32 %v1093, 0.0
        %v1106 = vmax.f32 %v1098, 0.0
        %v1107 = vmax.f32 %v1101, 0.0
        %v1108 = vld [vmem:[%s10] sm:$0x1]
        %v1109 = vld [vmem:[%s11] sm:$0x1]
        %1110 = vadd.xlane.f32.xlu0 %v1104
        %v1111 = vpop.xlane.xlu0 %1110
        %1112 = vadd.xlane.f32.xlu0 %v1105
        %v1113 = vpop.xlane.xlu0 %1112
        %1114 = vadd.xlane.f32.xlu0 %v1106
        %v1115 = vpop.xlane.xlu0 %1114
        %1116 = vadd.xlane.f32.xlu0 %v1107
        %v1117 = vpop.xlane.xlu0 %1116
        %v1118 = vmul.f32 %v1111, 0.020833334
        %v1119 = vmul.f32 %v1113, 0.020833334
        %v1120 = vmul.f32 %v1115, 0.020833334
        %v1121 = vmul.f32 %v1117, 0.020833334
        %v1122 = vmul.f32 %v1104, %v1104
        %v1123 = vmul.f32 %v1105, %v1105
        %v1124 = vmul.f32 %v1106, %v1106
        %v1125 = vmul.f32 %v1107, %v1107
        %1126 = vadd.xlane.f32.xlu0 %v1122
        %v1127 = vpop.xlane.xlu0 %1126
        %1128 = vadd.xlane.f32.xlu0 %v1123
        %v1129 = vpop.xlane.xlu0 %1128
        %1130 = vadd.xlane.f32.xlu0 %v1124
        %v1131 = vpop.xlane.xlu0 %1130
        %1132 = vadd.xlane.f32.xlu0 %v1125
        %v1133 = vpop.xlane.xlu0 %1132
        %v1134 = vmul.f32 %v1127, 0.020833334
        %v1135 = vmul.f32 %v1129, 0.020833334
        %v1136 = vmul.f32 %v1131, 0.020833334
        %v1137 = vmul.f32 %v1133, 0.020833334
        %v1138 = vmul.f32 %v1118, %v1118
        %v1139 = vmul.f32 %v1119, %v1119
        %v1140 = vmul.f32 %v1120, %v1120
        %v1141 = vmul.f32 %v1121, %v1121
        %v1142 = vsub.f32 %v1134, %v1138
        %v1143 = vsub.f32 %v1135, %v1139
        %v1144 = vsub.f32 %v1136, %v1140
        %v1145 = vsub.f32 %v1137, %v1141
        %v1146 = vmax.f32 %v1142, 0.0
        %v1147 = vmax.f32 %v1143, 0.0
        %v1148 = vmax.f32 %v1144, 0.0
        %v1149 = vmax.f32 %v1145, 0.0
        %v1150 = vsub.f32 %v1104, %v1118
        %v1151 = vsub.f32 %v1105, %v1119
        %v1152 = vsub.f32 %v1106, %v1120
        %v1153 = vsub.f32 %v1107, %v1121
        %v1154 = vadd.f32 %v1146, 1e-05
        %v1155 = vadd.f32 %v1147, 1e-05
        %v1156 = vadd.f32 %v1148, 1e-05
        %v1157 = vadd.f32 %v1149, 1e-05
        %v1158 = vrsqrt.pop %v1154
        %v1159 = vrsqrt.pop %v1155
        %v1160 = vrsqrt.pop %v1156
        %v1161 = vrsqrt.pop %v1157
        %v1162 = vmul.f32 %v1150, %v1158
        %v1163 = vmul.f32 %v1151, %v1159
        %v1164 = vmul.f32 %v1152, %v1160
        %v1165 = vmul.f32 %v1153, %v1161
        %v1167 = vlaneseq
        %v1168 = vshrl.u32 %v1167, 7
        %v1169 = vsub.s32 0, %v1168
        %v1170 = vrot.slane %v1108, %v1169
        %v1172 = vmul.f32 %v1162, %v1170
        %v1173 = vmul.f32 %v1163, %v1170
        %v1174 = vmul.f32 %v1164, %v1170
        %v1175 = vmul.f32 %v1165, %v1170
        %v1177 = vlaneseq
        %v1178 = vshrl.u32 %v1177, 7
        %v1179 = vsub.s32 0, %v1178
        %v1180 = vrot.slane %v1109, %v1179
        %v1182 = vadd.f32 %v1172, %v1180
        %v1183 = vadd.f32 %v1173, %v1180
        %v1184 = vadd.f32 %v1174, %v1180
        %v1185 = vadd.f32 %v1175, %v1180
        %v1186 = vpack.c.bf16 %v1183, %v1182
        %v1187 = vpack.c.bf16 %v1185, %v1184
        %v1188 = vld [vmem:[#allocation13] sm:$0xff]
        %v1189 = vld [vmem:[#allocation13 + $0x8] sm:$0xf]
        %v1190 = vld [vmem:[#allocation13 + $0xc] sm:$0xff]
        %v1191 = vld [vmem:[#allocation13 + $0x14] sm:$0xf]
        %v1192 = vld [vmem:[#allocation13 + $0x18] sm:$0xff]
        %v1193 = vld [vmem:[#allocation13 + $0x20] sm:$0xf]
        %v1194 = vld [vmem:[#allocation13 + $0x24] sm:$0xff]
        %v1195 = vld [vmem:[#allocation13 + $0x2c] sm:$0xf]
        %v1196 = vld [vmem:[#allocation13 + $0x30] sm:$0xff]
        %v1197 = vld [vmem:[#allocation13 + $0x38] sm:$0xf]
        %v1198 = vld [vmem:[#allocation13 + $0x3c] sm:$0xff]
        %v1199 = vld [vmem:[#allocation13 + $0x44] sm:$0xf]
        %v1200 = vld [vmem:[#allocation13 + $0x48] sm:$0xff]
        %v1201 = vld [vmem:[#allocation13 + $0x50] sm:$0xf]
        %v1202 = vld [vmem:[#allocation13 + $0x54] sm:$0xff]
        %v1203 = vld [vmem:[#allocation13 + $0x5c] sm:$0xf]
        %v1204 = vld [vmem:[#allocation13 + $0x60] sm:$0xff]
        %v1205 = vld [vmem:[#allocation13 + $0x68] sm:$0xf]
        %v1206 = vld [vmem:[#allocation13 + $0x6c] sm:$0xff]
        %v1207 = vld [vmem:[#allocation13 + $0x74] sm:$0xf]
        %v1208 = vld [vmem:[#allocation13 + $0x78] sm:$0xff]
        %v1209 = vld [vmem:[#allocation13 + $0x80] sm:$0xf]
        %v1210 = vld [vmem:[#allocation13 + $0x84] sm:$0xff]
        %v1211 = vld [vmem:[#allocation13 + $0x8c] sm:$0xf]
        %v1212 = vld [vmem:[#allocation13 + $0x90] sm:$0xff]
        %v1213 = vld [vmem:[#allocation13 + $0x98] sm:$0xf]
        %v1214 = vld [vmem:[#allocation13 + $0x9c] sm:$0xff]
        %v1215 = vld [vmem:[#allocation13 + $0xa4] sm:$0xf]
        %v1216 = vld [vmem:[#allocation13 + $0xa8] sm:$0xff]
        %v1217 = vld [vmem:[#allocation13 + $0xb0] sm:$0xf]
        %v1218 = vld [vmem:[#allocation13 + $0xb4] sm:$0xff]
        %v1219 = vld [vmem:[#allocation13 + $0xbc] sm:$0xf]
        %v1220 = vld [vmem:[%s13] sm:$0x7]
        %v1222 = vlaneseq
        %v1223 = vshrl.u32 %v1222, 7
        %v1224 = vsub.s32 0, %v1223
        %v1225 = vrot.slane %v1220, %v1224
        %v1226 = vlaneseq
        %v1227 = vshrl.u32 %v1226, 7
        %v1228 = vsub.s32 1, %v1227
        %v1229 = vrot.slane %v1220, %v1228
        %v1230 = vlaneseq
        %v1231 = vshrl.u32 %v1230, 7
        %v1232 = vsub.s32 2, %v1231
        %v1233 = vrot.slane %v1220, %v1232
        %v1269 = vunpack.c.l.b16 %v1188
        %v1270 = vunpack.c.h.b16 %v1188
        %v1271 = vunpack.c.l.b16 %v1189
        %v1272 = vunpack.c.l.b16 %v1190
        %v1273 = vunpack.c.h.b16 %v1190
        %v1274 = vunpack.c.l.b16 %v1191
        %v1275 = vunpack.c.l.b16 %v1192
        %v1276 = vunpack.c.h.b16 %v1192
        %v1277 = vunpack.c.l.b16 %v1193
        %v1278 = vunpack.c.l.b16 %v1194
        %v1279 = vunpack.c.h.b16 %v1194
        %v1280 = vunpack.c.l.b16 %v1195
        %v1281 = vunpack.c.l.b16 %v1196
        %v1282 = vunpack.c.h.b16 %v1196
        %v1283 = vunpack.c.l.b16 %v1197
        %v1284 = vunpack.c.l.b16 %v1198
        %v1285 = vunpack.c.h.b16 %v1198
        %v1286 = vunpack.c.l.b16 %v1199
        %v1287 = vunpack.c.l.b16 %v1200
        %v1288 = vunpack.c.h.b16 %v1200
        %v1289 = vunpack.c.l.b16 %v1201
        %v1290 = vunpack.c.l.b16 %v1202
        %v1291 = vunpack.c.h.b16 %v1202
        %v1292 = vunpack.c.l.b16 %v1203
        %v1293 = vunpack.c.l.b16 %v1204
        %v1294 = vunpack.c.h.b16 %v1204
        %v1295 = vunpack.c.l.b16 %v1205
        %v1296 = vunpack.c.l.b16 %v1206
        %v1297 = vunpack.c.h.b16 %v1206
        %v1298 = vunpack.c.l.b16 %v1207
        %v1299 = vunpack.c.l.b16 %v1208
        %v1300 = vunpack.c.h.b16 %v1208
        %v1301 = vunpack.c.l.b16 %v1209
        %v1302 = vunpack.c.l.b16 %v1210
        %v1303 = vunpack.c.h.b16 %v1210
        %v1304 = vunpack.c.l.b16 %v1211
        %v1305 = vunpack.c.l.b16 %v1212
        %v1306 = vunpack.c.h.b16 %v1212
        %v1307 = vunpack.c.l.b16 %v1213
        %v1308 = vunpack.c.l.b16 %v1214
        %v1309 = vunpack.c.h.b16 %v1214
        %v1310 = vunpack.c.l.b16 %v1215
        %v1311 = vunpack.c.l.b16 %v1216
        %v1312 = vunpack.c.h.b16 %v1216
        %v1313 = vunpack.c.l.b16 %v1217
        %v1314 = vunpack.c.l.b16 %v1218
        %v1315 = vunpack.c.h.b16 %v1218
        %v1316 = vunpack.c.l.b16 %v1219
        %v1317 = vpack.c.b16 %v1272, %v1269
        %v1318 = vpack.c.b16 %v1273, %v1270
        %v1319 = vpack.c.b16 %v1274, %v1271
        %v1320 = vpack.c.b16 %v1278, %v1275
        %v1321 = vpack.c.b16 %v1279, %v1276
        %v1322 = vpack.c.b16 %v1280, %v1277
        %v1323 = vpack.c.b16 %v1284, %v1281
        %v1324 = vpack.c.b16 %v1285, %v1282
        %v1325 = vpack.c.b16 %v1286, %v1283
        %v1326 = vpack.c.b16 %v1290, %v1287
        %v1327 = vpack.c.b16 %v1291, %v1288
        %v1328 = vpack.c.b16 %v1292, %v1289
        %v1329 = vpack.c.b16 %v1296, %v1293
        %v1330 = vpack.c.b16 %v1297, %v1294
        %v1331 = vpack.c.b16 %v1298, %v1295
        %v1332 = vpack.c.b16 %v1302, %v1299
        %v1333 = vpack.c.b16 %v1303, %v1300
        %v1334 = vpack.c.b16 %v1304, %v1301
        %v1335 = vpack.c.b16 %v1308, %v1305
        %v1336 = vpack.c.b16 %v1309, %v1306
        %v1337 = vpack.c.b16 %v1310, %v1307
        %v1338 = vpack.c.b16 %v1314, %v1311
        %v1339 = vpack.c.b16 %v1315, %v1312
        %v1340 = vpack.c.b16 %v1316, %v1313
        %1365 = vmatprep.subr.bf16.mxu0 %v1318
        %1366 = vmatpush1.bf16.msra.mxu0 %v1317
        %1367 = vmatprep.subr.bf16.mxu0 %v1321
        %1368 = vmatpush1.bf16.msra.mxu0 %v1320
        %1369 = vmatprep.subr.bf16.mxu0 %v1324
        %1370 = vmatpush1.bf16.msra.mxu0 %v1323
        %1371 = vmatprep.subr.bf16.mxu0 %v1327
        %1372 = vmatpush1.bf16.msra.mxu0 %v1326
        %1373 = vmatprep.subr.bf16.mxu0 %v1330
        %1374 = vmatpush1.bf16.msra.mxu0 %v1329
        %1375 = vmatprep.subr.bf16.mxu0 %v1333
        %1376 = vmatpush1.bf16.msra.mxu0 %v1332
        %1377 = vmatprep.subr.bf16.mxu0 %v1336
        %1378 = vmatpush1.bf16.msra.mxu0 %v1335
        %1379 = vmatprep.subr.bf16.mxu0 %v1339
        %1380 = vmatpush1.bf16.msra.mxu0 %v1338
        %1381 = vmatprep.subr.bf16.mxu0 0
        %1382 = vmatpush1.bf16.msra.mxu0 0
        %1383 = vmatprep.subr.bf16.mxu0 0
        %1384 = vmatpush1.bf16.msra.mxu0 0
        %1385 = vmatprep.subr.bf16.mxu0 0
        %1386 = vmatpush1.bf16.msra.mxu0 0
        %1387 = vmatprep.subr.bf16.mxu0 0
        %1388 = vmatpush1.bf16.msra.mxu0 0
        %1389 = vmatprep.subr.bf16.mxu0 0
        %1390 = vmatpush1.bf16.msra.mxu0 0
        %1391 = vmatprep.subr.bf16.mxu0 0
        %1392 = vmatpush1.bf16.msra.mxu0 0
        %1393 = vmatprep.subr.bf16.mxu0 0
        %1394 = vmatpush1.bf16.msra.mxu0 0
        %1395 = vmatprep.subr.bf16.mxu0 0
        %1396 = vmatpush1.bf16.msra.mxu0 0
        %1397 = vmatprep.mubr.bf16.mxu0 0
        %1398 = vmatmul.mubr.bf16.gmra.mrb[0].mxu0 %v1186
        %v1399 = vpop.f32.mrb[0].mxu0
        %v1400 = vadd.f32 %v1225, %v1399
        %v1401 = vpop.f32.mrb[0].mxu0
        %v1402 = vadd.f32 %v1229, %v1401
        %v1403 = vpop.f32.mrb[0].mxu0
        %v1404 = vadd.f32 %v1225, %v1403
        %v1405 = vpop.f32.mrb[0].mxu0
        %v1406 = vadd.f32 %v1229, %v1405
        %1407 = vmatprep.mubr.bf16.mxu0 0
        %1408 = vmatmul.mubr.bf16.gmra.mrb[0].mxu0 %v1187
        %v1409 = vpop.f32.mrb[0].mxu0
        %v1410 = vadd.f32 %v1225, %v1409
        %v1411 = vpop.f32.mrb[0].mxu0
        %v1412 = vadd.f32 %v1229, %v1411
        %v1413 = vpop.f32.mrb[0].mxu0
        %v1414 = vadd.f32 %v1225, %v1413
        %v1415 = vpop.f32.mrb[0].mxu0
        %v1416 = vadd.f32 %v1229, %v1415
        %1417 = vdwg.mxu0
        %1418 = vmatprep.subr.bf16.mxu0 0
        %1419 = vmatpush1.bf16.msra.mxu0 %v1319
        %1420 = vmatprep.subr.bf16.mxu0 0
        %1421 = vmatpush1.bf16.msra.mxu0 %v1322
        %1422 = vmatprep.subr.bf16.mxu0 0
        %1423 = vmatpush1.bf16.msra.mxu0 %v1325
        %1424 = vmatprep.subr.bf16.mxu0 0
        %1425 = vmatpush1.bf16.msra.mxu0 %v1328
        %1426 = vmatprep.subr.bf16.mxu0 0
        %1427 = vmatpush1.bf16.msra.mxu0 %v1331
        %1428 = vmatprep.subr.bf16.mxu0 0
        %1429 = vmatpush1.bf16.msra.mxu0 %v1334
        %1430 = vmatprep.subr.bf16.mxu0 0
        %1431 = vmatpush1.bf16.msra.mxu0 %v1337
        %1432 = vmatprep.subr.bf16.mxu0 0
        %1433 = vmatpush1.bf16.msra.mxu0 %v1340
        %1434 = vmatprep.subr.bf16.mxu0 0
        %1435 = vmatpush1.bf16.msra.mxu0 0
        %1436 = vmatprep.subr.bf16.mxu0 0
        %1437 = vmatpush1.bf16.msra.mxu0 0
        %1438 = vmatprep.subr.bf16.mxu0 0
        %1439 = vmatpush1.bf16.msra.mxu0 0
        %1440 = vmatprep.subr.bf16.mxu0 0
        %1441 = vmatpush1.bf16.msra.mxu0 0
        %1442 = vmatprep.subr.bf16.mxu0 0
        %1443 = vmatpush1.bf16.msra.mxu0 0
        %1444 = vmatprep.subr.bf16.mxu0 0
        %1445 = vmatpush1.bf16.msra.mxu0 0
        %1446 = vmatprep.subr.bf16.mxu0 0
        %1447 = vmatpush1.bf16.msra.mxu0 0
        %1448 = vmatprep.subr.bf16.mxu0 0
        %1449 = vmatpush1.bf16.msra.mxu0 0
        %1450 = vmatprep.mubr.bf16.mxu0 0
        %1451 = vmatmul.mubr.bf16.gmra.mrb[0].mxu0 %v1186
        %v1452 = vpop.f32.mrb[0].mxu0
        %v1453 = vadd.f32 %v1233, %v1452
        %v1454 = vpop.f32.mrb[0].mxu0
        %v1455 = vpop.f32.mrb[0].mxu0
        %v1456 = vadd.f32 %v1233, %v1455
        %v1457 = vpop.f32.mrb[0].mxu0
        %1458 = vmatprep.mubr.bf16.mxu0 0
        %1459 = vmatmul.mubr.bf16.gmra.mrb[0].mxu0 %v1187
        %v1460 = vpop.f32.mrb[0].mxu0
        %v1461 = vadd.f32 %v1233, %v1460
        %v1462 = vpop.f32.mrb[0].mxu0
        %v1463 = vpop.f32.mrb[0].mxu0
        %v1464 = vadd.f32 %v1233, %v1463
        %v1465 = vpop.f32.mrb[0].mxu0
        %1466 = vdwg.mxu0
        %v1467 = vpack.c.bf16 %v1404, %v1400
        %v1468 = vpack.c.bf16 %v1406, %v1402
        %v1469 = vpack.c.bf16 %v1456, %v1453
        %v1470 = vpack.c.bf16 %v1414, %v1410
        %v1471 = vpack.c.bf16 %v1416, %v1412
        %v1472 = vpack.c.bf16 %v1464, %v1461
        %v1479 = vunpack.c.l.b16 %v1467
        %v1480 = vunpack.c.l.b16 %v1468
        %v1481 = vunpack.c.l.b16 %v1469
        %v1482 = vunpack.c.h.b16 %v1467
        %v1483 = vunpack.c.h.b16 %v1468
        %v1484 = vunpack.c.h.b16 %v1469
        %v1485 = vunpack.c.l.b16 %v1470
        %v1486 = vunpack.c.l.b16 %v1471
        %v1487 = vunpack.c.l.b16 %v1472
        %v1488 = vunpack.c.h.b16 %v1470
        %v1489 = vunpack.c.h.b16 %v1471
        %v1490 = vunpack.c.h.b16 %v1472
        %v1491 = vpack.c.b16 %v1480, %v1479
        %v1492 = vpack.c.b16 %v1481, %v1481
        %v1493 = vpack.c.b16 %v1483, %v1482
        %v1494 = vpack.c.b16 %v1484, %v1484
        %v1495 = vpack.c.b16 %v1486, %v1485
        %v1496 = vpack.c.b16 %v1487, %v1487
        %v1497 = vpack.c.b16 %v1489, %v1488
        %v1498 = vpack.c.b16 %v1490, %v1490
        %1507 = vst [vmem:[#allocation3] sm:$0xff] %v1491
        %1508 = vst [vmem:[#allocation3 + $0x8] sm:$0xf] %v1492
        %1509 = vst [vmem:[#allocation3 + $0xc] sm:$0xff] %v1493
        %1510 = vst [vmem:[#allocation3 + $0x14] sm:$0xf] %v1494
        %1511 = vst [vmem:[#allocation3 + $0x18] sm:$0xff] %v1495
        %1512 = vst [vmem:[#allocation3 + $0x20] sm:$0xf] %v1496
        %1513 = vst [vmem:[#allocation3 + $0x24] sm:$0xff] %v1497
        %1514 = vst [vmem:[#allocation3 + $0x2c] sm:$0xf] %v1498
        %v1515 = vld [vmem:[#allocation14] sm:$0xff]
        %v1516 = vld [vmem:[#allocation14 + $0x8] sm:$0xf]
        %v1517 = vld [vmem:[#allocation14 + $0xc] sm:$0xff]
        %v1518 = vld [vmem:[#allocation14 + $0x14] sm:$0xf]
        %v1519 = vld [vmem:[#allocation14 + $0x18] sm:$0xff]
        %v1520 = vld [vmem:[#allocation14 + $0x20] sm:$0xf]
        %v1521 = vld [vmem:[#allocation14 + $0x24] sm:$0xff]
        %v1522 = vld [vmem:[#allocation14 + $0x2c] sm:$0xf]
        %v1523 = vld [vmem:[#allocation14 + $0x30] sm:$0xff]
        %v1524 = vld [vmem:[#allocation14 + $0x38] sm:$0xf]
        %v1525 = vld [vmem:[#allocation14 + $0x3c] sm:$0xff]
        %v1526 = vld [vmem:[#allocation14 + $0x44] sm:$0xf]
        %v1527 = vld [vmem:[#allocation14 + $0x48] sm:$0xff]
        %v1528 = vld [vmem:[#allocation14 + $0x50] sm:$0xf]
        %v1529 = vld [vmem:[#allocation14 + $0x54] sm:$0xff]
        %v1530 = vld [vmem:[#allocation14 + $0x5c] sm:$0xf]
        %v1531 = vld [vmem:[#allocation14 + $0x60] sm:$0xff]
        %v1532 = vld [vmem:[#allocation14 + $0x68] sm:$0xf]
        %v1533 = vld [vmem:[#allocation14 + $0x6c] sm:$0xff]
        %v1534 = vld [vmem:[#allocation14 + $0x74] sm:$0xf]
        %v1535 = vld [vmem:[#allocation14 + $0x78] sm:$0xff]
        %v1536 = vld [vmem:[#allocation14 + $0x80] sm:$0xf]
        %v1537 = vld [vmem:[#allocation14 + $0x84] sm:$0xff]
        %v1538 = vld [vmem:[#allocation14 + $0x8c] sm:$0xf]
        %v1539 = vld [vmem:[#allocation14 + $0x90] sm:$0xff]
        %v1540 = vld [vmem:[#allocation14 + $0x98] sm:$0xf]
        %v1541 = vld [vmem:[#allocation14 + $0x9c] sm:$0xff]
        %v1542 = vld [vmem:[#allocation14 + $0xa4] sm:$0xf]
        %v1543 = vld [vmem:[#allocation14 + $0xa8] sm:$0xff]
        %v1544 = vld [vmem:[#allocation14 + $0xb0] sm:$0xf]
        %v1545 = vld [vmem:[#allocation14 + $0xb4] sm:$0xff]
        %v1546 = vld [vmem:[#allocation14 + $0xbc] sm:$0xf]
        %v1547 = vld [vmem:[%s15] sm:$0x7]
        %v1548 = vld [vmem:[#allocation2] sm:$0xff]
        %v1549 = vpack.c.bf16 %v1548, %v1548
        %v1551 = vlaneseq
        %v1552 = vshrl.u32 %v1551, 7
        %v1553 = vsub.s32 0, %v1552
        %v1554 = vrot.slane %v1547, %v1553
        %v1555 = vlaneseq
        %v1556 = vshrl.u32 %v1555, 7
        %v1557 = vsub.s32 1, %v1556
        %v1558 = vrot.slane %v1547, %v1557
        %v1559 = vlaneseq
        %v1560 = vshrl.u32 %v1559, 7
        %v1561 = vsub.s32 2, %v1560
        %v1562 = vrot.slane %v1547, %v1561
        %v1598 = vunpack.c.l.b16 %v1515
        %v1599 = vunpack.c.h.b16 %v1515
        %v1600 = vunpack.c.l.b16 %v1516
        %v1601 = vunpack.c.l.b16 %v1517
        %v1602 = vunpack.c.h.b16 %v1517
        %v1603 = vunpack.c.l.b16 %v1518
        %v1604 = vunpack.c.l.b16 %v1519
        %v1605 = vunpack.c.h.b16 %v1519
        %v1606 = vunpack.c.l.b16 %v1520
        %v1607 = vunpack.c.l.b16 %v1521
        %v1608 = vunpack.c.h.b16 %v1521
        %v1609 = vunpack.c.l.b16 %v1522
        %v1610 = vunpack.c.l.b16 %v1523
        %v1611 = vunpack.c.h.b16 %v1523
        %v1612 = vunpack.c.l.b16 %v1524
        %v1613 = vunpack.c.l.b16 %v1525
        %v1614 = vunpack.c.h.b16 %v1525
        %v1615 = vunpack.c.l.b16 %v1526
        %v1616 = vunpack.c.l.b16 %v1527
        %v1617 = vunpack.c.h.b16 %v1527
        %v1618 = vunpack.c.l.b16 %v1528
        %v1619 = vunpack.c.l.b16 %v1529
        %v1620 = vunpack.c.h.b16 %v1529
        %v1621 = vunpack.c.l.b16 %v1530
        %v1622 = vunpack.c.l.b16 %v1531
        %v1623 = vunpack.c.h.b16 %v1531
        %v1624 = vunpack.c.l.b16 %v1532
        %v1625 = vunpack.c.l.b16 %v1533
        %v1626 = vunpack.c.h.b16 %v1533
        %v1627 = vunpack.c.l.b16 %v1534
        %v1628 = vunpack.c.l.b16 %v1535
        %v1629 = vunpack.c.h.b16 %v1535
        %v1630 = vunpack.c.l.b16 %v1536
        %v1631 = vunpack.c.l.b16 %v1537
        %v1632 = vunpack.c.h.b16 %v1537
        %v1633 = vunpack.c.l.b16 %v1538
        %v1634 = vunpack.c.l.b16 %v1539
        %v1635 = vunpack.c.h.b16 %v1539
        %v1636 = vunpack.c.l.b16 %v1540
        %v1637 = vunpack.c.l.b16 %v1541
        %v1638 = vunpack.c.h.b16 %v1541
        %v1639 = vunpack.c.l.b16 %v1542
        %v1640 = vunpack.c.l.b16 %v1543
        %v1641 = vunpack.c.h.b16 %v1543
        %v1642 = vunpack.c.l.b16 %v1544
        %v1643 = vunpack.c.l.b16 %v1545
        %v1644 = vunpack.c.h.b16 %v1545
        %v1645 = vunpack.c.l.b16 %v1546
        %v1646 = vpack.c.b16 %v1601, %v1598
        %v1647 = vpack.c.b16 %v1602, %v1599
        %v1648 = vpack.c.b16 %v1603, %v1600
        %v1649 = vpack.c.b16 %v1607, %v1604
        %v1650 = vpack.c.b16 %v1608, %v1605
        %v1651 = vpack.c.b16 %v1609, %v1606
        %v1652 = vpack.c.b16 %v1613, %v1610
        %v1653 = vpack.c.b16 %v1614, %v1611
        %v1654 = vpack.c.b16 %v1615, %v1612
        %v1655 = vpack.c.b16 %v1619, %v1616
        %v1656 = vpack.c.b16 %v1620, %v1617
        %v1657 = vpack.c.b16 %v1621, %v1618
        %v1658 = vpack.c.b16 %v1625, %v1622
        %v1659 = vpack.c.b16 %v1626, %v1623
        %v1660 = vpack.c.b16 %v1627, %v1624
        %v1661 = vpack.c.b16 %v1631, %v1628
        %v1662 = vpack.c.b16 %v1632, %v1629
        %v1663 = vpack.c.b16 %v1633, %v1630
        %v1664 = vpack.c.b16 %v1637, %v1634
        %v1665 = vpack.c.b16 %v1638, %v1635
        %v1666 = vpack.c.b16 %v1639, %v1636
        %v1667 = vpack.c.b16 %v1643, %v1640
        %v1668 = vpack.c.b16 %v1644, %v1641
        %v1669 = vpack.c.b16 %v1645, %v1642
        %1694 = vmatprep.subr.bf16.mxu0 %v1647
        %1695 = vmatpush1.bf16.msra.mxu0 %v1646
        %1696 = vmatprep.subr.bf16.mxu0 %v1650
        %1697 = vmatpush1.bf16.msra.mxu0 %v1649
        %1698 = vmatprep.subr.bf16.mxu0 %v1653
        %1699 = vmatpush1.bf16.msra.mxu0 %v1652
        %1700 = vmatprep.subr.bf16.mxu0 %v1656
        %1701 = vmatpush1.bf16.msra.mxu0 %v1655
        %1702 = vmatprep.subr.bf16.mxu0 %v1659
        %1703 = vmatpush1.bf16.msra.mxu0 %v1658
        %1704 = vmatprep.subr.bf16.mxu0 %v1662
        %1705 = vmatpush1.bf16.msra.mxu0 %v1661
        %1706 = vmatprep.subr.bf16.mxu0 %v1665
        %1707 = vmatpush1.bf16.msra.mxu0 %v1664
        %1708 = vmatprep.subr.bf16.mxu0 %v1668
        %1709 = vmatpush1.bf16.msra.mxu0 %v1667
        %1710 = vmatprep.subr.bf16.mxu0 0
        %1711 = vmatpush1.bf16.msra.mxu0 0
        %1712 = vmatprep.subr.bf16.mxu0 0
        %1713 = vmatpush1.bf16.msra.mxu0 0
        %1714 = vmatprep.subr.bf16.mxu0 0
        %1715 = vmatpush1.bf16.msra.mxu0 0
        %1716 = vmatprep.subr.bf16.mxu0 0
        %1717 = vmatpush1.bf16.msra.mxu0 0
        %1718 = vmatprep.subr.bf16.mxu0 0
        %1719 = vmatpush1.bf16.msra.mxu0 0
        %1720 = vmatprep.subr.bf16.mxu0 0
        %1721 = vmatpush1.bf16.msra.mxu0 0
        %1722 = vmatprep.subr.bf16.mxu0 0
        %1723 = vmatpush1.bf16.msra.mxu0 0
        %1724 = vmatprep.subr.bf16.mxu0 0
        %1725 = vmatpush1.bf16.msra.mxu0 0
        %1726 = vmatprep.mubr.bf16.mxu0 0
        %1727 = vmatmul.mubr.bf16.gmra.mrb[0].mxu0 %v1549
        %v1728 = vpop.f32.mrb[0].mxu0
        %v1729 = vadd.f32 %v1554, %v1728
        %v1730 = vpop.f32.mrb[0].mxu0
        %v1731 = vadd.f32 %v1558, %v1730
        %v1732 = vpop.f32.mrb[0].mxu0
        %v1733 = vpop.f32.mrb[0].mxu0
        %1734 = vdwg.mxu0
        %1735 = vmatprep.subr.bf16.mxu0 0
        %1736 = vmatpush1.bf16.msra.mxu0 %v1648
        %1737 = vmatprep.subr.bf16.mxu0 0
        %1738 = vmatpush1.bf16.msra.mxu0 %v1651
        %1739 = vmatprep.subr.bf16.mxu0 0
        %1740 = vmatpush1.bf16.msra.mxu0 %v1654
        %1741 = vmatprep.subr.bf16.mxu0 0
        %1742 = vmatpush1.bf16.msra.mxu0 %v1657
        %1743 = vmatprep.subr.bf16.mxu0 0
        %1744 = vmatpush1.bf16.msra.mxu0 %v1660
        %1745 = vmatprep.subr.bf16.mxu0 0
        %1746 = vmatpush1.bf16.msra.mxu0 %v1663
        %1747 = vmatprep.subr.bf16.mxu0 0
        %1748 = vmatpush1.bf16.msra.mxu0 %v1666
        %1749 = vmatprep.subr.bf16.mxu0 0
        %1750 = vmatpush1.bf16.msra.mxu0 %v1669
        %1751 = vmatprep.subr.bf16.mxu0 0
        %1752 = vmatpush1.bf16.msra.mxu0 0
        %1753 = vmatprep.subr.bf16.mxu0 0
        %1754 = vmatpush1.bf16.msra.mxu0 0
        %1755 = vmatprep.subr.bf16.mxu0 0
        %1756 = vmatpush1.bf16.msra.mxu0 0
        %1757 = vmatprep.subr.bf16.mxu0 0
        %1758 = vmatpush1.bf16.msra.mxu0 0
        %1759 = vmatprep.subr.bf16.mxu0 0
        %1760 = vmatpush1.bf16.msra.mxu0 0
        %1761 = vmatprep.subr.bf16.mxu0 0
        %1762 = vmatpush1.bf16.msra.mxu0 0
        %1763 = vmatprep.subr.bf16.mxu0 0
        %1764 = vmatpush1.bf16.msra.mxu0 0
        %1765 = vmatprep.subr.bf16.mxu0 0
        %1766 = vmatpush1.bf16.msra.mxu0 0
        %1767 = vmatprep.mubr.bf16.mxu0 0
        %1768 = vmatmul.mubr.bf16.gmra.mrb[0].mxu0 %v1549
        %v1769 = vpop.f32.mrb[0].mxu0
        %v1770 = vadd.f32 %v1562, %v1769
        %v1771 = vpop.f32.mrb[0].mxu0
        %v1772 = vpop.f32.mrb[0].mxu0
        %v1773 = vpop.f32.mrb[0].mxu0
        %1774 = vdwg.mxu0
        %v1775 = vld [vmem:[#allocation3] sm:$0xff]
        %v1776 = vld [vmem:[#allocation3 + $0x8] sm:$0xf]
        %v1777 = vunpack.c.l.bf16 %v1775
        %v1778 = vunpack.c.h.bf16 %v1775
        %v1779 = vunpack.c.l.bf16 %v1776
        %v1780 = vadd.f32 %v1777, %v1729
        %v1781 = vadd.f32 %v1778, %v1731
        %v1782 = vxor.u32 %v1780, 2147483648
        %v1783 = vxor.u32 %v1781, 2147483648
        %v1784 = vmul.f32 %v1782, 1.442695
        %v1785 = vpow.pop %v1784
        %v1786 = vmul.f32 %v1783, 1.442695
        %v1787 = vpow.pop %v1786
        %v1788 = vadd.f32 %v1785, 1.0
        %v1789 = vadd.f32 %v1787, 1.0
        %v1790 = vrcp.pop %v1788
        %v1791 = vmul.f32 1.0, %v1790
        %v1792 = vrcp.pop %v1789
        %v1793 = vmul.f32 1.0, %v1792
        %v1794 = vmul.f32 %v1791, %v1770
        %v1795 = vadd.f32 %v1779, %v1794
        %v1796 = vtanh.pop %v1795
        %v1797 = vsub.f32 1.0, %v1793
        %v1798 = vmul.f32 %v1797, %v1796
        %v1799 = vmul.f32 %v1793, %v1548
        %v1800 = vadd.f32 %v1798, %v1799
        %s1801 = smul.u32 %s46, 4
        %p1802 = scmp.lt.s32.totalorder %s1801, 10
        %s1803 = scalar_select %p1802, 1, 0
        %v1804 = vstv %s1803
        %vm1805 = vcmp.eq.s32.totalorder %v1804, 1
        %v1806 = vsel %vm1805, %v1800, %v1548
        %1807 = vst [vmem:[#allocation4] sm:$0xff] %v1806
        %v1808 = vpack.c.bf16 %v1806, %v1806
        %1809 = vmatprep.subr.bf16.mxu0 %v1647
        %1810 = vmatpush1.bf16.msra.mxu0 %v1646
        %1811 = vmatprep.subr.bf16.mxu0 %v1650
        %1812 = vmatpush1.bf16.msra.mxu0 %v1649
        %1813 = vmatprep.subr.bf16.mxu0 %v1653
        %1814 = vmatpush1.bf16.msra.mxu0 %v1652
        %1815 = vmatprep.subr.bf16.mxu0 %v1656
        %1816 = vmatpush1.bf16.msra.mxu0 %v1655
        %1817 = vmatprep.subr.bf16.mxu0 %v1659
        %1818 = vmatpush1.bf16.msra.mxu0 %v1658
        %1819 = vmatprep.subr.bf16.mxu0 %v1662
        %1820 = vmatpush1.bf16.msra.mxu0 %v1661
        %1821 = vmatprep.subr.bf16.mxu0 %v1665
        %1822 = vmatpush1.bf16.msra.mxu0 %v1664
        %1823 = vmatprep.subr.bf16.mxu0 %v1668
        %1824 = vmatpush1.bf16.msra.mxu0 %v1667
        %1825 = vmatprep.subr.bf16.mxu0 0
        %1826 = vmatpush1.bf16.msra.mxu0 0
        %1827 = vmatprep.subr.bf16.mxu0 0
        %1828 = vmatpush1.bf16.msra.mxu0 0
        %1829 = vmatprep.subr.bf16.mxu0 0
        %1830 = vmatpush1.bf16.msra.mxu0 0
        %1831 = vmatprep.subr.bf16.mxu0 0
        %1832 = vmatpush1.bf16.msra.mxu0 0
        %1833 = vmatprep.subr.bf16.mxu0 0
        %1834 = vmatpush1.bf16.msra.mxu0 0
        %1835 = vmatprep.subr.bf16.mxu0 0
        %1836 = vmatpush1.bf16.msra.mxu0 0
        %1837 = vmatprep.subr.bf16.mxu0 0
        %1838 = vmatpush1.bf16.msra.mxu0 0
        %1839 = vmatprep.subr.bf16.mxu0 0
        %1840 = vmatpush1.bf16.msra.mxu0 0
        %1841 = vmatprep.mubr.bf16.mxu0 0
        %1842 = vmatmul.mubr.bf16.gmra.mrb[0].mxu0 %v1808
        %v1843 = vpop.f32.mrb[0].mxu0
        %v1844 = vadd.f32 %v1554, %v1843
        %v1845 = vpop.f32.mrb[0].mxu0
        %v1846 = vadd.f32 %v1558, %v1845
        %v1847 = vpop.f32.mrb[0].mxu0
        %v1848 = vpop.f32.mrb[0].mxu0
        %1849 = vdwg.mxu0
        %1850 = vmatprep.subr.bf16.mxu0 0
        %1851 = vmatpush1.bf16.msra.mxu0 %v1648
        %1852 = vmatprep.subr.bf16.mxu0 0
        %1853 = vmatpush1.bf16.msra.mxu0 %v1651
        %1854 = vmatprep.subr.bf16.mxu0 0
        %1855 = vmatpush1.bf16.msra.mxu0 %v1654
        %1856 = vmatprep.subr.bf16.mxu0 0
        %1857 = vmatpush1.bf16.msra.mxu0 %v1657
        %1858 = vmatprep.subr.bf16.mxu0 0
        %1859 = vmatpush1.bf16.msra.mxu0 %v1660
        %1860 = vmatprep.subr.bf16.mxu0 0
        %1861 = vmatpush1.bf16.msra.mxu0 %v1663
        %1862 = vmatprep.subr.bf16.mxu0 0
        %1863 = vmatpush1.bf16.msra.mxu0 %v1666
        %1864 = vmatprep.subr.bf16.mxu0 0
        %1865 = vmatpush1.bf16.msra.mxu0 %v1669
        %1866 = vmatprep.subr.bf16.mxu0 0
        %1867 = vmatpush1.bf16.msra.mxu0 0
        %1868 = vmatprep.subr.bf16.mxu0 0
        %1869 = vmatpush1.bf16.msra.mxu0 0
        %1870 = vmatprep.subr.bf16.mxu0 0
        %1871 = vmatpush1.bf16.msra.mxu0 0
        %1872 = vmatprep.subr.bf16.mxu0 0
        %1873 = vmatpush1.bf16.msra.mxu0 0
        %1874 = vmatprep.subr.bf16.mxu0 0
        %1875 = vmatpush1.bf16.msra.mxu0 0
        %1876 = vmatprep.subr.bf16.mxu0 0
        %1877 = vmatpush1.bf16.msra.mxu0 0
        %1878 = vmatprep.subr.bf16.mxu0 0
        %1879 = vmatpush1.bf16.msra.mxu0 0
        %1880 = vmatprep.subr.bf16.mxu0 0
        %1881 = vmatpush1.bf16.msra.mxu0 0
        %1882 = vmatprep.mubr.bf16.mxu0 0
        %1883 = vmatmul.mubr.bf16.gmra.mrb[0].mxu0 %v1808
        %v1884 = vpop.f32.mrb[0].mxu0
        %v1885 = vadd.f32 %v1562, %v1884
        %v1886 = vpop.f32.mrb[0].mxu0
        %v1887 = vpop.f32.mrb[0].mxu0
        %v1888 = vpop.f32.mrb[0].mxu0
        %1889 = vdwg.mxu0
        %s1890 = scalar_lea.vmem [#allocation3], 12
        %v1891 = vld [vmem:[%s1890] sm:$0xff]
        %v1892 = vld [vmem:[%s1890 + $0x8] sm:$0xf]
        %v1893 = vunpack.c.l.bf16 %v1891
        %v1894 = vunpack.c.h.bf16 %v1891
        %v1895 = vunpack.c.l.bf16 %v1892
        %v1896 = vadd.f32 %v1893, %v1844
        %v1897 = vadd.f32 %v1894, %v1846
        %v1898 = vxor.u32 %v1896, 2147483648
        %v1899 = vxor.u32 %v1897, 2147483648
        %v1900 = vmul.f32 %v1898, 1.442695
        %v1901 = vpow.pop %v1900
        %v1902 = vmul.f32 %v1899, 1.442695
        %v1903 = vpow.pop %v1902
        %v1904 = vadd.f32 %v1901, 1.0
        %v1905 = vadd.f32 %v1903, 1.0
        %v1906 = vrcp.pop %v1904
        %v1907 = vmul.f32 1.0, %v1906
        %v1908 = vrcp.pop %v1905
        %v1909 = vmul.f32 1.0, %v1908
        %v1910 = vmul.f32 %v1907, %v1885
        %v1911 = vadd.f32 %v1895, %v1910
        %v1912 = vtanh.pop %v1911
        %v1913 = vsub.f32 1.0, %v1909
        %v1914 = vmul.f32 %v1913, %v1912
        %v1915 = vmul.f32 %v1909, %v1806
        %v1916 = vadd.f32 %v1914, %v1915
        %s1917 = sadd.s32 %s1801, 1
        %p1918 = scmp.lt.s32.totalorder %s1917, 10
        %s1919 = scalar_select %p1918, 1, 0
        %v1920 = vstv %s1919
        %vm1921 = vcmp.eq.s32.totalorder %v1920, 1
        %v1922 = vsel %vm1921, %v1916, %v1806
        %s1923 = scalar_lea.vmem [#allocation4], 8
        %1924 = vst [vmem:[%s1923] sm:$0xff] %v1922
        %v1925 = vpack.c.bf16 %v1922, %v1922
        %1926 = vmatprep.subr.bf16.mxu0 %v1647
        %1927 = vmatpush1.bf16.msra.mxu0 %v1646
        %1928 = vmatprep.subr.bf16.mxu0 %v1650
        %1929 = vmatpush1.bf16.msra.mxu0 %v1649
        %1930 = vmatprep.subr.bf16.mxu0 %v1653
        %1931 = vmatpush1.bf16.msra.mxu0 %v1652
        %1932 = vmatprep.subr.bf16.mxu0 %v1656
        %1933 = vmatpush1.bf16.msra.mxu0 %v1655
        %1934 = vmatprep.subr.bf16.mxu0 %v1659
        %1935 = vmatpush1.bf16.msra.mxu0 %v1658
        %1936 = vmatprep.subr.bf16.mxu0 %v1662
        %1937 = vmatpush1.bf16.msra.mxu0 %v1661
        %1938 = vmatprep.subr.bf16.mxu0 %v1665
        %1939 = vmatpush1.bf16.msra.mxu0 %v1664
        %1940 = vmatprep.subr.bf16.mxu0 %v1668
        %1941 = vmatpush1.bf16.msra.mxu0 %v1667
        %1942 = vmatprep.subr.bf16.mxu0 0
        %1943 = vmatpush1.bf16.msra.mxu0 0
        %1944 = vmatprep.subr.bf16.mxu0 0
        %1945 = vmatpush1.bf16.msra.mxu0 0
        %1946 = vmatprep.subr.bf16.mxu0 0
        %1947 = vmatpush1.bf16.msra.mxu0 0
        %1948 = vmatprep.subr.bf16.mxu0 0
        %1949 = vmatpush1.bf16.msra.mxu0 0
        %1950 = vmatprep.subr.bf16.mxu0 0
        %1951 = vmatpush1.bf16.msra.mxu0 0
        %1952 = vmatprep.subr.bf16.mxu0 0
        %1953 = vmatpush1.bf16.msra.mxu0 0
        %1954 = vmatprep.subr.bf16.mxu0 0
        %1955 = vmatpush1.bf16.msra.mxu0 0
        %1956 = vmatprep.subr.bf16.mxu0 0
        %1957 = vmatpush1.bf16.msra.mxu0 0
        %1958 = vmatprep.mubr.bf16.mxu0 0
        %1959 = vmatmul.mubr.bf16.gmra.mrb[0].mxu0 %v1925
        %v1960 = vpop.f32.mrb[0].mxu0
        %v1961 = vadd.f32 %v1554, %v1960
        %v1962 = vpop.f32.mrb[0].mxu0
        %v1963 = vadd.f32 %v1558, %v1962
        %v1964 = vpop.f32.mrb[0].mxu0
        %v1965 = vpop.f32.mrb[0].mxu0
        %1966 = vdwg.mxu0
        %1967 = vmatprep.subr.bf16.mxu0 0
        %1968 = vmatpush1.bf16.msra.mxu0 %v1648
        %1969 = vmatprep.subr.bf16.mxu0 0
        %1970 = vmatpush1.bf16.msra.mxu0 %v1651
        %1971 = vmatprep.subr.bf16.mxu0 0
        %1972 = vmatpush1.bf16.msra.mxu0 %v1654
        %1973 = vmatprep.subr.bf16.mxu0 0
        %1974 = vmatpush1.bf16.msra.mxu0 %v1657
        %1975 = vmatprep.subr.bf16.mxu0 0
        %1976 = vmatpush1.bf16.msra.mxu0 %v1660
        %1977 = vmatprep.subr.bf16.mxu0 0
        %1978 = vmatpush1.bf16.msra.mxu0 %v1663
        %1979 = vmatprep.subr.bf16.mxu0 0
        %1980 = vmatpush1.bf16.msra.mxu0 %v1666
        %1981 = vmatprep.subr.bf16.mxu0 0
        %1982 = vmatpush1.bf16.msra.mxu0 %v1669
        %1983 = vmatprep.subr.bf16.mxu0 0
        %1984 = vmatpush1.bf16.msra.mxu0 0
        %1985 = vmatprep.subr.bf16.mxu0 0
        %1986 = vmatpush1.bf16.msra.mxu0 0
        %1987 = vmatprep.subr.bf16.mxu0 0
        %1988 = vmatpush1.bf16.msra.mxu0 0
        %1989 = vmatprep.subr.bf16.mxu0 0
        %1990 = vmatpush1.bf16.msra.mxu0 0
        %1991 = vmatprep.subr.bf16.mxu0 0
        %1992 = vmatpush1.bf16.msra.mxu0 0
        %1993 = vmatprep.subr.bf16.mxu0 0
        %1994 = vmatpush1.bf16.msra.mxu0 0
        %1995 = vmatprep.subr.bf16.mxu0 0
        %1996 = vmatpush1.bf16.msra.mxu0 0
        %1997 = vmatprep.subr.bf16.mxu0 0
        %1998 = vmatpush1.bf16.msra.mxu0 0
        %1999 = vmatprep.mubr.bf16.mxu0 0
        %2000 = vmatmul.mubr.bf16.gmra.mrb[0].mxu0 %v1925
        %v2001 = vpop.f32.mrb[0].mxu0
        %v2002 = vadd.f32 %v1562, %v2001
        %v2003 = vpop.f32.mrb[0].mxu0
        %v2004 = vpop.f32.mrb[0].mxu0
        %v2005 = vpop.f32.mrb[0].mxu0
        %2006 = vdwg.mxu0
        %s2007 = scalar_lea.vmem [#allocation3], 24
        %v2008 = vld [vmem:[%s2007] sm:$0xff]
        %v2009 = vld [vmem:[%s2007 + $0x8] sm:$0xf]
        %v2010 = vunpack.c.l.bf16 %v2008
        %v2011 = vunpack.c.h.bf16 %v2008
        %v2012 = vunpack.c.l.bf16 %v2009
        %v2013 = vadd.f32 %v2010, %v1961
        %v2014 = vadd.f32 %v2011, %v1963
        %v2015 = vxor.u32 %v2013, 2147483648
        %v2016 = vxor.u32 %v2014, 2147483648
        %v2017 = vmul.f32 %v2015, 1.442695
        %v2018 = vpow.pop %v2017
        %v2019 = vmul.f32 %v2016, 1.442695
        %v2020 = vpow.pop %v2019
        %v2021 = vadd.f32 %v2018, 1.0
        %v2022 = vadd.f32 %v2020, 1.0
        %v2023 = vrcp.pop %v2021
        %v2024 = vmul.f32 1.0, %v2023
        %v2025 = vrcp.pop %v2022
        %v2026 = vmul.f32 1.0, %v2025
        %v2027 = vmul.f32 %v2024, %v2002
        %v2028 = vadd.f32 %v2012, %v2027
        %v2029 = vtanh.pop %v2028
        %v2030 = vsub.f32 1.0, %v2026
        %v2031 = vmul.f32 %v2030, %v2029
        %v2032 = vmul.f32 %v2026, %v1922
        %v2033 = vadd.f32 %v2031, %v2032
        %s2034 = sadd.s32 %s1801, 2
        %p2035 = scmp.lt.s32.totalorder %s2034, 10
        %s2036 = scalar_select %p2035, 1, 0
        %v2037 = vstv %s2036
        %vm2038 = vcmp.eq.s32.totalorder %v2037, 1
        %v2039 = vsel %vm2038, %v2033, %v1922
        %s2040 = scalar_lea.vmem [#allocation4], 16
        %2041 = vst [vmem:[%s2040] sm:$0xff] %v2039
        %v2042 = vpack.c.bf16 %v2039, %v2039
        %2043 = vmatprep.subr.bf16.mxu0 %v1647
        %2044 = vmatpush1.bf16.msra.mxu0 %v1646
        %2045 = vmatprep.subr.bf16.mxu0 %v1650
        %2046 = vmatpush1.bf16.msra.mxu0 %v1649
        %2047 = vmatprep.subr.bf16.mxu0 %v1653
        %2048 = vmatpush1.bf16.msra.mxu0 %v1652
        %2049 = vmatprep.subr.bf16.mxu0 %v1656
        %2050 = vmatpush1.bf16.msra.mxu0 %v1655
        %2051 = vmatprep.subr.bf16.mxu0 %v1659
        %2052 = vmatpush1.bf16.msra.mxu0 %v1658
        %2053 = vmatprep.subr.bf16.mxu0 %v1662
        %2054 = vmatpush1.bf16.msra.mxu0 %v1661
        %2055 = vmatprep.subr.bf16.mxu0 %v1665
        %2056 = vmatpush1.bf16.msra.mxu0 %v1664
        %2057 = vmatprep.subr.bf16.mxu0 %v1668
        %2058 = vmatpush1.bf16.msra.mxu0 %v1667
        %2059 = vmatprep.subr.bf16.mxu0 0
        %2060 = vmatpush1.bf16.msra.mxu0 0
        %2061 = vmatprep.subr.bf16.mxu0 0
        %2062 = vmatpush1.bf16.msra.mxu0 0
        %2063 = vmatprep.subr.bf16.mxu0 0
        %2064 = vmatpush1.bf16.msra.mxu0 0
        %2065 = vmatprep.subr.bf16.mxu0 0
        %2066 = vmatpush1.bf16.msra.mxu0 0
        %2067 = vmatprep.subr.bf16.mxu0 0
        %2068 = vmatpush1.bf16.msra.mxu0 0
        %2069 = vmatprep.subr.bf16.mxu0 0
        %2070 = vmatpush1.bf16.msra.mxu0 0
        %2071 = vmatprep.subr.bf16.mxu0 0
        %2072 = vmatpush1.bf16.msra.mxu0 0
        %2073 = vmatprep.subr.bf16.mxu0 0
        %2074 = vmatpush1.bf16.msra.mxu0 0
        %2075 = vmatprep.mubr.bf16.mxu0 0
        %2076 = vmatmul.mubr.bf16.gmra.mrb[0].mxu0 %v2042
        %v2077 = vpop.f32.mrb[0].mxu0
        %v2078 = vadd.f32 %v1554, %v2077
        %v2079 = vpop.f32.mrb[0].mxu0
        %v2080 = vadd.f32 %v1558, %v2079
        %v2081 = vpop.f32.mrb[0].mxu0
        %v2082 = vpop.f32.mrb[0].mxu0
        %2083 = vdwg.mxu0
        %2084 = vmatprep.subr.bf16.mxu0 0
        %2085 = vmatpush1.bf16.msra.mxu0 %v1648
        %2086 = vmatprep.subr.bf16.mxu0 0
        %2087 = vmatpush1.bf16.msra.mxu0 %v1651
        %2088 = vmatprep.subr.bf16.mxu0 0
        %2089 = vmatpush1.bf16.msra.mxu0 %v1654
        %2090 = vmatprep.subr.bf16.mxu0 0
        %2091 = vmatpush1.bf16.msra.mxu0 %v1657
        %2092 = vmatprep.subr.bf16.mxu0 0
        %2093 = vmatpush1.bf16.msra.mxu0 %v1660
        %2094 = vmatprep.subr.bf16.mxu0 0
        %2095 = vmatpush1.bf16.msra.mxu0 %v1663
        %2096 = vmatprep.subr.bf16.mxu0 0
        %2097 = vmatpush1.bf16.msra.mxu0 %v1666
        %2098 = vmatprep.subr.bf16.mxu0 0
        %2099 = vmatpush1.bf16.msra.mxu0 %v1669
        %2100 = vmatprep.subr.bf16.mxu0 0
        %2101 = vmatpush1.bf16.msra.mxu0 0
        %2102 = vmatprep.subr.bf16.mxu0 0
        %2103 = vmatpush1.bf16.msra.mxu0 0
        %2104 = vmatprep.subr.bf16.mxu0 0
        %2105 = vmatpush1.bf16.msra.mxu0 0
        %2106 = vmatprep.subr.bf16.mxu0 0
        %2107 = vmatpush1.bf16.msra.mxu0 0
        %2108 = vmatprep.subr.bf16.mxu0 0
        %2109 = vmatpush1.bf16.msra.mxu0 0
        %2110 = vmatprep.subr.bf16.mxu0 0
        %2111 = vmatpush1.bf16.msra.mxu0 0
        %2112 = vmatprep.subr.bf16.mxu0 0
        %2113 = vmatpush1.bf16.msra.mxu0 0
        %2114 = vmatprep.subr.bf16.mxu0 0
        %2115 = vmatpush1.bf16.msra.mxu0 0
        %2116 = vmatprep.mubr.bf16.mxu0 0
        %2117 = vmatmul.mubr.bf16.gmra.mrb[0].mxu0 %v2042
        %v2118 = vpop.f32.mrb[0].mxu0
        %v2119 = vadd.f32 %v1562, %v2118
        %v2120 = vpop.f32.mrb[0].mxu0
        %v2121 = vpop.f32.mrb[0].mxu0
        %v2122 = vpop.f32.mrb[0].mxu0
        %2123 = vdwg.mxu0
        %s2124 = scalar_lea.vmem [#allocation3], 36
        %v2125 = vld [vmem:[%s2124] sm:$0xff]
        %v2126 = vld [vmem:[%s2124 + $0x8] sm:$0xf]
        %v2127 = vunpack.c.l.bf16 %v2125
        %v2128 = vunpack.c.h.bf16 %v2125
        %v2129 = vunpack.c.l.bf16 %v2126
        %v2130 = vadd.f32 %v2127, %v2078
        %v2131 = vadd.f32 %v2128, %v2080
        %v2132 = vxor.u32 %v2130, 2147483648
        %v2133 = vxor.u32 %v2131, 2147483648
        %v2134 = vmul.f32 %v2132, 1.442695
        %v2135 = vpow.pop %v2134
        %v2136 = vmul.f32 %v2133, 1.442695
        %v2137 = vpow.pop %v2136
        %v2138 = vadd.f32 %v2135, 1.0
        %v2139 = vadd.f32 %v2137, 1.0
        %v2140 = vrcp.pop %v2138
        %v2141 = vmul.f32 1.0, %v2140
        %v2142 = vrcp.pop %v2139
        %v2143 = vmul.f32 1.0, %v2142
        %v2144 = vmul.f32 %v2141, %v2119
        %v2145 = vadd.f32 %v2129, %v2144
        %v2146 = vtanh.pop %v2145
        %v2147 = vsub.f32 1.0, %v2143
        %v2148 = vmul.f32 %v2147, %v2146
        %v2149 = vmul.f32 %v2143, %v2039
        %v2150 = vadd.f32 %v2148, %v2149
        %s2151 = sadd.s32 %s1801, 3
        %p2152 = scmp.lt.s32.totalorder %s2151, 10
        %s2153 = scalar_select %p2152, 1, 0
        %v2154 = vstv %s2153
        %vm2155 = vcmp.eq.s32.totalorder %v2154, 1
        %v2156 = vsel %vm2155, %v2150, %v2039
        %s2157 = scalar_lea.vmem [#allocation4], 24
        %2158 = vst [vmem:[%s2157] sm:$0xff] %v2156
        %2159 = vst [vmem:[#allocation2] sm:$0xff] %v2156
        %v2160 = vld [vmem:[#allocation4] sm:$0xff]
        %v2161 = vld [vmem:[#allocation4 + $0x8] sm:$0xff]
        %v2162 = vld [vmem:[#allocation4 + $0x10] sm:$0xff]
        %v2163 = vld [vmem:[#allocation4 + $0x18] sm:$0xff]
        %v2164 = vld [vmem:[%s16] sm:$0x1]
        %v2165 = vld [vmem:[%s17] sm:$0x1]
        %2166 = vadd.xlane.f32.xlu0 %v2160
        %v2167 = vpop.xlane.xlu0 %2166
        %2168 = vadd.xlane.f32.xlu0 %v2161
        %v2169 = vpop.xlane.xlu0 %2168
        %2170 = vadd.xlane.f32.xlu0 %v2162
        %v2171 = vpop.xlane.xlu0 %2170
        %2172 = vadd.xlane.f32.xlu0 %v2163
        %v2173 = vpop.xlane.xlu0 %2172
        %v2174 = vmul.f32 %v2167, 0.03125
        %v2175 = vmul.f32 %v2169, 0.03125
        %v2176 = vmul.f32 %v2171, 0.03125
        %v2177 = vmul.f32 %v2173, 0.03125
        %v2178 = vmul.f32 %v2160, %v2160
        %v2179 = vmul.f32 %v2161, %v2161
        %v2180 = vmul.f32 %v2162, %v2162
        %v2181 = vmul.f32 %v2163, %v2163
        %2182 = vadd.xlane.f32.xlu0 %v2178
        %v2183 = vpop.xlane.xlu0 %2182
        %2184 = vadd.xlane.f32.xlu0 %v2179
        %v2185 = vpop.xlane.xlu0 %2184
        %2186 = vadd.xlane.f32.xlu0 %v2180
        %v2187 = vpop.xlane.xlu0 %2186
        %2188 = vadd.xlane.f32.xlu0 %v2181
        %v2189 = vpop.xlane.xlu0 %2188
        %v2190 = vmul.f32 %v2183, 0.03125
        %v2191 = vmul.f32 %v2185, 0.03125
        %v2192 = vmul.f32 %v2187, 0.03125
        %v2193 = vmul.f32 %v2189, 0.03125
        %v2194 = vmul.f32 %v2174, %v2174
        %v2195 = vmul.f32 %v2175, %v2175
        %v2196 = vmul.f32 %v2176, %v2176
        %v2197 = vmul.f32 %v2177, %v2177
        %v2198 = vsub.f32 %v2190, %v2194
        %v2199 = vsub.f32 %v2191, %v2195
        %v2200 = vsub.f32 %v2192, %v2196
        %v2201 = vsub.f32 %v2193, %v2197
        %v2202 = vmax.f32 %v2198, 0.0
        %v2203 = vmax.f32 %v2199, 0.0
        %v2204 = vmax.f32 %v2200, 0.0
        %v2205 = vmax.f32 %v2201, 0.0
        %v2206 = vsub.f32 %v2160, %v2174
        %v2207 = vsub.f32 %v2161, %v2175
        %v2208 = vsub.f32 %v2162, %v2176
        %v2209 = vsub.f32 %v2163, %v2177
        %v2210 = vadd.f32 %v2202, 1e-05
        %v2211 = vadd.f32 %v2203, 1e-05
        %v2212 = vadd.f32 %v2204, 1e-05
        %v2213 = vadd.f32 %v2205, 1e-05
        %v2214 = vrsqrt.pop %v2210
        %v2215 = vrsqrt.pop %v2211
        %v2216 = vrsqrt.pop %v2212
        %v2217 = vrsqrt.pop %v2213
        %v2218 = vmul.f32 %v2206, %v2214
        %v2219 = vmul.f32 %v2207, %v2215
        %v2220 = vmul.f32 %v2208, %v2216
        %v2221 = vmul.f32 %v2209, %v2217
        %v2223 = vlaneseq
        %v2224 = vshrl.u32 %v2223, 7
        %v2225 = vsub.s32 0, %v2224
        %v2226 = vrot.slane %v2164, %v2225
        %v2228 = vmul.f32 %v2218, %v2226
        %v2229 = vmul.f32 %v2219, %v2226
        %v2230 = vmul.f32 %v2220, %v2226
        %v2231 = vmul.f32 %v2221, %v2226
        %v2233 = vlaneseq
        %v2234 = vshrl.u32 %v2233, 7
        %v2235 = vsub.s32 0, %v2234
        %v2236 = vrot.slane %v2165, %v2235
        %v2238 = vadd.f32 %v2228, %v2236
        %v2239 = vadd.f32 %v2229, %v2236
        %v2240 = vadd.f32 %v2230, %v2236
        %v2241 = vadd.f32 %v2231, %v2236
        %2242 = vst [vmem:[%s717] sm:$0xff] %v2238
        %2243 = vst [vmem:[%s717 + $0x8] sm:$0xff] %v2239
        %2244 = vst [vmem:[%s717 + $0x10] sm:$0xff] %v2240
        %2245 = vst [vmem:[%s717 + $0x18] sm:$0xff] %v2241
        %p2246 = scmp.eq.s32.totalorder %s46, 2
        // Predicated region
        $region121: #{tpu_custom_call.1} parent=91 // pred_check
          %p2247 = pneg %p2246
        $region122: #{tpu_custom_call.1} parent=91 // pred_check_branch
          %2249 = sbr.rel (%p2247) target = $region124
        $region123: #{tpu_custom_call.1} parent=91 // pred_region
          %2250 = vst [vmem:[#allocation17] sm:$0xff] %v2156
        $region124: #{tpu_custom_call.1} parent=91 // pred_fallthru
          _
        %s2251 = sand.u32 %s453, 1
        %s2252 = scalar_lea.sflag [#allocation7], %s2251
        %s2253 = sand.u32 %s453, 1
        %s2254 = smul.addr %s2253, 32
        %s2255 = scalar_lea.vmem [#allocation16], %s2254
        // Predicated region
        $region125: #{tpu_custom_call.1} parent=91 // pred_check
          %p2256 = pneg %p463
        $region126: #{tpu_custom_call.1} parent=91 // pred_check_branch
          %2258 = sbr.rel (%p2256) target = $region128
        $region127: #{tpu_custom_call.1} parent=91 // pred_region
          %s2259 = smul.u32 4, %s46
          %s2261 = ssub.s32 512, 512
          %2262 = vsyncadd %s2252, %s2261
          %s2263 = sadd.s32 %s45, %s2259
          %s2264 = smul.addr %s2263, 128
          %s2265 = scalar_lea.hbm %s18, %s2264
          %s2266 = sshll.u32 %s2255, 4
          %s2267 = int_to_ptr.vmem [resolvable:$true] %s2266
          %2272 = dma.vmem_to_hbm [thread:$0]  %s2267, 512, %s2265, %s2252, 128, 128, 8
        $region128: #{tpu_custom_call.1} parent=91 // pred_fallthru
          _
        // Predicated region
        $region129: #{tpu_custom_call.1} parent=91 // pred_check
          %p2273 = pneg %p489
        $region130: #{tpu_custom_call.1} parent=91 // pred_check_branch
          %2275 = sbr.rel (%p2273) target = $region132
        $region131: #{tpu_custom_call.1} parent=91 // pred_region
          %s2277 = ssub.s32 128, 128
          %2278 = vsyncadd [#allocation18], %s2277
          %s2279 = smul.addr %s45, 128
          %s2280 = scalar_lea.hbm %s19, %s2279
          %s2282 = sshll.u32 [#allocation17], 4
          %s2283 = int_to_ptr.vmem [resolvable:$true] %s2282
          %2285 = dma.vmem_to_hbm [thread:$0]  %s2283, 128, %s2280, [#allocation18]
        $region132: #{tpu_custom_call.1} parent=91 // pred_fallthru
          _
        // Predicated region
        $region133: #{tpu_custom_call.1} parent=91 // pred_check
          %p2286 = pneg %p489
        $region134: #{tpu_custom_call.1} parent=91 // pred_check_branch
          %2288 = sbr.rel (%p2286) target = $region136
        $region135: #{tpu_custom_call.1} parent=91 // pred_region
          %2289 = dma.done [#allocation18], 128
        $region136: #{tpu_custom_call.1} parent=91 // pred_fallthru
          _
      $region92: #{tpu_custom_call.1} parent=5 // pred_fallthru
        _
      %p2290 = scmp.le.s32.totalorder 2, %s36
      // Predicated region
      $region137: #{tpu_custom_call.1} parent=5 // pred_check
        %p2291 = pneg %p2290
      $region138: #{tpu_custom_call.1} parent=5 // pred_check_branch
        %2293 = sbr.rel (%p2291) target = $region140
      $region139: #{tpu_custom_call.1} parent=5 // pred_region
        %s2294 = ssub.s32 %s36, 2
        // Predicated region
        $region141: #{tpu_custom_call.1} parent=139 // pred_check
          %p2295 = pneg %p469
        $region142: #{tpu_custom_call.1} parent=139 // pred_check_branch
          %2297 = sbr.rel (%p2295) target = $region144
        $region143: #{tpu_custom_call.1} parent=139 // pred_region
          %s2298 = sand.u32 %s454, 1
          %s2299 = scalar_lea.sflag [#allocation7], %s2298
          %s2300 = sand.u32 %s454, 1
          %s2301 = smul.addr %s2300, 32
          %s2302 = scalar_lea.vmem [#allocation16], %s2301
          %2303 = dma.done %s2299, 512
        $region144: #{tpu_custom_call.1} parent=139 // pred_fallthru
          _
      $region140: #{tpu_custom_call.1} parent=5 // pred_fallthru
        _
    $region6: #{tpu_custom_call.1} parent=1 // loop_footer
      %s40 = sadd.s32 1, %s36
    $region7: #{tpu_custom_call.1} parent=1 // loop_footer_branch
      %35 = sbr.rel target = $region3
    $region8: #{tpu_custom_call.1} parent=1 // loop_exit
      _
    %2304 = vsyncpa [#allocation6], 1
    %s2305 = scalar_lea.sflag [#allocation6], 1
    %2306 = vsyncpa %s2305, 1
    %2307 = vsyncpa [#allocation9], 1
    %2308 = vsyncpa [#allocation12], 1
    %2309 = vsyncpa [#allocation15], 1
    %2310 = vsyncpa [#allocation7], 1
    %s2311 = scalar_lea.sflag [#allocation7], 1
    %2312 = vsyncpa %s2311, 1
    %2313 = vsyncpa [#allocation18], 1

</llo_original>
